<compile_context>
chip_gen: v6e
topology: v6e:2x2x1
jax: 0.10.0
libtpu: 0.0.40
codegen_flags: <defaults>
</compile_context>

<pallas_src>
import functools

import jax
import jax.numpy as jnp
from jax.experimental import pallas as pl
from jax.experimental.pallas import tpu as pltpu

LANE = 128
SUBLANE = 8


def _round_up(x, m):
    return ((x + m - 1) // m) * m


def _pad_to(a, shape):
    return jnp.pad(a, [(0, s - d) for d, s in zip(a.shape, shape)])


# --------------------------- trunk kernel (runs once) ------------------------
# Computes the trunk MLP *transposed*:
#   t_T = W4 @ tanh(W3 @ tanh(W2 @ tanh(W1 @ x2^T + b1) + b2) + b3) + b4
# with shape (MODES_PAD, R_PAD).  Trunk weights are PyTorch-layout (out, in),
# biases are (out, 1).  No tanh on the trunk output (matches the module).
def _trunk_kernel(x2t_ref, w1_ref, b1_ref, w2_ref, b2_ref, w3_ref, b3_ref,
                  w4_ref, b4_ref, out_ref):
    f32 = jnp.float32
    cdt = w2_ref.dtype
    if x2t_ref.shape[0] == 1:
        # features == 1 (default TNET_ARCH): K=1 matmul -> VPU outer product.
        t = w1_ref[...].astype(f32) * x2t_ref[...].astype(f32) + b1_ref[...]
    else:
        t = jnp.dot(w1_ref[...], x2t_ref[...],
                    preferred_element_type=f32) + b1_ref[...]
    t = jnp.dot(w2_ref[...], jnp.tanh(t).astype(cdt),
                preferred_element_type=f32) + b2_ref[...]
    t = jnp.dot(w3_ref[...], jnp.tanh(t).astype(cdt),
                preferred_element_type=f32) + b3_ref[...]
    t = jnp.dot(w4_ref[...], jnp.tanh(t).astype(cdt),
                preferred_element_type=f32) + b4_ref[...]
    out_ref[...] = t.astype(out_ref.dtype)


# ---------------- branch MLP + contraction kernel (gridded) ------------------
# grid = (num_batch_tiles, num_in_channel_chunks)
#   axis 0 ("parallel"):  independent batch tiles
#   axis 1 ("arbitrary"): streams bw1 over in_channels, accumulating the
#                         layer-1 pre-activation into a VMEM scratch.
def _branch_contract_kernel(x1_ref, w1_ref, b1_ref, w2_ref, b2_ref,
                            w3_ref, b3_ref, w4_ref, b4_ref,
                            tT_ref, b0_ref, out_ref, acc_ref):
    f32 = jnp.float32
    k = pl.program_id(1)

    @pl.when(k == 0)
    def _():
        acc_ref[...] = jnp.zeros_like(acc_ref)

    # Layer-1 partial product for this in_channels chunk (f32 accumulation).
    acc_ref[...] += jnp.dot(x1_ref[...], w1_ref[...],
                            preferred_element_type=f32)

    @pl.when(k == pl.num_programs(1) - 1)
    def _():
        cdt = w2_ref.dtype
        h = jnp.tanh(acc_ref[...] + b1_ref[...]).astype(cdt)
        h = jnp.tanh(jnp.dot(h, w2_ref[...],
                             preferred_element_type=f32) + b2_ref[...]).astype(cdt)
        h = jnp.tanh(jnp.dot(h, w3_ref[...],
                             preferred_element_type=f32) + b3_ref[...]).astype(cdt)
        br = jnp.tanh(jnp.dot(h, w4_ref[...],
                              preferred_element_type=f32) + b4_ref[...]).astype(cdt)
        # einsum('bp,rp->br') with the trunk pre-transposed == plain matmul.
        out = jnp.dot(br, tT_ref[...], preferred_element_type=f32) + b0_ref[0, 0]
        out_ref[...] = out.astype(out_ref.dtype)


# ------------------------------ JAX wrapper ----------------------------------
@functools.partial(jax.jit, static_argnames=("compute_dtype", "b_tile", "k_chunk"))
def deeponet_forward(x1, x2, params, b0, *, compute_dtype=jnp.bfloat16,
                     b_tile=128, k_chunk=None):
    """x1: (B, in_channels), x2: (R, features)  ->  (B, R, 1) float32."""
    (bw1, bb1, bw2, bb2, bw3, bb3, bw4, bb4,
     tw1, tb1, tw2, tb2, tw3, tb3, tw4, tb4) = params
    f32 = jnp.float32
    cdt = jnp.dtype(compute_dtype)

    B, C = x1.shape
    R, F = x2.shape
    H = bw1.shape[1]
    M = bw4.shape[1]

    MP = _round_up(M, LANE)                       # padded modes (lane-dense)
    RP = _round_up(R, LANE)                       # padded #query points
    b_tile = _round_up(min(b_tile, _round_up(B, SUBLANE)), SUBLANE)
    BP = _round_up(B, b_tile)
    if k_chunk is None:
        k_chunk = C
    k_chunk = _round_up(min(k_chunk, C), LANE)
    CP = _round_up(C, k_chunk)

    # ---- zero-pad + cast parameters; biases stay f32 (added post-matmul) ----
    bw1p = _pad_to(bw1, (CP, H)).astype(cdt)
    bw2p = bw2.astype(cdt)
    bw3p = bw3.astype(cdt)
    bw4p = _pad_to(bw4, (H, MP)).astype(cdt)
    bb1p, bb2p, bb3p = bb1.astype(f32), bb2.astype(f32), bb3.astype(f32)
    bb4p = _pad_to(bb4, (1, MP)).astype(f32)

    tw1p, tw2p, tw3p = tw1.astype(cdt), tw2.astype(cdt), tw3.astype(cdt)
    tw4p = _pad_to(tw4, (MP, H)).astype(cdt)
    tb1p, tb2p, tb3p = tb1.astype(f32), tb2.astype(f32), tb3.astype(f32)
    tb4p = _pad_to(tb4, (MP, 1)).astype(f32)

    x1p = _pad_to(x1, (BP, CP)).astype(cdt)
    x2tp = _pad_to(x2.T, (F, RP)).astype(cdt)
    b0s = jnp.asarray(b0, f32).reshape(1, 1)

    vmem = pl.BlockSpec(memory_space=pltpu.MemorySpace.VMEM)

    # ---- 1) trunk: batch-independent, computed once, kept (modes, R)^T ----
    trunk_args = (x2tp, tw1p, tb1p, tw2p, tb2p, tw3p, tb3p, tw4p, tb4p)
    trunk_bytes = sum(int(a.size) * a.dtype.itemsize for a in trunk_args)
    t_T = pl.pallas_call(
        _trunk_kernel,
        out_shape=jax.ShapeDtypeStruct((MP, RP), cdt),
        in_specs=[vmem] * len(trunk_args),
        out_specs=vmem,
        compiler_params=pltpu.CompilerParams(
            vmem_limit_bytes=min(2 * trunk_bytes + (16 << 20), 96 << 20)),
    )(*trunk_args)

    # ---- 2) branch MLP + mode contraction, tiled over the batch ----
    nb, nk = BP // b_tile, CP // k_chunk
    const = lambda i, k: (0, 0)
    in_specs = [
        pl.BlockSpec((b_tile, k_chunk), lambda i, k: (i, k)),   # x1 tile
        pl.BlockSpec((k_chunk, H), lambda i, k: (k, 0)),        # bw1 chunk (streamed)
        pl.BlockSpec((1, H), const),                            # bb1
        pl.BlockSpec((H, H), const),                            # bw2 (resident)
        pl.BlockSpec((1, H), const),                            # bb2
        pl.BlockSpec((H, H), const),                            # bw3 (resident)
        pl.BlockSpec((1, H), const),                            # bb3
        pl.BlockSpec((H, MP), const),                           # bw4 (resident)
        pl.BlockSpec((1, MP), const),                           # bb4
        pl.BlockSpec((MP, RP), const),                          # t_T (resident)
        pl.BlockSpec((1, 1), const,
                     memory_space=pltpu.MemorySpace.SMEM),      # scalar bias b
    ]
    branch_args = (x1p, bw1p, bb1p, bw2p, bb2p, bw3p, bb3p, bw4p, bb4p, t_T, b0s)

    flops = 2 * BP * (CP * H + 2 * H * H + H * MP + MP * RP)
    transcendentals = BP * (3 * H + MP)
    bytes_accessed = (sum(int(a.size) * a.dtype.itemsize for a in branch_args)
                      + BP * RP * 4)
    footprint = (sum(int(a.size) * a.dtype.itemsize for a in branch_args[1:])
                 + 2 * b_tile * (k_chunk * cdt.itemsize + RP * 4)
                 + 8 * b_tile * max(H, MP) * 4)
    vmem_limit = min(2 * footprint + (16 << 20), 96 << 20)

    out = pl.pallas_call(
        _branch_contract_kernel,
        out_shape=jax.ShapeDtypeStruct((BP, RP), f32),
        grid=(nb, nk),
        in_specs=in_specs,
        out_specs=pl.BlockSpec((b_tile, RP), lambda i, k: (i, 0)),
        scratch_shapes=[pltpu.VMEM((b_tile, H), f32)],
        compiler_params=pltpu.CompilerParams(
            dimension_semantics=("parallel", "arbitrary"),
            vmem_limit_bytes=vmem_limit),
        cost_estimate=pl.CostEstimate(flops=flops,
                                      transcendentals=transcendentals,
                                      bytes_accessed=bytes_accessed),
    )(*branch_args)

    return out[:B, :R][:, :, None]


# ------------------------- deterministic parameter init ----------------------
def init_params(key, in_channels, hidden, modes, features):
    f32 = jnp.float32

    def torch_default_linear(k, fan_in, fan_out):
        # PyTorch nn.Linear default init; weight returned pre-transposed (in, out).
        bound = 1.0 / (fan_in ** 0.5)
        kw, kb = jax.random.split(k)
        w = jax.random.uniform(kw, (fan_in, fan_out), f32, -bound, bound)
        b = jax.random.uniform(kb, (1, fan_out), f32, -bound, bound)
        return w, b

    def xavier_normal_linear(k, fan_in, fan_out):
        # trunk: xavier_normal_ weight kept in PyTorch layout (out, in), zero bias (out, 1).
        std = (2.0 / (fan_in + fan_out)) ** 0.5
        w = std * jax.random.normal(k, (fan_out, fan_in), f32)
        b = jnp.zeros((fan_out, 1), f32)
        return w, b

    ks = jax.random.split(key, 8)
    bw1, bb1 = torch_default_linear(ks[0], in_channels, hidden)
    bw2, bb2 = torch_default_linear(ks[1], hidden, hidden)
    bw3, bb3 = torch_default_linear(ks[2], hidden, hidden)
    bw4, bb4 = torch_default_linear(ks[3], hidden, modes)
    tw1, tb1 = xavier_normal_linear(ks[4], features, hidden)
    tw2, tb2 = xavier_normal_linear(ks[5], hidden, hidden)
    tw3, tb3 = xavier_normal_linear(ks[6], hidden, hidden)
    tw4, tb4 = xavier_normal_linear(ks[7], hidden, modes)
    params = (bw1, bb1, bw2, bb2, bw3, bb3, bw4, bb4,
              tw1, tb1, tw2, tb2, tw3, tb3, tw4, tb4)
    b0 = jnp.zeros((), f32)   # self.b = torch.tensor(0.0)
    return params, b0


# -------------------------- pure-JAX reference -------------------------------
def deeponet_reference(x1, x2, params, b0, compute_dtype=None):
    """Pure-JAX reference.  If compute_dtype is given, mimic the kernel's
    mixed-precision scheme (operands cast to compute_dtype, f32 accumulation,
    f32 biases/tanh) so the kernel can be checked tightly in bf16 mode too."""
    (bw1, bb1, bw2, bb2, bw3, bb3, bw4, bb4,
     tw1, tb1, tw2, tb2, tw3, tb3, tw4, tb4) = params
    f32 = jnp.float32
    cdt = jnp.dtype(compute_dtype) if compute_dtype is not None else jnp.dtype(f32)
    c = lambda a: a.astype(cdt)

    h = jnp.tanh(jnp.dot(c(x1), c(bw1), preferred_element_type=f32) + bb1)
    h = jnp.tanh(jnp.dot(c(h), c(bw2), preferred_element_type=f32) + bb2)
    h = jnp.tanh(jnp.dot(c(h), c(bw3), preferred_element_type=f32) + bb3)
    branch = jnp.tanh(jnp.dot(c(h), c(bw4), preferred_element_type=f32) + bb4)

    t = jnp.dot(c(x2), c(tw1).T, preferred_element_type=f32) + tb1.T
    t = jnp.dot(c(jnp.tanh(t)), c(tw2).T, preferred_element_type=f32) + tb2.T
    t = jnp.dot(c(jnp.tanh(t)), c(tw3).T, preferred_element_type=f32) + tb3.T
    t = jnp.dot(c(jnp.tanh(t)), c(tw4).T, preferred_element_type=f32) + tb4.T

    out = jnp.einsum("bp,rp->br", c(branch), c(t),
                     preferred_element_type=f32) + b0
    return out[:, :, None]


# ---------------------------------- main -------------------------------------
if __name__ == "__main__":
    # Small config consistent with the module (real: in_channels=8192,
    # hidden=2048, modes=45, features=1).  B=24 / b_tile=8 / k_chunk=256 gives
    # a (3, 2) grid so the batch tiling and the layer-1 streaming are exercised.
    B, IN_CHANNELS, HIDDEN, MODES, FEATURES, R = 24, 512, 256, 45, 1, 100

    key = jax.random.PRNGKey(0)
    k_x1, k_x2, k_p = jax.random.split(key, 3)
    x1 = jax.random.normal(k_x1, (B, IN_CHANNELS), jnp.float32)
    x2 = jax.random.normal(k_x2, (R, FEATURES), jnp.float32)
    params, b0 = init_params(k_p, IN_CHANNELS, HIDDEN, MODES, FEATURES)

    # f32 path: exact check against the pure-JAX reference.
    out_f32 = jax.block_until_ready(
        deeponet_forward(x1, x2, params, b0, compute_dtype=jnp.float32,
                         b_tile=8, k_chunk=256))
    ref_f32 = deeponet_reference(x1, x2, params, b0)
    assert out_f32.shape == (B, R, 1), out_f32.shape
    err_f32 = float(jnp.max(jnp.abs(out_f32 - ref_f32)))
    assert jnp.allclose(out_f32, ref_f32, rtol=2e-3, atol=2e-3), err_f32

    # bf16 path (perf config): check against a reference that mimics the
    # kernel's mixed-precision scheme (f32 accumulation, f32 biases/tanh).
    out_bf16 = jax.block_until_ready(
        deeponet_forward(x1, x2, params, b0, compute_dtype=jnp.bfloat16,
                         b_tile=8, k_chunk=256))
    ref_bf16 = deeponet_reference(x1, x2, params, b0, compute_dtype=jnp.bfloat16)
    err_bf16 = float(jnp.max(jnp.abs(out_bf16 - ref_bf16)))
    assert jnp.allclose(out_bf16, ref_bf16, rtol=1e-2, atol=1e-2), err_bf16

    print("KERNEL_OK")
</pallas_src>

<mosaic_0001>
module attributes {stable_mosaic.version = 11 : i64} {
  func.func @_trunk_kernel(%arg0: memref<1x128xf32, #tpu.memory_space<vmem>>, %arg1: memref<256x1xf32, #tpu.memory_space<vmem>>, %arg2: memref<256x1xf32, #tpu.memory_space<vmem>>, %arg3: memref<256x256xf32, #tpu.memory_space<vmem>>, %arg4: memref<256x1xf32, #tpu.memory_space<vmem>>, %arg5: memref<256x256xf32, #tpu.memory_space<vmem>>, %arg6: memref<256x1xf32, #tpu.memory_space<vmem>>, %arg7: memref<128x256xf32, #tpu.memory_space<vmem>>, %arg8: memref<128x1xf32, #tpu.memory_space<vmem>>, %arg9: memref<128x128xf32, #tpu.memory_space<vmem>>) attributes {dimension_semantics = [], scalar_prefetch = 0 : i64, scratch_operands = 0 : i64, tpu.core_type = #tpu.core_type<tc>} {
    %c0 = arith.constant 0 : index
    %c0_0 = arith.constant 0 : index
    %0 = vector.load %arg1[%c0, %c0_0] : memref<256x1xf32, #tpu.memory_space<vmem>>, vector<256x1xf32>
    %c0_1 = arith.constant 0 : index
    %c0_2 = arith.constant 0 : index
    %1 = vector.load %arg0[%c0_1, %c0_2] : memref<1x128xf32, #tpu.memory_space<vmem>>, vector<1x128xf32>
    %2 = vector.broadcast %0 : vector<256x1xf32> to vector<256x128xf32>
    %3 = vector.broadcast %1 : vector<1x128xf32> to vector<256x128xf32>
    %4 = arith.mulf %2, %3 : vector<256x128xf32>
    %c0_3 = arith.constant 0 : index
    %c0_4 = arith.constant 0 : index
    %5 = vector.load %arg2[%c0_3, %c0_4] : memref<256x1xf32, #tpu.memory_space<vmem>>, vector<256x1xf32>
    %6 = vector.broadcast %5 : vector<256x1xf32> to vector<256x128xf32>
    %7 = arith.addf %4, %6 : vector<256x128xf32>
    %c0_5 = arith.constant 0 : index
    %c0_6 = arith.constant 0 : index
    %8 = vector.load %arg3[%c0_5, %c0_6] : memref<256x256xf32, #tpu.memory_space<vmem>>, vector<256x256xf32>
    %9 = math.tanh %7 : vector<256x128xf32>
    %cst = arith.constant dense<0.000000e+00> : vector<256x128xf32>
    %10 = tpu.matmul %8, %9, %cst {dimension_numbers = #tpu.dot_dimension_numbers<[1], [0], [0], [1], [0, 0, 1, 1], [], []>} : vector<256x256xf32>, vector<256x128xf32>, vector<256x128xf32> -> vector<256x128xf32>
    %c0_7 = arith.constant 0 : index
    %c0_8 = arith.constant 0 : index
    %11 = vector.load %arg4[%c0_7, %c0_8] : memref<256x1xf32, #tpu.memory_space<vmem>>, vector<256x1xf32>
    %12 = vector.broadcast %11 : vector<256x1xf32> to vector<256x128xf32>
    %13 = arith.addf %10, %12 : vector<256x128xf32>
    %c0_9 = arith.constant 0 : index
    %c0_10 = arith.constant 0 : index
    %14 = vector.load %arg5[%c0_9, %c0_10] : memref<256x256xf32, #tpu.memory_space<vmem>>, vector<256x256xf32>
    %15 = math.tanh %13 : vector<256x128xf32>
    %cst_11 = arith.constant dense<0.000000e+00> : vector<256x128xf32>
    %16 = tpu.matmul %14, %15, %cst_11 {dimension_numbers = #tpu.dot_dimension_numbers<[1], [0], [0], [1], [0, 0, 1, 1], [], []>} : vector<256x256xf32>, vector<256x128xf32>, vector<256x128xf32> -> vector<256x128xf32>
    %c0_12 = arith.constant 0 : index
    %c0_13 = arith.constant 0 : index
    %17 = vector.load %arg6[%c0_12, %c0_13] : memref<256x1xf32, #tpu.memory_space<vmem>>, vector<256x1xf32>
    %18 = vector.broadcast %17 : vector<256x1xf32> to vector<256x128xf32>
    %19 = arith.addf %16, %18 : vector<256x128xf32>
    %c0_14 = arith.constant 0 : index
    %c0_15 = arith.constant 0 : index
    %20 = vector.load %arg7[%c0_14, %c0_15] : memref<128x256xf32, #tpu.memory_space<vmem>>, vector<128x256xf32>
    %21 = math.tanh %19 : vector<256x128xf32>
    %cst_16 = arith.constant dense<0.000000e+00> : vector<128x128xf32>
    %22 = tpu.matmul %20, %21, %cst_16 {dimension_numbers = #tpu.dot_dimension_numbers<[1], [0], [0], [1], [0, 0, 1, 1], [], []>} : vector<128x256xf32>, vector<256x128xf32>, vector<128x128xf32> -> vector<128x128xf32>
    %c0_17 = arith.constant 0 : index
    %c0_18 = arith.constant 0 : index
    %23 = vector.load %arg8[%c0_17, %c0_18] : memref<128x1xf32, #tpu.memory_space<vmem>>, vector<128x1xf32>
    %24 = vector.broadcast %23 : vector<128x1xf32> to vector<128x128xf32>
    %25 = arith.addf %22, %24 : vector<128x128xf32>
    %c0_19 = arith.constant 0 : index
    %c0_20 = arith.constant 0 : index
    %26 = vector.load %arg9[%c0_19, %c0_20] : memref<128x128xf32, #tpu.memory_space<vmem>>, vector<128x128xf32>
    tpu.vector_store %arg9[%c0_19, %c0_20], %25 {strides = array<i32>} : memref<128x128xf32, #tpu.memory_space<vmem>>, vector<128x128xf32>,
    return
  }
}

module attributes {stable_mosaic.version = 11 : i64} {
  func.func @_branch_contract_kernel(%arg0: i32, %arg1: i32, %arg2: memref<8x256xf32, #tpu.memory_space<vmem>>, %arg3: memref<256x256xf32, #tpu.memory_space<vmem>>, %arg4: memref<1x256xf32, #tpu.memory_space<vmem>>, %arg5: memref<256x256xf32, #tpu.memory_space<vmem>>, %arg6: memref<1x256xf32, #tpu.memory_space<vmem>>, %arg7: memref<256x256xf32, #tpu.memory_space<vmem>>, %arg8: memref<1x256xf32, #tpu.memory_space<vmem>>, %arg9: memref<256x128xf32, #tpu.memory_space<vmem>>, %arg10: memref<1x128xf32, #tpu.memory_space<vmem>>, %arg11: memref<128x128xf32, #tpu.memory_space<vmem>>, %arg12: memref<1x1xf32, #tpu.memory_space<smem>>, %arg13: memref<8x128xf32, #tpu.memory_space<vmem>>, %arg14: memref<8x256xf32, #tpu.memory_space<vmem>>) attributes {dimension_semantics = [#tpu.dimension_semantics<parallel>, #tpu.dimension_semantics<arbitrary>], iteration_bounds = array<i64: 3, 2>, scalar_prefetch = 0 : i64, scratch_operands = 1 : i64, tpu.core_type = #tpu.core_type<tc>, window_params = [{transform_indices = @transform_0, window_bounds = array<i64: 8, 256>}, {transform_indices = @transform_1, window_bounds = array<i64: 256, 256>}, {pipeline_mode = #tpu.pipeline_mode<synchronous>, transform_indices = @transform_2, window_bounds = array<i64: 1, 256>}, {pipeline_mode = #tpu.pipeline_mode<synchronous>, transform_indices = @transform_3, window_bounds = array<i64: 256, 256>}, {pipeline_mode = #tpu.pipeline_mode<synchronous>, transform_indices = @transform_4, window_bounds = array<i64: 1, 256>}, {pipeline_mode = #tpu.pipeline_mode<synchronous>, transform_indices = @transform_5, window_bounds = array<i64: 256, 256>}, {pipeline_mode = #tpu.pipeline_mode<synchronous>, transform_indices = @transform_6, window_bounds = array<i64: 1, 256>}, {pipeline_mode = #tpu.pipeline_mode<synchronous>, transform_indices = @transform_7, window_bounds = array<i64: 256, 128>}, {pipeline_mode = #tpu.pipeline_mode<synchronous>, transform_indices = @transform_8, window_bounds = array<i64: 1, 128>}, {pipeline_mode = #tpu.pipeline_mode<synchronous>, transform_indices = @transform_9, window_bounds = array<i64: 128, 128>}, {transform_indices = @transform_10, window_bounds = array<i64: 1, 1>}, {transform_indices = @transform_11, window_bounds = array<i64: 8, 128>}]} {
    %c0_i32 = arith.constant 0 : i32
    %0 = arith.cmpi eq, %arg1, %c0_i32 : i32
    %1 = arith.extui %0 : i1 to i32
    %c0_i32_0 = arith.constant 0 : i32
    %2 = arith.cmpi ne, %1, %c0_i32_0 : i32
    scf.if %2 {
      %cst_9 = arith.constant 0.000000e+00 : f32
      %12 = vector.broadcast %cst_9 : f32 to vector<8x256xf32>
      %c0_10 = arith.constant 0 : index
      %c0_11 = arith.constant 0 : index
      %13 = vector.load %arg14[%c0_10, %c0_11] : memref<8x256xf32, #tpu.memory_space<vmem>>, vector<8x256xf32>
      tpu.vector_store %arg14[%c0_10, %c0_11], %12 {strides = array<i32>} : memref<8x256xf32, #tpu.memory_space<vmem>>, vector<8x256xf32>,
    } else {
    }
    %c0 = arith.constant 0 : index
    %c0_1 = arith.constant 0 : index
    %3 = vector.load %arg14[%c0, %c0_1] : memref<8x256xf32, #tpu.memory_space<vmem>>, vector<8x256xf32>
    %c0_2 = arith.constant 0 : index
    %c0_3 = arith.constant 0 : index
    %4 = vector.load %arg2[%c0_2, %c0_3] : memref<8x256xf32, #tpu.memory_space<vmem>>, vector<8x256xf32>
    %c0_4 = arith.constant 0 : index
    %c0_5 = arith.constant 0 : index
    %5 = vector.load %arg3[%c0_4, %c0_5] : memref<256x256xf32, #tpu.memory_space<vmem>>, vector<256x256xf32>
    %cst = arith.constant dense<0.000000e+00> : vector<8x256xf32>
    %6 = tpu.matmul %4, %5, %cst {dimension_numbers = #tpu.dot_dimension_numbers<[1], [0], [0], [1], [0, 0, 1, 1], [], []>} : vector<8x256xf32>, vector<256x256xf32>, vector<8x256xf32> -> vector<8x256xf32>
    %7 = arith.addf %3, %6 : vector<8x256xf32>
    %c0_6 = arith.constant 0 : index
    %c0_7 = arith.constant 0 : index
    %8 = vector.load %arg14[%c0_6, %c0_7] : memref<8x256xf32, #tpu.memory_space<vmem>>, vector<8x256xf32>
    tpu.vector_store %arg14[%c0_6, %c0_7], %7 {strides = array<i32>} : memref<8x256xf32, #tpu.memory_space<vmem>>, vector<8x256xf32>,
    %c1_i32 = arith.constant 1 : i32
    %9 = arith.cmpi eq, %arg1, %c1_i32 : i32
    %10 = arith.extui %9 : i1 to i32
    %c0_i32_8 = arith.constant 0 : i32
    %11 = arith.cmpi ne, %10, %c0_i32_8 : i32
    scf.if %11 {
      %c0_9 = arith.constant 0 : index
      %c0_10 = arith.constant 0 : index
      %12 = vector.load %arg14[%c0_9, %c0_10] : memref<8x256xf32, #tpu.memory_space<vmem>>, vector<8x256xf32>
      %c0_11 = arith.constant 0 : index
      %c0_12 = arith.constant 0 : index
      %13 = vector.load %arg4[%c0_11, %c0_12] : memref<1x256xf32, #tpu.memory_space<vmem>>, vector<1x256xf32>
      %14 = vector.broadcast %13 : vector<1x256xf32> to vector<8x256xf32>
      %15 = arith.addf %12, %14 : vector<8x256xf32>
      %16 = math.tanh %15 : vector<8x256xf32>
      %c0_13 = arith.constant 0 : index
      %c0_14 = arith.constant 0 : index
      %17 = vector.load %arg5[%c0_13, %c0_14] : memref<256x256xf32, #tpu.memory_space<vmem>>, vector<256x256xf32>
      %cst_15 = arith.constant dense<0.000000e+00> : vector<8x256xf32>
      %18 = tpu.matmul %16, %17, %cst_15 {dimension_numbers = #tpu.dot_dimension_numbers<[1], [0], [0], [1], [0, 0, 1, 1], [], []>} : vector<8x256xf32>, vector<256x256xf32>, vector<8x256xf32> -> vector<8x256xf32>
      %c0_16 = arith.constant 0 : index
      %c0_17 = arith.constant 0 : index
      %19 = vector.load %arg6[%c0_16, %c0_17] : memref<1x256xf32, #tpu.memory_space<vmem>>, vector<1x256xf32>
      %20 = vector.broadcast %19 : vector<1x256xf32> to vector<8x256xf32>
      %21 = arith.addf %18, %20 : vector<8x256xf32>
      %22 = math.tanh %21 : vector<8x256xf32>
      %c0_18 = arith.constant 0 : index
      %c0_19 = arith.constant 0 : index
      %23 = vector.load %arg7[%c0_18, %c0_19] : memref<256x256xf32, #tpu.memory_space<vmem>>, vector<256x256xf32>
      %cst_20 = arith.constant dense<0.000000e+00> : vector<8x256xf32>
      %24 = tpu.matmul %22, %23, %cst_20 {dimension_numbers = #tpu.dot_dimension_numbers<[1], [0], [0], [1], [0, 0, 1, 1], [], []>} : vector<8x256xf32>, vector<256x256xf32>, vector<8x256xf32> -> vector<8x256xf32>
      %c0_21 = arith.constant 0 : index
      %c0_22 = arith.constant 0 : index
      %25 = vector.load %arg8[%c0_21, %c0_22] : memref<1x256xf32, #tpu.memory_space<vmem>>, vector<1x256xf32>
      %26 = vector.broadcast %25 : vector<1x256xf32> to vector<8x256xf32>
      %27 = arith.addf %24, %26 : vector<8x256xf32>
      %28 = math.tanh %27 : vector<8x256xf32>
      %c0_23 = arith.constant 0 : index
      %c0_24 = arith.constant 0 : index
      %29 = vector.load %arg9[%c0_23, %c0_24] : memref<256x128xf32, #tpu.memory_space<vmem>>, vector<256x128xf32>
      %cst_25 = arith.constant dense<0.000000e+00> : vector<8x128xf32>
      %30 = tpu.matmul %28, %29, %cst_25 {dimension_numbers = #tpu.dot_dimension_numbers<[1], [0], [0], [1], [0, 0, 1, 1], [], []>} : vector<8x256xf32>, vector<256x128xf32>, vector<8x128xf32> -> vector<8x128xf32>
      %c0_26 = arith.constant 0 : index
      %c0_27 = arith.constant 0 : index
      %31 = vector.load %arg10[%c0_26, %c0_27] : memref<1x128xf32, #tpu.memory_space<vmem>>, vector<1x128xf32>
      %32 = vector.broadcast %31 : vector<1x128xf32> to vector<8x128xf32>
      %33 = arith.addf %30, %32 : vector<8x128xf32>
      %34 = math.tanh %33 : vector<8x128xf32>
      %c0_28 = arith.constant 0 : index
      %c0_29 = arith.constant 0 : index
      %35 = vector.load %arg11[%c0_28, %c0_29] : memref<128x128xf32, #tpu.memory_space<vmem>>, vector<128x128xf32>
      %cst_30 = arith.constant dense<0.000000e+00> : vector<8x128xf32>
      %36 = tpu.matmul %34, %35, %cst_30 {dimension_numbers = #tpu.dot_dimension_numbers<[1], [0], [0], [1], [0, 0, 1, 1], [], []>} : vector<8x128xf32>, vector<128x128xf32>, vector<8x128xf32> -> vector<8x128xf32>
      %c0_31 = arith.constant 0 : index
      %c0_32 = arith.constant 0 : index
      %37 = memref.load %arg12[%c0_31, %c0_32] : memref<1x1xf32, #tpu.memory_space<smem>>
      %38 = vector.broadcast %37 : f32 to vector<8x128xf32>
      %39 = arith.addf %36, %38 : vector<8x128xf32>
      %c0_33 = arith.constant 0 : index
      %c0_34 = arith.constant 0 : index
      %40 = vector.load %arg13[%c0_33, %c0_34] : memref<8x128xf32, #tpu.memory_space<vmem>>, vector<8x128xf32>
      tpu.vector_store %arg13[%c0_33, %c0_34], %39 {strides = array<i32>} : memref<8x128xf32, #tpu.memory_space<vmem>>, vector<8x128xf32>,
    } else {
    }
    return
  }
  func.func @transform_0(%arg0: i32, %arg1: i32) -> (i32, i32) {
    %c0_i32 = arith.constant 0 : i32
    return %arg0, %arg1 : i32, i32
  }
  func.func @transform_1(%arg0: i32, %arg1: i32) -> (i32, i32) {
    %c0_i32 = arith.constant 0 : i32
    %c0_i32_0 = arith.constant 0 : i32
    return %arg1, %c0_i32 : i32, i32
  }
  func.func @transform_2(%arg0: i32, %arg1: i32) -> (i32, i32) {
    %c0_i32 = arith.constant 0 : i32
    %c0_i32_0 = arith.constant 0 : i32
    %c0_i32_1 = arith.constant 0 : i32
    return %c0_i32, %c0_i32_0 : i32, i32
  }
  func.func @transform_3(%arg0: i32, %arg1: i32) -> (i32, i32) {
    %c0_i32 = arith.constant 0 : i32
    %c0_i32_0 = arith.constant 0 : i32
    %c0_i32_1 = arith.constant 0 : i32
    return %c0_i32, %c0_i32_0 : i32, i32
  }
  func.func @transform_4(%arg0: i32, %arg1: i32) -> (i32, i32) {
    %c0_i32 = arith.constant 0 : i32
    %c0_i32_0 = arith.constant 0 : i32
    %c0_i32_1 = arith.constant 0 : i32
    return %c0_i32, %c0_i32_0 : i32, i32
  }
  func.func @transform_5(%arg0: i32, %arg1: i32) -> (i32, i32) {
    %c0_i32 = arith.constant 0 : i32
    %c0_i32_0 = arith.constant 0 : i32
    %c0_i32_1 = arith.constant 0 : i32
    return %c0_i32, %c0_i32_0 : i32, i32
  }
  func.func @transform_6(%arg0: i32, %arg1: i32) -> (i32, i32) {
    %c0_i32 = arith.constant 0 : i32
    %c0_i32_0 = arith.constant 0 : i32
    %c0_i32_1 = arith.constant 0 : i32
    return %c0_i32, %c0_i32_0 : i32, i32
  }
  func.func @transform_7(%arg0: i32, %arg1: i32) -> (i32, i32) {
    %c0_i32 = arith.constant 0 : i32
    %c0_i32_0 = arith.constant 0 : i32
    %c0_i32_1 = arith.constant 0 : i32
    return %c0_i32, %c0_i32_0 : i32, i32
  }
  func.func @transform_8(%arg0: i32, %arg1: i32) -> (i32, i32) {
    %c0_i32 = arith.constant 0 : i32
    %c0_i32_0 = arith.constant 0 : i32
    %c0_i32_1 = arith.constant 0 : i32
    return %c0_i32, %c0_i32_0 : i32, i32
  }
  func.func @transform_9(%arg0: i32, %arg1: i32) -> (i32, i32) {
    %c0_i32 = arith.constant 0 : i32
    %c0_i32_0 = arith.constant 0 : i32
    %c0_i32_1 = arith.constant 0 : i32
    return %c0_i32, %c0_i32_0 : i32, i32
  }
  func.func @transform_10(%arg0: i32, %arg1: i32) -> (i32, i32) {
    %c0_i32 = arith.constant 0 : i32
    %c0_i32_0 = arith.constant 0 : i32
    %c0_i32_1 = arith.constant 0 : i32
    return %c0_i32, %c0_i32_0 : i32, i32
  }
  func.func @transform_11(%arg0: i32, %arg1: i32) -> (i32, i32) {
    %c0_i32 = arith.constant 0 : i32
    %c0_i32_0 = arith.constant 0 : i32
    return %arg0, %c0_i32 : i32, i32
  }
}

</mosaic_0001>

<llo_original>
// kernel: deeponet_forward.3
$region0: #{deeponet_forward.3}
  #allocation0 [shape = 'u32[]', space=smem, size = 0x4, offset = 0x4, fixed_abs, tag = 'smem constant byte address 0x4 - core index']
  #allocation1 [shape = 'u32[144,128]{1,0:T(1,128)}', space=vmem, size = 0x12000, scoped, tag = 'internal scratch']
  #allocation2 [shape = 'f32[8,256]{1,0:T(8,128)}', space=vmem, size = 0x2000, scoped, tag = 'scratch operand']
  #allocation3 [shape = 'f32[1,1]{1,0:T(1,128)S(6)}', space=smem, size = 0x200, scoped, tag = 'scoped memory for deeponet_forward.3']
  %s0 = inlined_call_operand.vmem [shape: f32[24,512], index: 0, kind: input, shape index: {}]
  %s1 = inlined_call_operand.vmem [shape: f32[512,256], index: 1, kind: input, shape index: {}]
  %s2 = inlined_call_operand.vmem [shape: f32[1,256], index: 2, kind: input, shape index: {}]
  %s3 = inlined_call_operand.vmem [shape: f32[256,256], index: 3, kind: input, shape index: {}]
  %s4 = inlined_call_operand.vmem [shape: f32[1,256], index: 4, kind: input, shape index: {}]
  %s5 = inlined_call_operand.vmem [shape: f32[256,256], index: 5, kind: input, shape index: {}]
  %s6 = inlined_call_operand.vmem [shape: f32[1,256], index: 6, kind: input, shape index: {}]
  %s7 = inlined_call_operand.vmem [shape: f32[256,128], index: 7, kind: input, shape index: {}]
  %s8 = inlined_call_operand.vmem [shape: f32[1,128], index: 8, kind: input, shape index: {}]
  %s9 = inlined_call_operand.vmem [shape: f32[128,128], index: 9, kind: input, shape index: {}]
  %s10 = inlined_call_operand.<no memory space> [shape: f32[1,1], index: 10, kind: input, shape index: {}]
  %s11 = inlined_call_operand.hbm [shape: f32[24,128], index: 11, kind: output, shape index: {}]
  %s12 = sld [smem:[#allocation0]]
  $region85: #{deeponet_forward.3} parent=0
    _
  %s14 = ssub.s32 1, %s12
  %s15 = scalar_select 0, %s14, %s12
  %16 = sst [smem:[#allocation3]] %s10
  $region1: #{deeponet_forward.3} parent=0
    #allocation4 [shape = 'u8[8192]{0}', space=vmem, size = 0x2000, scoped, tag = 'output window, operand 0']
    #allocation5 [shape = 's32[2]{0}', space=sflag, size = 0x8, scoped, tag = 'scoped memory for deeponet_forward.3']
    %17 = vsyncpa [#allocation5], 0
    %s18 = scalar_lea.sflag [#allocation5], 1
    %19 = vsyncpa %s18, 0
    loop: start=0, step=1, limit=8
    $region2: #{deeponet_forward.3} parent=1 // loop_pre_header
      _
    $region3: #{deeponet_forward.3} parent=1 // loop_header
      %s21 = sphi 0, %s25
      %p22 = scmp.ge.s32.totalorder %s21, 8
      %s28 = sphi 0, %s40
      %s29 = sphi 0, %s36
      %s30 = sphi 0, %s28
      %s31 = sphi 0, %s29
      %s32 = sphi 0, %s30
      %s33 = sphi 0, %s31
      %s45 = sphi 0, %s47
      %s48 = sphi 0, %s45
      %s49 = sphi 0, %s48
      %s65 = sphi 0, %s49
      %s71 = sphi 0, %s73
      %s74 = sphi 0, %s71
      %s75 = sphi 0, %s74
      %s91 = sphi 0, %s75
      %s95 = sphi 0, %s95
      %s97 = sphi 0, %s95
      %s98 = sphi 0, %s97
      %s112 = sphi 0, %s98
      %s116 = sphi 0, %s116
      %s118 = sphi 0, %s116
      %s119 = sphi 0, %s118
      %s133 = sphi 0, %s119
      %s137 = sphi 0, %s137
      %s139 = sphi 0, %s137
      %s140 = sphi 0, %s139
      %s154 = sphi 0, %s140
      %s158 = sphi 0, %s158
      %s160 = sphi 0, %s158
      %s161 = sphi 0, %s160
      %s175 = sphi 0, %s161
      %s179 = sphi 0, %s179
      %s181 = sphi 0, %s179
      %s182 = sphi 0, %s181
      %s196 = sphi 0, %s182
      %s200 = sphi 0, %s200
      %s202 = sphi 0, %s200
      %s203 = sphi 0, %s202
      %s217 = sphi 0, %s203
      %s221 = sphi 0, %s221
      %s223 = sphi 0, %s221
      %s224 = sphi 0, %s223
      %s238 = sphi 0, %s224
      %s242 = sphi 0, %s242
      %s244 = sphi 0, %s242
      %s245 = sphi 0, %s244
      %s259 = sphi 0, %s245
      %s263 = sphi 0, %s263
      %s265 = sphi 0, %s263
      %s266 = sphi 0, %s265
      %s280 = sphi 0, %s266
      %s286 = sphi 0, %s288
      %s289 = sphi 0, %s286
      %s290 = sphi 0, %s289
      %s306 = sphi 0, %s290
    $region4: #{deeponet_forward.3} parent=1 // loop_header_branch
      %24 = sbr.rel (%p22) target = $region8
    $region5: #{deeponet_forward.3} parent=1 // loop_body
      %s26 = ssub.s32 %s21, 1
      %s27 = ssub.s32 %s21, 2
      %s34 = sadd.s32 1, %s29
      %p35 = scmp.ge.s32.totalorder %s34, 2
      %s36 = scalar_select %p35, 0, %s34
      %s37 = sadd.s32 1, %s28
      %s38 = scalar_select %p35, %s37, %s28
      %p39 = scmp.ge.s32.totalorder %s38, 3
      %s40 = scalar_select %p39, 0, %s38
      %s41 = ssub.s32 %s28, %s40
      %s42 = ssub.s32 %s29, %s36
      %s43 = sor.u32 %s41, %s42
      %p44 = scmp.eq.s32.totalorder %s43, 0
      %s46 = sadd.s32 %s45, 1
      %s47 = scalar_select %p44, %s45, %s46
      %p50 = pneg %p44
      %p51 = scmp.eq.s32.totalorder %s21, 5
      %p52 = por %p50, %p51
      %p53 = scmp.ne.s32.totalorder %s45, %s48
      %p54 = scmp.eq.s32.totalorder %s21, 0
      %p55 = por %p53, %p54
      %p56 = scmp.ne.s32.totalorder %s45, %s48
      %p57 = scmp.eq.s32.totalorder %s26, 5
      %p58 = por %p56, %p57
      %p59 = scmp.ne.s32.totalorder %s48, %s49
      %p60 = scmp.eq.s32.totalorder %s26, 0
      %p61 = por %p59, %p60
      %p62 = scmp.ne.s32.totalorder %s48, %s49
      %p63 = scmp.eq.s32.totalorder %s27, 5
      %p64 = por %p62, %p63
      %p66 = scmp.ne.s32.totalorder %s49, %s65
      %p67 = scmp.eq.s32.totalorder %s27, 0
      %p68 = por %p66, %p67
      %s69 = ssub.s32 %s29, %s36
      %p70 = scmp.eq.s32.totalorder %s69, 0
      %s72 = sadd.s32 %s71, 1
      %s73 = scalar_select %p70, %s71, %s72
      %p76 = pneg %p70
      %p77 = scmp.eq.s32.totalorder %s21, 5
      %p78 = por %p76, %p77
      %p79 = scmp.ne.s32.totalorder %s71, %s74
      %p80 = scmp.eq.s32.totalorder %s21, 0
      %p81 = por %p79, %p80
      %p82 = scmp.ne.s32.totalorder %s71, %s74
      %p83 = scmp.eq.s32.totalorder %s26, 5
      %p84 = por %p82, %p83
      %p85 = scmp.ne.s32.totalorder %s74, %s75
      %p86 = scmp.eq.s32.totalorder %s26, 0
      %p87 = por %p85, %p86
      %p88 = scmp.ne.s32.totalorder %s74, %s75
      %p89 = scmp.eq.s32.totalorder %s27, 5
      %p90 = por %p88, %p89
      %p92 = scmp.ne.s32.totalorder %s75, %s91
      %p93 = scmp.eq.s32.totalorder %s27, 0
      %p94 = por %p92, %p93
      %s96 = sadd.s32 %s95, 1
      %p99 = scmp.eq.s32.totalorder %s21, 5
      %p100 = scmp.ne.s32.totalorder %s95, %s97
      %p101 = scmp.eq.s32.totalorder %s21, 0
      %p102 = por %p100, %p101
      %p103 = scmp.ne.s32.totalorder %s95, %s97
      %p104 = scmp.eq.s32.totalorder %s26, 5
      %p105 = por %p103, %p104
      %p106 = scmp.ne.s32.totalorder %s97, %s98
      %p107 = scmp.eq.s32.totalorder %s26, 0
      %p108 = por %p106, %p107
      %p109 = scmp.ne.s32.totalorder %s97, %s98
      %p110 = scmp.eq.s32.totalorder %s27, 5
      %p111 = por %p109, %p110
      %p113 = scmp.ne.s32.totalorder %s98, %s112
      %p114 = scmp.eq.s32.totalorder %s27, 0
      %p115 = por %p113, %p114
      %s117 = sadd.s32 %s116, 1
      %p120 = scmp.eq.s32.totalorder %s21, 5
      %p121 = scmp.ne.s32.totalorder %s116, %s118
      %p122 = scmp.eq.s32.totalorder %s21, 0
      %p123 = por %p121, %p122
      %p124 = scmp.ne.s32.totalorder %s116, %s118
      %p125 = scmp.eq.s32.totalorder %s26, 5
      %p126 = por %p124, %p125
      %p127 = scmp.ne.s32.totalorder %s118, %s119
      %p128 = scmp.eq.s32.totalorder %s26, 0
      %p129 = por %p127, %p128
      %p130 = scmp.ne.s32.totalorder %s118, %s119
      %p131 = scmp.eq.s32.totalorder %s27, 5
      %p132 = por %p130, %p131
      %p134 = scmp.ne.s32.totalorder %s119, %s133
      %p135 = scmp.eq.s32.totalorder %s27, 0
      %p136 = por %p134, %p135
      %s138 = sadd.s32 %s137, 1
      %p141 = scmp.eq.s32.totalorder %s21, 5
      %p142 = scmp.ne.s32.totalorder %s137, %s139
      %p143 = scmp.eq.s32.totalorder %s21, 0
      %p144 = por %p142, %p143
      %p145 = scmp.ne.s32.totalorder %s137, %s139
      %p146 = scmp.eq.s32.totalorder %s26, 5
      %p147 = por %p145, %p146
      %p148 = scmp.ne.s32.totalorder %s139, %s140
      %p149 = scmp.eq.s32.totalorder %s26, 0
      %p150 = por %p148, %p149
      %p151 = scmp.ne.s32.totalorder %s139, %s140
      %p152 = scmp.eq.s32.totalorder %s27, 5
      %p153 = por %p151, %p152
      %p155 = scmp.ne.s32.totalorder %s140, %s154
      %p156 = scmp.eq.s32.totalorder %s27, 0
      %p157 = por %p155, %p156
      %s159 = sadd.s32 %s158, 1
      %p162 = scmp.eq.s32.totalorder %s21, 5
      %p163 = scmp.ne.s32.totalorder %s158, %s160
      %p164 = scmp.eq.s32.totalorder %s21, 0
      %p165 = por %p163, %p164
      %p166 = scmp.ne.s32.totalorder %s158, %s160
      %p167 = scmp.eq.s32.totalorder %s26, 5
      %p168 = por %p166, %p167
      %p169 = scmp.ne.s32.totalorder %s160, %s161
      %p170 = scmp.eq.s32.totalorder %s26, 0
      %p171 = por %p169, %p170
      %p172 = scmp.ne.s32.totalorder %s160, %s161
      %p173 = scmp.eq.s32.totalorder %s27, 5
      %p174 = por %p172, %p173
      %p176 = scmp.ne.s32.totalorder %s161, %s175
      %p177 = scmp.eq.s32.totalorder %s27, 0
      %p178 = por %p176, %p177
      %s180 = sadd.s32 %s179, 1
      %p183 = scmp.eq.s32.totalorder %s21, 5
      %p184 = scmp.ne.s32.totalorder %s179, %s181
      %p185 = scmp.eq.s32.totalorder %s21, 0
      %p186 = por %p184, %p185
      %p187 = scmp.ne.s32.totalorder %s179, %s181
      %p188 = scmp.eq.s32.totalorder %s26, 5
      %p189 = por %p187, %p188
      %p190 = scmp.ne.s32.totalorder %s181, %s182
      %p191 = scmp.eq.s32.totalorder %s26, 0
      %p192 = por %p190, %p191
      %p193 = scmp.ne.s32.totalorder %s181, %s182
      %p194 = scmp.eq.s32.totalorder %s27, 5
      %p195 = por %p193, %p194
      %p197 = scmp.ne.s32.totalorder %s182, %s196
      %p198 = scmp.eq.s32.totalorder %s27, 0
      %p199 = por %p197, %p198
      %s201 = sadd.s32 %s200, 1
      %p204 = scmp.eq.s32.totalorder %s21, 5
      %p205 = scmp.ne.s32.totalorder %s200, %s202
      %p206 = scmp.eq.s32.totalorder %s21, 0
      %p207 = por %p205, %p206
      %p208 = scmp.ne.s32.totalorder %s200, %s202
      %p209 = scmp.eq.s32.totalorder %s26, 5
      %p210 = por %p208, %p209
      %p211 = scmp.ne.s32.totalorder %s202, %s203
      %p212 = scmp.eq.s32.totalorder %s26, 0
      %p213 = por %p211, %p212
      %p214 = scmp.ne.s32.totalorder %s202, %s203
      %p215 = scmp.eq.s32.totalorder %s27, 5
      %p216 = por %p214, %p215
      %p218 = scmp.ne.s32.totalorder %s203, %s217
      %p219 = scmp.eq.s32.totalorder %s27, 0
      %p220 = por %p218, %p219
      %s222 = sadd.s32 %s221, 1
      %p225 = scmp.eq.s32.totalorder %s21, 5
      %p226 = scmp.ne.s32.totalorder %s221, %s223
      %p227 = scmp.eq.s32.totalorder %s21, 0
      %p228 = por %p226, %p227
      %p229 = scmp.ne.s32.totalorder %s221, %s223
      %p230 = scmp.eq.s32.totalorder %s26, 5
      %p231 = por %p229, %p230
      %p232 = scmp.ne.s32.totalorder %s223, %s224
      %p233 = scmp.eq.s32.totalorder %s26, 0
      %p234 = por %p232, %p233
      %p235 = scmp.ne.s32.totalorder %s223, %s224
      %p236 = scmp.eq.s32.totalorder %s27, 5
      %p237 = por %p235, %p236
      %p239 = scmp.ne.s32.totalorder %s224, %s238
      %p240 = scmp.eq.s32.totalorder %s27, 0
      %p241 = por %p239, %p240
      %s243 = sadd.s32 %s242, 1
      %p246 = scmp.eq.s32.totalorder %s21, 5
      %p247 = scmp.ne.s32.totalorder %s242, %s244
      %p248 = scmp.eq.s32.totalorder %s21, 0
      %p249 = por %p247, %p248
      %p250 = scmp.ne.s32.totalorder %s242, %s244
      %p251 = scmp.eq.s32.totalorder %s26, 5
      %p252 = por %p250, %p251
      %p253 = scmp.ne.s32.totalorder %s244, %s245
      %p254 = scmp.eq.s32.totalorder %s26, 0
      %p255 = por %p253, %p254
      %p256 = scmp.ne.s32.totalorder %s244, %s245
      %p257 = scmp.eq.s32.totalorder %s27, 5
      %p258 = por %p256, %p257
      %p260 = scmp.ne.s32.totalorder %s245, %s259
      %p261 = scmp.eq.s32.totalorder %s27, 0
      %p262 = por %p260, %p261
      %s264 = sadd.s32 %s263, 1
      %p267 = scmp.eq.s32.totalorder %s21, 5
      %p268 = scmp.ne.s32.totalorder %s263, %s265
      %p269 = scmp.eq.s32.totalorder %s21, 0
      %p270 = por %p268, %p269
      %p271 = scmp.ne.s32.totalorder %s263, %s265
      %p272 = scmp.eq.s32.totalorder %s26, 5
      %p273 = por %p271, %p272
      %p274 = scmp.ne.s32.totalorder %s265, %s266
      %p275 = scmp.eq.s32.totalorder %s26, 0
      %p276 = por %p274, %p275
      %p277 = scmp.ne.s32.totalorder %s265, %s266
      %p278 = scmp.eq.s32.totalorder %s27, 5
      %p279 = por %p277, %p278
      %p281 = scmp.ne.s32.totalorder %s266, %s280
      %p282 = scmp.eq.s32.totalorder %s27, 0
      %p283 = por %p281, %p282
      %s284 = ssub.s32 %s28, %s40
      %p285 = scmp.eq.s32.totalorder %s284, 0
      %s287 = sadd.s32 %s286, 1
      %s288 = scalar_select %p285, %s286, %s287
      %p291 = pneg %p285
      %p292 = scmp.eq.s32.totalorder %s21, 5
      %p293 = por %p291, %p292
      %p294 = scmp.ne.s32.totalorder %s286, %s289
      %p295 = scmp.eq.s32.totalorder %s21, 0
      %p296 = por %p294, %p295
      %p297 = scmp.ne.s32.totalorder %s286, %s289
      %p298 = scmp.eq.s32.totalorder %s26, 5
      %p299 = por %p297, %p298
      %p300 = scmp.ne.s32.totalorder %s289, %s290
      %p301 = scmp.eq.s32.totalorder %s26, 0
      %p302 = por %p300, %p301
      %p303 = scmp.ne.s32.totalorder %s289, %s290
      %p304 = scmp.eq.s32.totalorder %s27, 5
      %p305 = por %p303, %p304
      %p307 = scmp.ne.s32.totalorder %s290, %s306
      %p308 = scmp.eq.s32.totalorder %s27, 0
      %p309 = por %p307, %p308
      %p310 = scmp.le.s32.totalorder 1, %s21
      %p311 = scmp.lt.s32.totalorder %s21, 7
      %p312 = pnand %p310, %p311
      %p313 = pneg %p312
      // Predicated region
      $region9: #{deeponet_forward.3} parent=5 // pred_check
        _
      $region10: #{deeponet_forward.3} parent=5 // pred_check_branch
        %315 = sbr.rel (%p312) target = $region12
      $region11: #{deeponet_forward.3} parent=5 // pred_region
        %s316 = ssub.s32 %s21, 1
        // Predicated region
        $region13: #{deeponet_forward.3} parent=11 // pred_check
          %p317 = pneg %p108
        $region14: #{deeponet_forward.3} parent=11 // pred_check_branch
          %319 = sbr.rel (%p317) target = $region16
        $region15: #{deeponet_forward.3} parent=11 // pred_region
          _
        $region16: #{deeponet_forward.3} parent=11 // pred_fallthru
          _
        // Predicated region
        $region17: #{deeponet_forward.3} parent=11 // pred_check
          %p320 = pneg %p129
        $region18: #{deeponet_forward.3} parent=11 // pred_check_branch
          %322 = sbr.rel (%p320) target = $region20
        $region19: #{deeponet_forward.3} parent=11 // pred_region
          _
        $region20: #{deeponet_forward.3} parent=11 // pred_fallthru
          _
        // Predicated region
        $region21: #{deeponet_forward.3} parent=11 // pred_check
          %p323 = pneg %p150
        $region22: #{deeponet_forward.3} parent=11 // pred_check_branch
          %325 = sbr.rel (%p323) target = $region24
        $region23: #{deeponet_forward.3} parent=11 // pred_region
          _
        $region24: #{deeponet_forward.3} parent=11 // pred_fallthru
          _
        // Predicated region
        $region25: #{deeponet_forward.3} parent=11 // pred_check
          %p326 = pneg %p171
        $region26: #{deeponet_forward.3} parent=11 // pred_check_branch
          %328 = sbr.rel (%p326) target = $region28
        $region27: #{deeponet_forward.3} parent=11 // pred_region
          _
        $region28: #{deeponet_forward.3} parent=11 // pred_fallthru
          _
        // Predicated region
        $region29: #{deeponet_forward.3} parent=11 // pred_check
          %p329 = pneg %p192
        $region30: #{deeponet_forward.3} parent=11 // pred_check_branch
          %331 = sbr.rel (%p329) target = $region32
        $region31: #{deeponet_forward.3} parent=11 // pred_region
          _
        $region32: #{deeponet_forward.3} parent=11 // pred_fallthru
          _
        // Predicated region
        $region33: #{deeponet_forward.3} parent=11 // pred_check
          %p332 = pneg %p213
        $region34: #{deeponet_forward.3} parent=11 // pred_check_branch
          %334 = sbr.rel (%p332) target = $region36
        $region35: #{deeponet_forward.3} parent=11 // pred_region
          _
        $region36: #{deeponet_forward.3} parent=11 // pred_fallthru
          _
        // Predicated region
        $region37: #{deeponet_forward.3} parent=11 // pred_check
          %p335 = pneg %p234
        $region38: #{deeponet_forward.3} parent=11 // pred_check_branch
          %337 = sbr.rel (%p335) target = $region40
        $region39: #{deeponet_forward.3} parent=11 // pred_region
          _
        $region40: #{deeponet_forward.3} parent=11 // pred_fallthru
          _
        // Predicated region
        $region41: #{deeponet_forward.3} parent=11 // pred_check
          %p338 = pneg %p255
        $region42: #{deeponet_forward.3} parent=11 // pred_check_branch
          %340 = sbr.rel (%p338) target = $region44
        $region43: #{deeponet_forward.3} parent=11 // pred_region
          _
        $region44: #{deeponet_forward.3} parent=11 // pred_fallthru
          _
        // Predicated region
        $region45: #{deeponet_forward.3} parent=11 // pred_check
          %p341 = pneg %p276
        $region46: #{deeponet_forward.3} parent=11 // pred_check_branch
          %343 = sbr.rel (%p341) target = $region48
        $region47: #{deeponet_forward.3} parent=11 // pred_region
          _
        $region48: #{deeponet_forward.3} parent=11 // pred_fallthru
          _
      $region12: #{deeponet_forward.3} parent=5 // pred_fallthru
        _
      %p344 = scmp.lt.s32.totalorder %s21, 6
      // Predicated region
      $region49: #{deeponet_forward.3} parent=5 // pred_check
        %p345 = pneg %p344
      $region50: #{deeponet_forward.3} parent=5 // pred_check_branch
        %347 = sbr.rel (%p345) target = $region52
      $region51: #{deeponet_forward.3} parent=5 // pred_region
        // Predicated region
        $region53: #{deeponet_forward.3} parent=51 // pred_check
          %p348 = pneg %p55
        $region54: #{deeponet_forward.3} parent=51 // pred_check_branch
          %350 = sbr.rel (%p348) target = $region56
        $region55: #{deeponet_forward.3} parent=51 // pred_region
          %s351 = smul.u32 2, %s29
          %p352 = scmp.lt.s32.totalorder %s28, 2
          %s353 = scalar_select %p352, %s28, 2
          %p354 = scmp.lt.s32.totalorder %s351, 3
          %s355 = scalar_select %p354, %s351, 3
          %s356 = smul.addr %s353, 4
          %s357 = sadd.s32 %s355, %s356
          %s358 = smul.addr %s357, 8
          %s359 = scalar_lea.vmem %s0, %s358
          %s360 = smul.u32 2, %s29
        $region56: #{deeponet_forward.3} parent=51 // pred_fallthru
          _
        // Predicated region
        $region57: #{deeponet_forward.3} parent=51 // pred_check
          %p361 = pneg %p81
        $region58: #{deeponet_forward.3} parent=51 // pred_check_branch
          %363 = sbr.rel (%p361) target = $region60
        $region59: #{deeponet_forward.3} parent=51 // pred_region
          %s364 = smul.u32 32, %s29
          %p365 = scmp.lt.s32.totalorder %s364, 63
          %s366 = scalar_select %p365, %s364, 63
          %s367 = smul.addr %s366, 2
          %s368 = smul.addr %s367, 8
          %s369 = scalar_lea.vmem %s1, %s368
          %s370 = smul.u32 32, %s29
        $region60: #{deeponet_forward.3} parent=51 // pred_fallthru
          _
      $region52: #{deeponet_forward.3} parent=5 // pred_fallthru
        _
      %p371 = scmp.le.s32.totalorder 1, %s21
      %p372 = scmp.lt.s32.totalorder %s21, 7
      %p373 = pnand %p371, %p372
      %p374 = pneg %p373
      // Predicated region
      $region61: #{deeponet_forward.3} parent=5 // pred_check
        _
      $region62: #{deeponet_forward.3} parent=5 // pred_check_branch
        %376 = sbr.rel (%p373) target = $region64
      $region63: #{deeponet_forward.3} parent=5 // pred_region
        %s377 = ssub.s32 %s21, 1
        %s378 = smul.u32 2, %s31
        %p379 = scmp.lt.s32.totalorder %s30, 2
        %s380 = scalar_select %p379, %s30, 2
        %p381 = scmp.lt.s32.totalorder %s378, 3
        %s382 = scalar_select %p381, %s378, 3
        %s383 = smul.addr %s380, 4
        %s384 = sadd.s32 %s382, %s383
        %s385 = smul.addr %s384, 8
        %s386 = scalar_lea.vmem %s0, %s385
        %p387 = pneg %p61
        %p388 = pneg %p58
        %s389 = smul.u32 32, %s31
        %p390 = scmp.lt.s32.totalorder %s389, 63
        %s391 = scalar_select %p390, %s389, 63
        %s392 = smul.addr %s391, 2
        %s393 = smul.addr %s392, 8
        %s394 = scalar_lea.vmem %s1, %s393
        %p395 = pneg %p87
        %p396 = pneg %p84
        %p397 = pneg %p108
        %p398 = pneg %p105
        %p399 = pneg %p129
        %p400 = pneg %p126
        %p401 = pneg %p150
        %p402 = pneg %p147
        %p403 = pneg %p171
        %p404 = pneg %p168
        %p405 = pneg %p192
        %p406 = pneg %p189
        %p407 = pneg %p213
        %p408 = pneg %p210
        %p409 = pneg %p234
        %p410 = pneg %p231
        %p411 = pneg %p255
        %p412 = pneg %p252
        %p413 = pneg %p276
        %p414 = pneg %p273
        %p415 = pneg %p302
        %p416 = pneg %p299
        %s417 = sand.u32 %s289, 1
        %s418 = scalar_lea.sflag [#allocation5], %s417
        %s419 = sand.u32 %s289, 1
        %s420 = smul.addr %s419, 8
        %s421 = scalar_lea.vmem [#allocation4], %s420
        %s422 = smul.u32 2, %s31
        %p423 = scmp.lt.s32.totalorder %s30, 2
        %s424 = scalar_select %p423, %s30, 2
        %p425 = scmp.lt.s32.totalorder %s422, 3
        %s426 = scalar_select %p425, %s422, 3
        %s427 = smul.addr %s424, 4
        %s428 = sadd.s32 %s426, %s427
        %s429 = smul.addr %s428, 8
        %s430 = scalar_lea.vmem %s0, %s429
        %s431 = smul.u32 2, %s31
        %s432 = smul.u32 32, %s31
        %p433 = scmp.lt.s32.totalorder %s432, 63
        %s434 = scalar_select %p433, %s432, 63
        %s435 = smul.addr %s434, 2
        %s436 = smul.addr %s435, 8
        %s437 = scalar_lea.vmem %s1, %s436
        %s438 = smul.u32 32, %s31
        %p439 = scmp.eq.s32.totalorder %s31, 0
        // Predicated region
        $region65: #{deeponet_forward.3} parent=63 // pred_check
          %p440 = pneg %p439
        $region66: #{deeponet_forward.3} parent=63 // pred_check_branch
          %442 = sbr.rel (%p440) target = $region68
        $region67: #{deeponet_forward.3} parent=63 // pred_region
          %443 = vst [vmem:[#allocation2] sm:$0xff] 0.0
          %444 = vst [vmem:[#allocation2 + $0x8] sm:$0xff] 0.0
        $region68: #{deeponet_forward.3} parent=63 // pred_fallthru
          _
        %v445 = vld [vmem:[#allocation2] sm:$0xff]
        %v446 = vld [vmem:[#allocation2 + $0x8] sm:$0xff]
        %v447 = vld [vmem:[%s430] sm:$0xff]
        %v448 = vld [vmem:[%s430 + $0x8] sm:$0xff]
        %v449 = vld [vmem:[%s437] sm:$0xff]
        %v450 = vld [vmem:[%s437 + $0x8] sm:$0xff]
        %v451 = vld [vmem:[%s437 + $0x10] sm:$0xff]
        %v452 = vld [vmem:[%s437 + $0x18] sm:$0xff]
        %v453 = vld [vmem:[%s437 + $0x20] sm:$0xff]
        %v454 = vld [vmem:[%s437 + $0x28] sm:$0xff]
        %v455 = vld [vmem:[%s437 + $0x30] sm:$0xff]
        %v456 = vld [vmem:[%s437 + $0x38] sm:$0xff]
        %v457 = vld [vmem:[%s437 + $0x40] sm:$0xff]
        %v458 = vld [vmem:[%s437 + $0x48] sm:$0xff]
        %v459 = vld [vmem:[%s437 + $0x50] sm:$0xff]
        %v460 = vld [vmem:[%s437 + $0x58] sm:$0xff]
        %v461 = vld [vmem:[%s437 + $0x60] sm:$0xff]
        %v462 = vld [vmem:[%s437 + $0x68] sm:$0xff]
        %v463 = vld [vmem:[%s437 + $0x70] sm:$0xff]
        %v464 = vld [vmem:[%s437 + $0x78] sm:$0xff]
        %v465 = vld [vmem:[%s437 + $0x80] sm:$0xff]
        %v466 = vld [vmem:[%s437 + $0x88] sm:$0xff]
        %v467 = vld [vmem:[%s437 + $0x90] sm:$0xff]
        %v468 = vld [vmem:[%s437 + $0x98] sm:$0xff]
        %v469 = vld [vmem:[%s437 + $0xa0] sm:$0xff]
        %v470 = vld [vmem:[%s437 + $0xa8] sm:$0xff]
        %v471 = vld [vmem:[%s437 + $0xb0] sm:$0xff]
        %v472 = vld [vmem:[%s437 + $0xb8] sm:$0xff]
        %v473 = vld [vmem:[%s437 + $0xc0] sm:$0xff]
        %v474 = vld [vmem:[%s437 + $0xc8] sm:$0xff]
        %v475 = vld [vmem:[%s437 + $0xd0] sm:$0xff]
        %v476 = vld [vmem:[%s437 + $0xd8] sm:$0xff]
        %v477 = vld [vmem:[%s437 + $0xe0] sm:$0xff]
        %v478 = vld [vmem:[%s437 + $0xe8] sm:$0xff]
        %v479 = vld [vmem:[%s437 + $0xf0] sm:$0xff]
        %v480 = vld [vmem:[%s437 + $0xf8] sm:$0xff]
        %v481 = vld [vmem:[%s437 + $0x100] sm:$0xff]
        %v482 = vld [vmem:[%s437 + $0x108] sm:$0xff]
        %v483 = vld [vmem:[%s437 + $0x110] sm:$0xff]
        %v484 = vld [vmem:[%s437 + $0x118] sm:$0xff]
        %v485 = vld [vmem:[%s437 + $0x120] sm:$0xff]
        %v486 = vld [vmem:[%s437 + $0x128] sm:$0xff]
        %v487 = vld [vmem:[%s437 + $0x130] sm:$0xff]
        %v488 = vld [vmem:[%s437 + $0x138] sm:$0xff]
        %v489 = vld [vmem:[%s437 + $0x140] sm:$0xff]
        %v490 = vld [vmem:[%s437 + $0x148] sm:$0xff]
        %v491 = vld [vmem:[%s437 + $0x150] sm:$0xff]
        %v492 = vld [vmem:[%s437 + $0x158] sm:$0xff]
        %v493 = vld [vmem:[%s437 + $0x160] sm:$0xff]
        %v494 = vld [vmem:[%s437 + $0x168] sm:$0xff]
        %v495 = vld [vmem:[%s437 + $0x170] sm:$0xff]
        %v496 = vld [vmem:[%s437 + $0x178] sm:$0xff]
        %v497 = vld [vmem:[%s437 + $0x180] sm:$0xff]
        %v498 = vld [vmem:[%s437 + $0x188] sm:$0xff]
        %v499 = vld [vmem:[%s437 + $0x190] sm:$0xff]
        %v500 = vld [vmem:[%s437 + $0x198] sm:$0xff]
        %v501 = vld [vmem:[%s437 + $0x1a0] sm:$0xff]
        %v502 = vld [vmem:[%s437 + $0x1a8] sm:$0xff]
        %v503 = vld [vmem:[%s437 + $0x1b0] sm:$0xff]
        %v504 = vld [vmem:[%s437 + $0x1b8] sm:$0xff]
        %v505 = vld [vmem:[%s437 + $0x1c0] sm:$0xff]
        %v506 = vld [vmem:[%s437 + $0x1c8] sm:$0xff]
        %v507 = vld [vmem:[%s437 + $0x1d0] sm:$0xff]
        %v508 = vld [vmem:[%s437 + $0x1d8] sm:$0xff]
        %v509 = vld [vmem:[%s437 + $0x1e0] sm:$0xff]
        %v510 = vld [vmem:[%s437 + $0x1e8] sm:$0xff]
        %v511 = vld [vmem:[%s437 + $0x1f0] sm:$0xff]
        %v512 = vld [vmem:[%s437 + $0x1f8] sm:$0xff]
        %513 = vmatprep.subr.mxu0 %v480
        %514 = vmatpush1.msra.mxu0 %v479
        %515 = vmatprep.subr.mxu0 %v478
        %516 = vmatpush1.msra.mxu0 %v477
        %517 = vmatprep.subr.mxu0 %v476
        %518 = vmatpush1.msra.mxu0 %v475
        %519 = vmatprep.subr.mxu0 %v474
        %520 = vmatpush1.msra.mxu0 %v473
        %521 = vmatprep.subr.mxu0 %v472
        %522 = vmatpush1.msra.mxu0 %v471
        %523 = vmatprep.subr.mxu0 %v470
        %524 = vmatpush1.msra.mxu0 %v469
        %525 = vmatprep.subr.mxu0 %v468
        %526 = vmatpush1.msra.mxu0 %v467
        %527 = vmatprep.subr.mxu0 %v466
        %528 = vmatpush1.msra.mxu0 %v465
        %529 = vmatprep.subr.mxu0 %v464
        %530 = vmatpush1.msra.mxu0 %v463
        %531 = vmatprep.subr.mxu0 %v462
        %532 = vmatpush1.msra.mxu0 %v461
        %533 = vmatprep.subr.mxu0 %v460
        %534 = vmatpush1.msra.mxu0 %v459
        %535 = vmatprep.subr.mxu0 %v458
        %536 = vmatpush1.msra.mxu0 %v457
        %537 = vmatprep.subr.mxu0 %v456
        %538 = vmatpush1.msra.mxu0 %v455
        %539 = vmatprep.subr.mxu0 %v454
        %540 = vmatpush1.msra.mxu0 %v453
        %541 = vmatprep.subr.mxu0 %v452
        %542 = vmatpush1.msra.mxu0 %v451
        %543 = vmatprep.subr.mxu0 %v450
        %544 = vmatpush1.msra.mxu0 %v449
        %545 = vmatprep.subr.mxu0 %v512
        %546 = vmatpush2.msra.mxu0 %v511
        %547 = vmatprep.subr.mxu0 %v510
        %548 = vmatpush2.msra.mxu0 %v509
        %549 = vmatprep.subr.mxu0 %v508
        %550 = vmatpush2.msra.mxu0 %v507
        %551 = vmatprep.subr.mxu0 %v506
        %552 = vmatpush2.msra.mxu0 %v505
        %553 = vmatprep.subr.mxu0 %v504
        %554 = vmatpush2.msra.mxu0 %v503
        %555 = vmatprep.subr.mxu0 %v502
        %556 = vmatpush2.msra.mxu0 %v501
        %557 = vmatprep.subr.mxu0 %v500
        %558 = vmatpush2.msra.mxu0 %v499
        %559 = vmatprep.subr.mxu0 %v498
        %560 = vmatpush2.msra.mxu0 %v497
        %561 = vmatprep.subr.mxu0 %v496
        %562 = vmatpush2.msra.mxu0 %v495
        %563 = vmatprep.subr.mxu0 %v494
        %564 = vmatpush2.msra.mxu0 %v493
        %565 = vmatprep.subr.mxu0 %v492
        %566 = vmatpush2.msra.mxu0 %v491
        %567 = vmatprep.subr.mxu0 %v490
        %568 = vmatpush2.msra.mxu0 %v489
        %569 = vmatprep.subr.mxu0 %v488
        %570 = vmatpush2.msra.mxu0 %v487
        %571 = vmatprep.subr.mxu0 %v486
        %572 = vmatpush2.msra.mxu0 %v485
        %573 = vmatprep.subr.mxu0 %v484
        %574 = vmatpush2.msra.mxu0 %v483
        %575 = vmatprep.subr.mxu0 %v482
        %576 = vmatpush2.msra.mxu0 %v481
        %577 = vmatprep.mubr.f32.mxu0 %v448
        %578 = vmatmul.mubr.f32.gmra.mxu0 %v447
        %v579 = vpop.f32.mrf.mxu0
        %v580 = vadd.f32 0.0, %v579
        %v581 = vpop.f32.mrf.mxu0
        %v582 = vadd.f32 0.0, %v581
        %583 = vdwg.mxu0
        %v584 = vadd.f32 %v445, %v580
        %v585 = vadd.f32 %v446, %v582
        %586 = vst [vmem:[#allocation2] sm:$0xff] %v584
        %587 = vst [vmem:[#allocation2 + $0x8] sm:$0xff] %v585
        %p588 = scmp.eq.s32.totalorder %s31, 1
        // Predicated region
        $region69: #{deeponet_forward.3} parent=63 // pred_check
          %p589 = pneg %p588
        $region70: #{deeponet_forward.3} parent=63 // pred_check_branch
          %591 = sbr.rel (%p589) target = $region72
        $region71: #{deeponet_forward.3} parent=63 // pred_region
          %v592 = vld [vmem:[#allocation2] sm:$0xff]
          %v593 = vld [vmem:[#allocation2 + $0x8] sm:$0xff]
          %v594 = vld [vmem:[%s2] sm:$0x3]
          %v596 = vlaneseq
          %v597 = vshrl.u32 %v596, 7
          %v598 = vsub.s32 0, %v597
          %v599 = vrot.slane %v594, %v598
          %v600 = vlaneseq
          %v601 = vshrl.u32 %v600, 7
          %v602 = vsub.s32 1, %v601
          %v603 = vrot.slane %v594, %v602
          %v606 = vadd.f32 %v592, %v599
          %v607 = vadd.f32 %v593, %v603
          %v608 = vtanh.pop %v606
          %v609 = vtanh.pop %v607
          %v610 = vld [vmem:[%s3] sm:$0xff]
          %v611 = vld [vmem:[%s3 + $0x8] sm:$0xff]
          %v612 = vld [vmem:[%s3 + $0x10] sm:$0xff]
          %v613 = vld [vmem:[%s3 + $0x18] sm:$0xff]
          %v614 = vld [vmem:[%s3 + $0x20] sm:$0xff]
          %v615 = vld [vmem:[%s3 + $0x28] sm:$0xff]
          %v616 = vld [vmem:[%s3 + $0x30] sm:$0xff]
          %v617 = vld [vmem:[%s3 + $0x38] sm:$0xff]
          %v618 = vld [vmem:[%s3 + $0x40] sm:$0xff]
          %v619 = vld [vmem:[%s3 + $0x48] sm:$0xff]
          %v620 = vld [vmem:[%s3 + $0x50] sm:$0xff]
          %v621 = vld [vmem:[%s3 + $0x58] sm:$0xff]
          %v622 = vld [vmem:[%s3 + $0x60] sm:$0xff]
          %v623 = vld [vmem:[%s3 + $0x68] sm:$0xff]
          %v624 = vld [vmem:[%s3 + $0x70] sm:$0xff]
          %v625 = vld [vmem:[%s3 + $0x78] sm:$0xff]
          %v626 = vld [vmem:[%s3 + $0x80] sm:$0xff]
          %v627 = vld [vmem:[%s3 + $0x88] sm:$0xff]
          %v628 = vld [vmem:[%s3 + $0x90] sm:$0xff]
          %v629 = vld [vmem:[%s3 + $0x98] sm:$0xff]
          %v630 = vld [vmem:[%s3 + $0xa0] sm:$0xff]
          %v631 = vld [vmem:[%s3 + $0xa8] sm:$0xff]
          %v632 = vld [vmem:[%s3 + $0xb0] sm:$0xff]
          %v633 = vld [vmem:[%s3 + $0xb8] sm:$0xff]
          %v634 = vld [vmem:[%s3 + $0xc0] sm:$0xff]
          %v635 = vld [vmem:[%s3 + $0xc8] sm:$0xff]
          %v636 = vld [vmem:[%s3 + $0xd0] sm:$0xff]
          %v637 = vld [vmem:[%s3 + $0xd8] sm:$0xff]
          %v638 = vld [vmem:[%s3 + $0xe0] sm:$0xff]
          %v639 = vld [vmem:[%s3 + $0xe8] sm:$0xff]
          %v640 = vld [vmem:[%s3 + $0xf0] sm:$0xff]
          %v641 = vld [vmem:[%s3 + $0xf8] sm:$0xff]
          %v642 = vld [vmem:[%s3 + $0x100] sm:$0xff]
          %v643 = vld [vmem:[%s3 + $0x108] sm:$0xff]
          %v644 = vld [vmem:[%s3 + $0x110] sm:$0xff]
          %v645 = vld [vmem:[%s3 + $0x118] sm:$0xff]
          %v646 = vld [vmem:[%s3 + $0x120] sm:$0xff]
          %v647 = vld [vmem:[%s3 + $0x128] sm:$0xff]
          %v648 = vld [vmem:[%s3 + $0x130] sm:$0xff]
          %v649 = vld [vmem:[%s3 + $0x138] sm:$0xff]
          %v650 = vld [vmem:[%s3 + $0x140] sm:$0xff]
          %v651 = vld [vmem:[%s3 + $0x148] sm:$0xff]
          %v652 = vld [vmem:[%s3 + $0x150] sm:$0xff]
          %v653 = vld [vmem:[%s3 + $0x158] sm:$0xff]
          %v654 = vld [vmem:[%s3 + $0x160] sm:$0xff]
          %v655 = vld [vmem:[%s3 + $0x168] sm:$0xff]
          %v656 = vld [vmem:[%s3 + $0x170] sm:$0xff]
          %v657 = vld [vmem:[%s3 + $0x178] sm:$0xff]
          %v658 = vld [vmem:[%s3 + $0x180] sm:$0xff]
          %v659 = vld [vmem:[%s3 + $0x188] sm:$0xff]
          %v660 = vld [vmem:[%s3 + $0x190] sm:$0xff]
          %v661 = vld [vmem:[%s3 + $0x198] sm:$0xff]
          %v662 = vld [vmem:[%s3 + $0x1a0] sm:$0xff]
          %v663 = vld [vmem:[%s3 + $0x1a8] sm:$0xff]
          %v664 = vld [vmem:[%s3 + $0x1b0] sm:$0xff]
          %v665 = vld [vmem:[%s3 + $0x1b8] sm:$0xff]
          %v666 = vld [vmem:[%s3 + $0x1c0] sm:$0xff]
          %v667 = vld [vmem:[%s3 + $0x1c8] sm:$0xff]
          %v668 = vld [vmem:[%s3 + $0x1d0] sm:$0xff]
          %v669 = vld [vmem:[%s3 + $0x1d8] sm:$0xff]
          %v670 = vld [vmem:[%s3 + $0x1e0] sm:$0xff]
          %v671 = vld [vmem:[%s3 + $0x1e8] sm:$0xff]
          %v672 = vld [vmem:[%s3 + $0x1f0] sm:$0xff]
          %v673 = vld [vmem:[%s3 + $0x1f8] sm:$0xff]
          %v674 = vld [vmem:[%s4] sm:$0x3]
          %v676 = vlaneseq
          %v677 = vshrl.u32 %v676, 7
          %v678 = vsub.s32 0, %v677
          %v679 = vrot.slane %v674, %v678
          %v680 = vlaneseq
          %v681 = vshrl.u32 %v680, 7
          %v682 = vsub.s32 1, %v681
          %v683 = vrot.slane %v674, %v682
          %686 = vmatprep.subr.mxu0 %v641
          %687 = vmatpush1.msra.mxu0 %v640
          %688 = vmatprep.subr.mxu0 %v639
          %689 = vmatpush1.msra.mxu0 %v638
          %690 = vmatprep.subr.mxu0 %v637
          %691 = vmatpush1.msra.mxu0 %v636
          %692 = vmatprep.subr.mxu0 %v635
          %693 = vmatpush1.msra.mxu0 %v634
          %694 = vmatprep.subr.mxu0 %v633
          %695 = vmatpush1.msra.mxu0 %v632
          %696 = vmatprep.subr.mxu0 %v631
          %697 = vmatpush1.msra.mxu0 %v630
          %698 = vmatprep.subr.mxu0 %v629
          %699 = vmatpush1.msra.mxu0 %v628
          %700 = vmatprep.subr.mxu0 %v627
          %701 = vmatpush1.msra.mxu0 %v626
          %702 = vmatprep.subr.mxu0 %v625
          %703 = vmatpush1.msra.mxu0 %v624
          %704 = vmatprep.subr.mxu0 %v623
          %705 = vmatpush1.msra.mxu0 %v622
          %706 = vmatprep.subr.mxu0 %v621
          %707 = vmatpush1.msra.mxu0 %v620
          %708 = vmatprep.subr.mxu0 %v619
          %709 = vmatpush1.msra.mxu0 %v618
          %710 = vmatprep.subr.mxu0 %v617
          %711 = vmatpush1.msra.mxu0 %v616
          %712 = vmatprep.subr.mxu0 %v615
          %713 = vmatpush1.msra.mxu0 %v614
          %714 = vmatprep.subr.mxu0 %v613
          %715 = vmatpush1.msra.mxu0 %v612
          %716 = vmatprep.subr.mxu0 %v611
          %717 = vmatpush1.msra.mxu0 %v610
          %718 = vmatprep.subr.mxu0 %v673
          %719 = vmatpush2.msra.mxu0 %v672
          %720 = vmatprep.subr.mxu0 %v671
          %721 = vmatpush2.msra.mxu0 %v670
          %722 = vmatprep.subr.mxu0 %v669
          %723 = vmatpush2.msra.mxu0 %v668
          %724 = vmatprep.subr.mxu0 %v667
          %725 = vmatpush2.msra.mxu0 %v666
          %726 = vmatprep.subr.mxu0 %v665
          %727 = vmatpush2.msra.mxu0 %v664
          %728 = vmatprep.subr.mxu0 %v663
          %729 = vmatpush2.msra.mxu0 %v662
          %730 = vmatprep.subr.mxu0 %v661
          %731 = vmatpush2.msra.mxu0 %v660
          %732 = vmatprep.subr.mxu0 %v659
          %733 = vmatpush2.msra.mxu0 %v658
          %734 = vmatprep.subr.mxu0 %v657
          %735 = vmatpush2.msra.mxu0 %v656
          %736 = vmatprep.subr.mxu0 %v655
          %737 = vmatpush2.msra.mxu0 %v654
          %738 = vmatprep.subr.mxu0 %v653
          %739 = vmatpush2.msra.mxu0 %v652
          %740 = vmatprep.subr.mxu0 %v651
          %741 = vmatpush2.msra.mxu0 %v650
          %742 = vmatprep.subr.mxu0 %v649
          %743 = vmatpush2.msra.mxu0 %v648
          %744 = vmatprep.subr.mxu0 %v647
          %745 = vmatpush2.msra.mxu0 %v646
          %746 = vmatprep.subr.mxu0 %v645
          %747 = vmatpush2.msra.mxu0 %v644
          %748 = vmatprep.subr.mxu0 %v643
          %749 = vmatpush2.msra.mxu0 %v642
          %750 = vmatprep.mubr.f32.mxu0 %v609
          %751 = vmatmul.mubr.f32.gmra.mxu0 %v608
          %v752 = vpop.f32.mrf.mxu0
          %v753 = vadd.f32 %v679, %v752
          %v754 = vpop.f32.mrf.mxu0
          %v755 = vadd.f32 %v683, %v754
          %756 = vdwg.mxu0
          %v757 = vtanh.pop %v753
          %v758 = vtanh.pop %v755
          %v759 = vld [vmem:[%s5] sm:$0xff]
          %v760 = vld [vmem:[%s5 + $0x8] sm:$0xff]
          %v761 = vld [vmem:[%s5 + $0x10] sm:$0xff]
          %v762 = vld [vmem:[%s5 + $0x18] sm:$0xff]
          %v763 = vld [vmem:[%s5 + $0x20] sm:$0xff]
          %v764 = vld [vmem:[%s5 + $0x28] sm:$0xff]
          %v765 = vld [vmem:[%s5 + $0x30] sm:$0xff]
          %v766 = vld [vmem:[%s5 + $0x38] sm:$0xff]
          %v767 = vld [vmem:[%s5 + $0x40] sm:$0xff]
          %v768 = vld [vmem:[%s5 + $0x48] sm:$0xff]
          %v769 = vld [vmem:[%s5 + $0x50] sm:$0xff]
          %v770 = vld [vmem:[%s5 + $0x58] sm:$0xff]
          %v771 = vld [vmem:[%s5 + $0x60] sm:$0xff]
          %v772 = vld [vmem:[%s5 + $0x68] sm:$0xff]
          %v773 = vld [vmem:[%s5 + $0x70] sm:$0xff]
          %v774 = vld [vmem:[%s5 + $0x78] sm:$0xff]
          %v775 = vld [vmem:[%s5 + $0x80] sm:$0xff]
          %v776 = vld [vmem:[%s5 + $0x88] sm:$0xff]
          %v777 = vld [vmem:[%s5 + $0x90] sm:$0xff]
          %v778 = vld [vmem:[%s5 + $0x98] sm:$0xff]
          %v779 = vld [vmem:[%s5 + $0xa0] sm:$0xff]
          %v780 = vld [vmem:[%s5 + $0xa8] sm:$0xff]
          %v781 = vld [vmem:[%s5 + $0xb0] sm:$0xff]
          %v782 = vld [vmem:[%s5 + $0xb8] sm:$0xff]
          %v783 = vld [vmem:[%s5 + $0xc0] sm:$0xff]
          %v784 = vld [vmem:[%s5 + $0xc8] sm:$0xff]
          %v785 = vld [vmem:[%s5 + $0xd0] sm:$0xff]
          %v786 = vld [vmem:[%s5 + $0xd8] sm:$0xff]
          %v787 = vld [vmem:[%s5 + $0xe0] sm:$0xff]
          %v788 = vld [vmem:[%s5 + $0xe8] sm:$0xff]
          %v789 = vld [vmem:[%s5 + $0xf0] sm:$0xff]
          %v790 = vld [vmem:[%s5 + $0xf8] sm:$0xff]
          %v791 = vld [vmem:[%s5 + $0x100] sm:$0xff]
          %v792 = vld [vmem:[%s5 + $0x108] sm:$0xff]
          %v793 = vld [vmem:[%s5 + $0x110] sm:$0xff]
          %v794 = vld [vmem:[%s5 + $0x118] sm:$0xff]
          %v795 = vld [vmem:[%s5 + $0x120] sm:$0xff]
          %v796 = vld [vmem:[%s5 + $0x128] sm:$0xff]
          %v797 = vld [vmem:[%s5 + $0x130] sm:$0xff]
          %v798 = vld [vmem:[%s5 + $0x138] sm:$0xff]
          %v799 = vld [vmem:[%s5 + $0x140] sm:$0xff]
          %v800 = vld [vmem:[%s5 + $0x148] sm:$0xff]
          %v801 = vld [vmem:[%s5 + $0x150] sm:$0xff]
          %v802 = vld [vmem:[%s5 + $0x158] sm:$0xff]
          %v803 = vld [vmem:[%s5 + $0x160] sm:$0xff]
          %v804 = vld [vmem:[%s5 + $0x168] sm:$0xff]
          %v805 = vld [vmem:[%s5 + $0x170] sm:$0xff]
          %v806 = vld [vmem:[%s5 + $0x178] sm:$0xff]
          %v807 = vld [vmem:[%s5 + $0x180] sm:$0xff]
          %v808 = vld [vmem:[%s5 + $0x188] sm:$0xff]
          %v809 = vld [vmem:[%s5 + $0x190] sm:$0xff]
          %v810 = vld [vmem:[%s5 + $0x198] sm:$0xff]
          %v811 = vld [vmem:[%s5 + $0x1a0] sm:$0xff]
          %v812 = vld [vmem:[%s5 + $0x1a8] sm:$0xff]
          %v813 = vld [vmem:[%s5 + $0x1b0] sm:$0xff]
          %v814 = vld [vmem:[%s5 + $0x1b8] sm:$0xff]
          %v815 = vld [vmem:[%s5 + $0x1c0] sm:$0xff]
          %v816 = vld [vmem:[%s5 + $0x1c8] sm:$0xff]
          %v817 = vld [vmem:[%s5 + $0x1d0] sm:$0xff]
          %v818 = vld [vmem:[%s5 + $0x1d8] sm:$0xff]
          %v819 = vld [vmem:[%s5 + $0x1e0] sm:$0xff]
          %v820 = vld [vmem:[%s5 + $0x1e8] sm:$0xff]
          %v821 = vld [vmem:[%s5 + $0x1f0] sm:$0xff]
          %v822 = vld [vmem:[%s5 + $0x1f8] sm:$0xff]
          %v823 = vld [vmem:[%s6] sm:$0x3]
          %v825 = vlaneseq
          %v826 = vshrl.u32 %v825, 7
          %v827 = vsub.s32 0, %v826
          %v828 = vrot.slane %v823, %v827
          %v829 = vlaneseq
          %v830 = vshrl.u32 %v829, 7
          %v831 = vsub.s32 1, %v830
          %v832 = vrot.slane %v823, %v831
          %835 = vmatprep.subr.mxu0 %v790
          %836 = vmatpush1.msra.mxu0 %v789
          %837 = vmatprep.subr.mxu0 %v788
          %838 = vmatpush1.msra.mxu0 %v787
          %839 = vmatprep.subr.mxu0 %v786
          %840 = vmatpush1.msra.mxu0 %v785
          %841 = vmatprep.subr.mxu0 %v784
          %842 = vmatpush1.msra.mxu0 %v783
          %843 = vmatprep.subr.mxu0 %v782
          %844 = vmatpush1.msra.mxu0 %v781
          %845 = vmatprep.subr.mxu0 %v780
          %846 = vmatpush1.msra.mxu0 %v779
          %847 = vmatprep.subr.mxu0 %v778
          %848 = vmatpush1.msra.mxu0 %v777
          %849 = vmatprep.subr.mxu0 %v776
          %850 = vmatpush1.msra.mxu0 %v775
          %851 = vmatprep.subr.mxu0 %v774
          %852 = vmatpush1.msra.mxu0 %v773
          %853 = vmatprep.subr.mxu0 %v772
          %854 = vmatpush1.msra.mxu0 %v771
          %855 = vmatprep.subr.mxu0 %v770
          %856 = vmatpush1.msra.mxu0 %v769
          %857 = vmatprep.subr.mxu0 %v768
          %858 = vmatpush1.msra.mxu0 %v767
          %859 = vmatprep.subr.mxu0 %v766
          %860 = vmatpush1.msra.mxu0 %v765
          %861 = vmatprep.subr.mxu0 %v764
          %862 = vmatpush1.msra.mxu0 %v763
          %863 = vmatprep.subr.mxu0 %v762
          %864 = vmatpush1.msra.mxu0 %v761
          %865 = vmatprep.subr.mxu0 %v760
          %866 = vmatpush1.msra.mxu0 %v759
          %867 = vmatprep.subr.mxu0 %v822
          %868 = vmatpush2.msra.mxu0 %v821
          %869 = vmatprep.subr.mxu0 %v820
          %870 = vmatpush2.msra.mxu0 %v819
          %871 = vmatprep.subr.mxu0 %v818
          %872 = vmatpush2.msra.mxu0 %v817
          %873 = vmatprep.subr.mxu0 %v816
          %874 = vmatpush2.msra.mxu0 %v815
          %875 = vmatprep.subr.mxu0 %v814
          %876 = vmatpush2.msra.mxu0 %v813
          %877 = vmatprep.subr.mxu0 %v812
          %878 = vmatpush2.msra.mxu0 %v811
          %879 = vmatprep.subr.mxu0 %v810
          %880 = vmatpush2.msra.mxu0 %v809
          %881 = vmatprep.subr.mxu0 %v808
          %882 = vmatpush2.msra.mxu0 %v807
          %883 = vmatprep.subr.mxu0 %v806
          %884 = vmatpush2.msra.mxu0 %v805
          %885 = vmatprep.subr.mxu0 %v804
          %886 = vmatpush2.msra.mxu0 %v803
          %887 = vmatprep.subr.mxu0 %v802
          %888 = vmatpush2.msra.mxu0 %v801
          %889 = vmatprep.subr.mxu0 %v800
          %890 = vmatpush2.msra.mxu0 %v799
          %891 = vmatprep.subr.mxu0 %v798
          %892 = vmatpush2.msra.mxu0 %v797
          %893 = vmatprep.subr.mxu0 %v796
          %894 = vmatpush2.msra.mxu0 %v795
          %895 = vmatprep.subr.mxu0 %v794
          %896 = vmatpush2.msra.mxu0 %v793
          %897 = vmatprep.subr.mxu0 %v792
          %898 = vmatpush2.msra.mxu0 %v791
          %899 = vmatprep.mubr.f32.mxu0 %v758
          %900 = vmatmul.mubr.f32.gmra.mxu0 %v757
          %v901 = vpop.f32.mrf.mxu0
          %v902 = vadd.f32 %v828, %v901
          %v903 = vpop.f32.mrf.mxu0
          %v904 = vadd.f32 %v832, %v903
          %905 = vdwg.mxu0
          %v906 = vtanh.pop %v902
          %v907 = vtanh.pop %v904
          %v908 = vld [vmem:[%s7] sm:$0xff]
          %v909 = vld [vmem:[%s7 + $0x8] sm:$0xff]
          %v910 = vld [vmem:[%s7 + $0x10] sm:$0xff]
          %v911 = vld [vmem:[%s7 + $0x18] sm:$0xff]
          %v912 = vld [vmem:[%s7 + $0x20] sm:$0xff]
          %v913 = vld [vmem:[%s7 + $0x28] sm:$0xff]
          %v914 = vld [vmem:[%s7 + $0x30] sm:$0xff]
          %v915 = vld [vmem:[%s7 + $0x38] sm:$0xff]
          %v916 = vld [vmem:[%s7 + $0x40] sm:$0xff]
          %v917 = vld [vmem:[%s7 + $0x48] sm:$0xff]
          %v918 = vld [vmem:[%s7 + $0x50] sm:$0xff]
          %v919 = vld [vmem:[%s7 + $0x58] sm:$0xff]
          %v920 = vld [vmem:[%s7 + $0x60] sm:$0xff]
          %v921 = vld [vmem:[%s7 + $0x68] sm:$0xff]
          %v922 = vld [vmem:[%s7 + $0x70] sm:$0xff]
          %v923 = vld [vmem:[%s7 + $0x78] sm:$0xff]
          %v924 = vld [vmem:[%s7 + $0x80] sm:$0xff]
          %v925 = vld [vmem:[%s7 + $0x88] sm:$0xff]
          %v926 = vld [vmem:[%s7 + $0x90] sm:$0xff]
          %v927 = vld [vmem:[%s7 + $0x98] sm:$0xff]
          %v928 = vld [vmem:[%s7 + $0xa0] sm:$0xff]
          %v929 = vld [vmem:[%s7 + $0xa8] sm:$0xff]
          %v930 = vld [vmem:[%s7 + $0xb0] sm:$0xff]
          %v931 = vld [vmem:[%s7 + $0xb8] sm:$0xff]
          %v932 = vld [vmem:[%s7 + $0xc0] sm:$0xff]
          %v933 = vld [vmem:[%s7 + $0xc8] sm:$0xff]
          %v934 = vld [vmem:[%s7 + $0xd0] sm:$0xff]
          %v935 = vld [vmem:[%s7 + $0xd8] sm:$0xff]
          %v936 = vld [vmem:[%s7 + $0xe0] sm:$0xff]
          %v937 = vld [vmem:[%s7 + $0xe8] sm:$0xff]
          %v938 = vld [vmem:[%s7 + $0xf0] sm:$0xff]
          %v939 = vld [vmem:[%s7 + $0xf8] sm:$0xff]
          %v940 = vld [vmem:[%s8] sm:$0x1]
          %v942 = vlaneseq
          %v943 = vshrl.u32 %v942, 7
          %v944 = vsub.s32 0, %v943
          %v945 = vrot.slane %v940, %v944
          %947 = vmatprep.subr.mxu0 0.0
          %948 = vmatpush1.msra.mxu0 %v923
          %949 = vmatprep.subr.mxu0 0.0
          %950 = vmatpush1.msra.mxu0 %v922
          %951 = vmatprep.subr.mxu0 0.0
          %952 = vmatpush1.msra.mxu0 %v921
          %953 = vmatprep.subr.mxu0 0.0
          %954 = vmatpush1.msra.mxu0 %v920
          %955 = vmatprep.subr.mxu0 0.0
          %956 = vmatpush1.msra.mxu0 %v919
          %957 = vmatprep.subr.mxu0 0.0
          %958 = vmatpush1.msra.mxu0 %v918
          %959 = vmatprep.subr.mxu0 0.0
          %960 = vmatpush1.msra.mxu0 %v917
          %961 = vmatprep.subr.mxu0 0.0
          %962 = vmatpush1.msra.mxu0 %v916
          %963 = vmatprep.subr.mxu0 0.0
          %964 = vmatpush1.msra.mxu0 %v915
          %965 = vmatprep.subr.mxu0 0.0
          %966 = vmatpush1.msra.mxu0 %v914
          %967 = vmatprep.subr.mxu0 0.0
          %968 = vmatpush1.msra.mxu0 %v913
          %969 = vmatprep.subr.mxu0 0.0
          %970 = vmatpush1.msra.mxu0 %v912
          %971 = vmatprep.subr.mxu0 0.0
          %972 = vmatpush1.msra.mxu0 %v911
          %973 = vmatprep.subr.mxu0 0.0
          %974 = vmatpush1.msra.mxu0 %v910
          %975 = vmatprep.subr.mxu0 0.0
          %976 = vmatpush1.msra.mxu0 %v909
          %977 = vmatprep.subr.mxu0 0.0
          %978 = vmatpush1.msra.mxu0 %v908
          %979 = vmatprep.subr.mxu0 0.0
          %980 = vmatpush2.msra.mxu0 %v939
          %981 = vmatprep.subr.mxu0 0.0
          %982 = vmatpush2.msra.mxu0 %v938
          %983 = vmatprep.subr.mxu0 0.0
          %984 = vmatpush2.msra.mxu0 %v937
          %985 = vmatprep.subr.mxu0 0.0
          %986 = vmatpush2.msra.mxu0 %v936
          %987 = vmatprep.subr.mxu0 0.0
          %988 = vmatpush2.msra.mxu0 %v935
          %989 = vmatprep.subr.mxu0 0.0
          %990 = vmatpush2.msra.mxu0 %v934
          %991 = vmatprep.subr.mxu0 0.0
          %992 = vmatpush2.msra.mxu0 %v933
          %993 = vmatprep.subr.mxu0 0.0
          %994 = vmatpush2.msra.mxu0 %v932
          %995 = vmatprep.subr.mxu0 0.0
          %996 = vmatpush2.msra.mxu0 %v931
          %997 = vmatprep.subr.mxu0 0.0
          %998 = vmatpush2.msra.mxu0 %v930
          %999 = vmatprep.subr.mxu0 0.0
          %1000 = vmatpush2.msra.mxu0 %v929
          %1001 = vmatprep.subr.mxu0 0.0
          %1002 = vmatpush2.msra.mxu0 %v928
          %1003 = vmatprep.subr.mxu0 0.0
          %1004 = vmatpush2.msra.mxu0 %v927
          %1005 = vmatprep.subr.mxu0 0.0
          %1006 = vmatpush2.msra.mxu0 %v926
          %1007 = vmatprep.subr.mxu0 0.0
          %1008 = vmatpush2.msra.mxu0 %v925
          %1009 = vmatprep.subr.mxu0 0.0
          %1010 = vmatpush2.msra.mxu0 %v924
          %1011 = vmatprep.mubr.f32.mxu0 %v907
          %1012 = vmatmul.mubr.f32.gmra.mxu0 %v906
          %v1013 = vpop.f32.mrf.mxu0
          %v1014 = vadd.f32 %v945, %v1013
          %v1015 = vpop.f32.mrf.mxu0
          %1016 = vdwg.mxu0
          %v1017 = vtanh.pop %v1014
          %v1018 = vld [vmem:[%s9] sm:$0xff]
          %v1019 = vld [vmem:[%s9 + $0x8] sm:$0xff]
          %v1020 = vld [vmem:[%s9 + $0x10] sm:$0xff]
          %v1021 = vld [vmem:[%s9 + $0x18] sm:$0xff]
          %v1022 = vld [vmem:[%s9 + $0x20] sm:$0xff]
          %v1023 = vld [vmem:[%s9 + $0x28] sm:$0xff]
          %v1024 = vld [vmem:[%s9 + $0x30] sm:$0xff]
          %v1025 = vld [vmem:[%s9 + $0x38] sm:$0xff]
          %v1026 = vld [vmem:[%s9 + $0x40] sm:$0xff]
          %v1027 = vld [vmem:[%s9 + $0x48] sm:$0xff]
          %v1028 = vld [vmem:[%s9 + $0x50] sm:$0xff]
          %v1029 = vld [vmem:[%s9 + $0x58] sm:$0xff]
          %v1030 = vld [vmem:[%s9 + $0x60] sm:$0xff]
          %v1031 = vld [vmem:[%s9 + $0x68] sm:$0xff]
          %v1032 = vld [vmem:[%s9 + $0x70] sm:$0xff]
          %v1033 = vld [vmem:[%s9 + $0x78] sm:$0xff]
          %s1034 = sld [smem:[#allocation3]]
          %v1035 = vstv %s1034
          %1036 = vmatprep.subr.mxu0 0.0
          %1037 = vmatpush1.msra.mxu0 %v1033
          %1038 = vmatprep.subr.mxu0 0.0
          %1039 = vmatpush1.msra.mxu0 %v1032
          %1040 = vmatprep.subr.mxu0 0.0
          %1041 = vmatpush1.msra.mxu0 %v1031
          %1042 = vmatprep.subr.mxu0 0.0
          %1043 = vmatpush1.msra.mxu0 %v1030
          %1044 = vmatprep.subr.mxu0 0.0
          %1045 = vmatpush1.msra.mxu0 %v1029
          %1046 = vmatprep.subr.mxu0 0.0
          %1047 = vmatpush1.msra.mxu0 %v1028
          %1048 = vmatprep.subr.mxu0 0.0
          %1049 = vmatpush1.msra.mxu0 %v1027
          %1050 = vmatprep.subr.mxu0 0.0
          %1051 = vmatpush1.msra.mxu0 %v1026
          %1052 = vmatprep.subr.mxu0 0.0
          %1053 = vmatpush1.msra.mxu0 %v1025
          %1054 = vmatprep.subr.mxu0 0.0
          %1055 = vmatpush1.msra.mxu0 %v1024
          %1056 = vmatprep.subr.mxu0 0.0
          %1057 = vmatpush1.msra.mxu0 %v1023
          %1058 = vmatprep.subr.mxu0 0.0
          %1059 = vmatpush1.msra.mxu0 %v1022
          %1060 = vmatprep.subr.mxu0 0.0
          %1061 = vmatpush1.msra.mxu0 %v1021
          %1062 = vmatprep.subr.mxu0 0.0
          %1063 = vmatpush1.msra.mxu0 %v1020
          %1064 = vmatprep.subr.mxu0 0.0
          %1065 = vmatpush1.msra.mxu0 %v1019
          %1066 = vmatprep.subr.mxu0 0.0
          %1067 = vmatpush1.msra.mxu0 %v1018
          %1068 = vmatprep.subr.mxu0 0.0
          %1069 = vmatpush2.msra.mxu0 0.0
          %1070 = vmatprep.subr.mxu0 0.0
          %1071 = vmatpush2.msra.mxu0 0.0
          %1072 = vmatprep.subr.mxu0 0.0
          %1073 = vmatpush2.msra.mxu0 0.0
          %1074 = vmatprep.subr.mxu0 0.0
          %1075 = vmatpush2.msra.mxu0 0.0
          %1076 = vmatprep.subr.mxu0 0.0
          %1077 = vmatpush2.msra.mxu0 0.0
          %1078 = vmatprep.subr.mxu0 0.0
          %1079 = vmatpush2.msra.mxu0 0.0
          %1080 = vmatprep.subr.mxu0 0.0
          %1081 = vmatpush2.msra.mxu0 0.0
          %1082 = vmatprep.subr.mxu0 0.0
          %1083 = vmatpush2.msra.mxu0 0.0
          %1084 = vmatprep.subr.mxu0 0.0
          %1085 = vmatpush2.msra.mxu0 0.0
          %1086 = vmatprep.subr.mxu0 0.0
          %1087 = vmatpush2.msra.mxu0 0.0
          %1088 = vmatprep.subr.mxu0 0.0
          %1089 = vmatpush2.msra.mxu0 0.0
          %1090 = vmatprep.subr.mxu0 0.0
          %1091 = vmatpush2.msra.mxu0 0.0
          %1092 = vmatprep.subr.mxu0 0.0
          %1093 = vmatpush2.msra.mxu0 0.0
          %1094 = vmatprep.subr.mxu0 0.0
          %1095 = vmatpush2.msra.mxu0 0.0
          %1096 = vmatprep.subr.mxu0 0.0
          %1097 = vmatpush2.msra.mxu0 0.0
          %1098 = vmatprep.subr.mxu0 0.0
          %1099 = vmatpush2.msra.mxu0 0.0
          %1100 = vmatprep.mubr.f32.mxu0 0.0
          %1101 = vmatmul.mubr.f32.gmra.mxu0 %v1017
          %v1102 = vpop.f32.mrf.mxu0
          %v1103 = vadd.f32 %v1035, %v1102
          %v1104 = vpop.f32.mrf.mxu0
          %1105 = vdwg.mxu0
          %1106 = vst [vmem:[%s421] sm:$0xff] %v1103
        $region72: #{deeponet_forward.3} parent=63 // pred_fallthru
          _
        %s1107 = sand.u32 %s289, 1
        %s1108 = scalar_lea.sflag [#allocation5], %s1107
        %s1109 = sand.u32 %s289, 1
        %s1110 = smul.addr %s1109, 8
        %s1111 = scalar_lea.vmem [#allocation4], %s1110
        // Predicated region
        $region73: #{deeponet_forward.3} parent=63 // pred_check
          %p1112 = pneg %p299
        $region74: #{deeponet_forward.3} parent=63 // pred_check_branch
          %1114 = sbr.rel (%p1112) target = $region76
        $region75: #{deeponet_forward.3} parent=63 // pred_region
          %s1116 = ssub.s32 128, 128
          %1117 = vsyncadd %s1108, %s1116
          %s1118 = smul.addr %s30, 128
          %s1119 = scalar_lea.hbm %s11, %s1118
          %s1121 = sshll.u32 %s1111, 4
          %s1122 = int_to_ptr.vmem [resolvable:$true] %s1121
          %1124 = dma.vmem_to_hbm [thread:$0]  %s1122, 128, %s1119, %s1108
        $region76: #{deeponet_forward.3} parent=63 // pred_fallthru
          _
      $region64: #{deeponet_forward.3} parent=5 // pred_fallthru
        _
      %p1125 = scmp.le.s32.totalorder 2, %s21
      // Predicated region
      $region77: #{deeponet_forward.3} parent=5 // pred_check
        %p1126 = pneg %p1125
      $region78: #{deeponet_forward.3} parent=5 // pred_check_branch
        %1128 = sbr.rel (%p1126) target = $region80
      $region79: #{deeponet_forward.3} parent=5 // pred_region
        %s1129 = ssub.s32 %s21, 2
        // Predicated region
        $region81: #{deeponet_forward.3} parent=79 // pred_check
          %p1130 = pneg %p305
        $region82: #{deeponet_forward.3} parent=79 // pred_check_branch
          %1132 = sbr.rel (%p1130) target = $region84
        $region83: #{deeponet_forward.3} parent=79 // pred_region
          %s1133 = sand.u32 %s290, 1
          %s1134 = scalar_lea.sflag [#allocation5], %s1133
          %s1135 = sand.u32 %s290, 1
          %s1136 = smul.addr %s1135, 8
          %s1137 = scalar_lea.vmem [#allocation4], %s1136
          %1138 = dma.done %s1134, 128
        $region84: #{deeponet_forward.3} parent=79 // pred_fallthru
          _
      $region80: #{deeponet_forward.3} parent=5 // pred_fallthru
        _
    $region6: #{deeponet_forward.3} parent=1 // loop_footer
      %s25 = sadd.s32 1, %s21
    $region7: #{deeponet_forward.3} parent=1 // loop_footer_branch
      %20 = sbr.rel target = $region3
    $region8: #{deeponet_forward.3} parent=1 // loop_exit
      _
    %1139 = vsyncpa [#allocation5], 1
    %s1140 = scalar_lea.sflag [#allocation5], 1
    %1141 = vsyncpa %s1140, 1

// kernel: deeponet_forward.2
$region0: #{deeponet_forward.2}
  #allocation0 [shape = 'u32[]', space=smem, size = 0x4, offset = 0x4, fixed_abs, tag = 'smem constant byte address 0x4 - core index']
  #allocation1 [shape = 'u32[144,128]{1,0:T(1,128)}', space=vmem, size = 0x12000, scoped, tag = 'internal scratch']
  %s0 = inlined_call_operand.vmem [shape: f32[1,128], index: 0, kind: input, shape index: {}]
  %s1 = inlined_call_operand.vmem [shape: f32[256,1], index: 1, kind: input, shape index: {}]
  %s2 = inlined_call_operand.vmem [shape: f32[256,1], index: 2, kind: input, shape index: {}]
  %s3 = inlined_call_operand.vmem [shape: f32[256,256], index: 3, kind: input, shape index: {}]
  %s4 = inlined_call_operand.vmem [shape: f32[256,1], index: 4, kind: input, shape index: {}]
  %s5 = inlined_call_operand.vmem [shape: f32[256,256], index: 5, kind: input, shape index: {}]
  %s6 = inlined_call_operand.vmem [shape: f32[256,1], index: 6, kind: input, shape index: {}]
  %s7 = inlined_call_operand.vmem [shape: f32[128,256], index: 7, kind: input, shape index: {}]
  %s8 = inlined_call_operand.vmem [shape: f32[128,1], index: 8, kind: input, shape index: {}]
  %s9 = inlined_call_operand.vmem [shape: f32[128,128], index: 9, kind: output, shape index: {}]
  %s10 = sld [smem:[#allocation0]]
  $region46: #{deeponet_forward.2} parent=0
    _
  %s12 = ssub.s32 1, %s10
  %s13 = scalar_select 0, %s12, %s10
  // Predicated region
  $region2: #{deeponet_forward.2} parent=0 // pred_check
    _
  $region3: #{deeponet_forward.2} parent=0 // pred_check_branch
    %15 = sbr.rel (0) target = $region5
  $region4: #{deeponet_forward.2} parent=0 // pred_region
    _
  $region5: #{deeponet_forward.2} parent=0 // pred_fallthru
    _
  // Predicated region
  $region6: #{deeponet_forward.2} parent=0 // pred_check
    _
  $region7: #{deeponet_forward.2} parent=0 // pred_check_branch
    %17 = sbr.rel (0) target = $region9
  $region8: #{deeponet_forward.2} parent=0 // pred_region
    _
  $region9: #{deeponet_forward.2} parent=0 // pred_fallthru
    _
  // Predicated region
  $region10: #{deeponet_forward.2} parent=0 // pred_check
    _
  $region11: #{deeponet_forward.2} parent=0 // pred_check_branch
    %19 = sbr.rel (0) target = $region13
  $region12: #{deeponet_forward.2} parent=0 // pred_region
    _
  $region13: #{deeponet_forward.2} parent=0 // pred_fallthru
    _
  // Predicated region
  $region14: #{deeponet_forward.2} parent=0 // pred_check
    _
  $region15: #{deeponet_forward.2} parent=0 // pred_check_branch
    %21 = sbr.rel (0) target = $region17
  $region16: #{deeponet_forward.2} parent=0 // pred_region
    _
  $region17: #{deeponet_forward.2} parent=0 // pred_fallthru
    _
  // Predicated region
  $region18: #{deeponet_forward.2} parent=0 // pred_check
    _
  $region19: #{deeponet_forward.2} parent=0 // pred_check_branch
    %23 = sbr.rel (0) target = $region21
  $region20: #{deeponet_forward.2} parent=0 // pred_region
    _
  $region21: #{deeponet_forward.2} parent=0 // pred_fallthru
    _
  // Predicated region
  $region22: #{deeponet_forward.2} parent=0 // pred_check
    _
  $region23: #{deeponet_forward.2} parent=0 // pred_check_branch
    %25 = sbr.rel (0) target = $region25
  $region24: #{deeponet_forward.2} parent=0 // pred_region
    _
  $region25: #{deeponet_forward.2} parent=0 // pred_fallthru
    _
  // Predicated region
  $region26: #{deeponet_forward.2} parent=0 // pred_check
    _
  $region27: #{deeponet_forward.2} parent=0 // pred_check_branch
    %27 = sbr.rel (0) target = $region29
  $region28: #{deeponet_forward.2} parent=0 // pred_region
    _
  $region29: #{deeponet_forward.2} parent=0 // pred_fallthru
    _
  // Predicated region
  $region30: #{deeponet_forward.2} parent=0 // pred_check
    _
  $region31: #{deeponet_forward.2} parent=0 // pred_check_branch
    %29 = sbr.rel (0) target = $region33
  $region32: #{deeponet_forward.2} parent=0 // pred_region
    _
  $region33: #{deeponet_forward.2} parent=0 // pred_fallthru
    _
  // Predicated region
  $region34: #{deeponet_forward.2} parent=0 // pred_check
    _
  $region35: #{deeponet_forward.2} parent=0 // pred_check_branch
    %31 = sbr.rel (0) target = $region37
  $region36: #{deeponet_forward.2} parent=0 // pred_region
    _
  $region37: #{deeponet_forward.2} parent=0 // pred_fallthru
    _
  %v32 = vld [vmem:[%s1] sm:$0xff]
  %v33 = vld [vmem:[%s1 + $0x8] sm:$0xff]
  %v34 = vld [vmem:[%s1 + $0x10] sm:$0xff]
  %v35 = vld [vmem:[%s1 + $0x18] sm:$0xff]
  %v36 = vld [vmem:[%s1 + $0x20] sm:$0xff]
  %v37 = vld [vmem:[%s1 + $0x28] sm:$0xff]
  %v38 = vld [vmem:[%s1 + $0x30] sm:$0xff]
  %v39 = vld [vmem:[%s1 + $0x38] sm:$0xff]
  %v40 = vld [vmem:[%s1 + $0x40] sm:$0xff]
  %v41 = vld [vmem:[%s1 + $0x48] sm:$0xff]
  %v42 = vld [vmem:[%s1 + $0x50] sm:$0xff]
  %v43 = vld [vmem:[%s1 + $0x58] sm:$0xff]
  %v44 = vld [vmem:[%s1 + $0x60] sm:$0xff]
  %v45 = vld [vmem:[%s1 + $0x68] sm:$0xff]
  %v46 = vld [vmem:[%s1 + $0x70] sm:$0xff]
  %v47 = vld [vmem:[%s1 + $0x78] sm:$0xff]
  %v48 = vld [vmem:[%s1 + $0x80] sm:$0xff]
  %v49 = vld [vmem:[%s1 + $0x88] sm:$0xff]
  %v50 = vld [vmem:[%s1 + $0x90] sm:$0xff]
  %v51 = vld [vmem:[%s1 + $0x98] sm:$0xff]
  %v52 = vld [vmem:[%s1 + $0xa0] sm:$0xff]
  %v53 = vld [vmem:[%s1 + $0xa8] sm:$0xff]
  %v54 = vld [vmem:[%s1 + $0xb0] sm:$0xff]
  %v55 = vld [vmem:[%s1 + $0xb8] sm:$0xff]
  %v56 = vld [vmem:[%s1 + $0xc0] sm:$0xff]
  %v57 = vld [vmem:[%s1 + $0xc8] sm:$0xff]
  %v58 = vld [vmem:[%s1 + $0xd0] sm:$0xff]
  %v59 = vld [vmem:[%s1 + $0xd8] sm:$0xff]
  %v60 = vld [vmem:[%s1 + $0xe0] sm:$0xff]
  %v61 = vld [vmem:[%s1 + $0xe8] sm:$0xff]
  %v62 = vld [vmem:[%s1 + $0xf0] sm:$0xff]
  %v63 = vld [vmem:[%s1 + $0xf8] sm:$0xff]
  %v64 = vld [vmem:[%s0] sm:$0x1]
  %66 = vset.pattern.permute.xlu0 0
  %67 = vperm.xlu0 %66, %v32
  %v68 = vpop.permute.xlu0 %67
  %71 = vset.pattern.permute.xlu0 0
  %72 = vperm.xlu0 %71, %v33
  %v73 = vpop.permute.xlu0 %72
  %76 = vset.pattern.permute.xlu0 0
  %77 = vperm.xlu0 %76, %v34
  %v78 = vpop.permute.xlu0 %77
  %81 = vset.pattern.permute.xlu0 0
  %82 = vperm.xlu0 %81, %v35
  %v83 = vpop.permute.xlu0 %82
  %86 = vset.pattern.permute.xlu0 0
  %87 = vperm.xlu0 %86, %v36
  %v88 = vpop.permute.xlu0 %87
  %91 = vset.pattern.permute.xlu0 0
  %92 = vperm.xlu0 %91, %v37
  %v93 = vpop.permute.xlu0 %92
  %96 = vset.pattern.permute.xlu0 0
  %97 = vperm.xlu0 %96, %v38
  %v98 = vpop.permute.xlu0 %97
  %101 = vset.pattern.permute.xlu0 0
  %102 = vperm.xlu0 %101, %v39
  %v103 = vpop.permute.xlu0 %102
  %106 = vset.pattern.permute.xlu0 0
  %107 = vperm.xlu0 %106, %v40
  %v108 = vpop.permute.xlu0 %107
  %111 = vset.pattern.permute.xlu0 0
  %112 = vperm.xlu0 %111, %v41
  %v113 = vpop.permute.xlu0 %112
  %116 = vset.pattern.permute.xlu0 0
  %117 = vperm.xlu0 %116, %v42
  %v118 = vpop.permute.xlu0 %117
  %121 = vset.pattern.permute.xlu0 0
  %122 = vperm.xlu0 %121, %v43
  %v123 = vpop.permute.xlu0 %122
  %126 = vset.pattern.permute.xlu0 0
  %127 = vperm.xlu0 %126, %v44
  %v128 = vpop.permute.xlu0 %127
  %131 = vset.pattern.permute.xlu0 0
  %132 = vperm.xlu0 %131, %v45
  %v133 = vpop.permute.xlu0 %132
  %136 = vset.pattern.permute.xlu0 0
  %137 = vperm.xlu0 %136, %v46
  %v138 = vpop.permute.xlu0 %137
  %141 = vset.pattern.permute.xlu0 0
  %142 = vperm.xlu0 %141, %v47
  %v143 = vpop.permute.xlu0 %142
  %146 = vset.pattern.permute.xlu0 0
  %147 = vperm.xlu0 %146, %v48
  %v148 = vpop.permute.xlu0 %147
  %151 = vset.pattern.permute.xlu0 0
  %152 = vperm.xlu0 %151, %v49
  %v153 = vpop.permute.xlu0 %152
  %156 = vset.pattern.permute.xlu0 0
  %157 = vperm.xlu0 %156, %v50
  %v158 = vpop.permute.xlu0 %157
  %161 = vset.pattern.permute.xlu0 0
  %162 = vperm.xlu0 %161, %v51
  %v163 = vpop.permute.xlu0 %162
  %166 = vset.pattern.permute.xlu0 0
  %167 = vperm.xlu0 %166, %v52
  %v168 = vpop.permute.xlu0 %167
  %171 = vset.pattern.permute.xlu0 0
  %172 = vperm.xlu0 %171, %v53
  %v173 = vpop.permute.xlu0 %172
  %176 = vset.pattern.permute.xlu0 0
  %177 = vperm.xlu0 %176, %v54
  %v178 = vpop.permute.xlu0 %177
  %181 = vset.pattern.permute.xlu0 0
  %182 = vperm.xlu0 %181, %v55
  %v183 = vpop.permute.xlu0 %182
  %186 = vset.pattern.permute.xlu0 0
  %187 = vperm.xlu0 %186, %v56
  %v188 = vpop.permute.xlu0 %187
  %191 = vset.pattern.permute.xlu0 0
  %192 = vperm.xlu0 %191, %v57
  %v193 = vpop.permute.xlu0 %192
  %196 = vset.pattern.permute.xlu0 0
  %197 = vperm.xlu0 %196, %v58
  %v198 = vpop.permute.xlu0 %197
  %201 = vset.pattern.permute.xlu0 0
  %202 = vperm.xlu0 %201, %v59
  %v203 = vpop.permute.xlu0 %202
  %206 = vset.pattern.permute.xlu0 0
  %207 = vperm.xlu0 %206, %v60
  %v208 = vpop.permute.xlu0 %207
  %211 = vset.pattern.permute.xlu0 0
  %212 = vperm.xlu0 %211, %v61
  %v213 = vpop.permute.xlu0 %212
  %216 = vset.pattern.permute.xlu0 0
  %217 = vperm.xlu0 %216, %v62
  %v218 = vpop.permute.xlu0 %217
  %221 = vset.pattern.permute.xlu0 0
  %222 = vperm.xlu0 %221, %v63
  %v223 = vpop.permute.xlu0 %222
  %v226 = vlaneseq
  %v227 = vshrl.u32 %v226, 7
  %v228 = vsub.s32 0, %v227
  %v229 = vrot.slane %v64, %v228
  %v231 = vmul.f32 %v68, %v229
  %v232 = vmul.f32 %v73, %v229
  %v233 = vmul.f32 %v78, %v229
  %v234 = vmul.f32 %v83, %v229
  %v235 = vmul.f32 %v88, %v229
  %v236 = vmul.f32 %v93, %v229
  %v237 = vmul.f32 %v98, %v229
  %v238 = vmul.f32 %v103, %v229
  %v239 = vmul.f32 %v108, %v229
  %v240 = vmul.f32 %v113, %v229
  %v241 = vmul.f32 %v118, %v229
  %v242 = vmul.f32 %v123, %v229
  %v243 = vmul.f32 %v128, %v229
  %v244 = vmul.f32 %v133, %v229
  %v245 = vmul.f32 %v138, %v229
  %v246 = vmul.f32 %v143, %v229
  %v247 = vmul.f32 %v148, %v229
  %v248 = vmul.f32 %v153, %v229
  %v249 = vmul.f32 %v158, %v229
  %v250 = vmul.f32 %v163, %v229
  %v251 = vmul.f32 %v168, %v229
  %v252 = vmul.f32 %v173, %v229
  %v253 = vmul.f32 %v178, %v229
  %v254 = vmul.f32 %v183, %v229
  %v255 = vmul.f32 %v188, %v229
  %v256 = vmul.f32 %v193, %v229
  %v257 = vmul.f32 %v198, %v229
  %v258 = vmul.f32 %v203, %v229
  %v259 = vmul.f32 %v208, %v229
  %v260 = vmul.f32 %v213, %v229
  %v261 = vmul.f32 %v218, %v229
  %v262 = vmul.f32 %v223, %v229
  %v263 = vld [vmem:[%s2] sm:$0xff]
  %v264 = vld [vmem:[%s2 + $0x8] sm:$0xff]
  %v265 = vld [vmem:[%s2 + $0x10] sm:$0xff]
  %v266 = vld [vmem:[%s2 + $0x18] sm:$0xff]
  %v267 = vld [vmem:[%s2 + $0x20] sm:$0xff]
  %v268 = vld [vmem:[%s2 + $0x28] sm:$0xff]
  %v269 = vld [vmem:[%s2 + $0x30] sm:$0xff]
  %v270 = vld [vmem:[%s2 + $0x38] sm:$0xff]
  %v271 = vld [vmem:[%s2 + $0x40] sm:$0xff]
  %v272 = vld [vmem:[%s2 + $0x48] sm:$0xff]
  %v273 = vld [vmem:[%s2 + $0x50] sm:$0xff]
  %v274 = vld [vmem:[%s2 + $0x58] sm:$0xff]
  %v275 = vld [vmem:[%s2 + $0x60] sm:$0xff]
  %v276 = vld [vmem:[%s2 + $0x68] sm:$0xff]
  %v277 = vld [vmem:[%s2 + $0x70] sm:$0xff]
  %v278 = vld [vmem:[%s2 + $0x78] sm:$0xff]
  %v279 = vld [vmem:[%s2 + $0x80] sm:$0xff]
  %v280 = vld [vmem:[%s2 + $0x88] sm:$0xff]
  %v281 = vld [vmem:[%s2 + $0x90] sm:$0xff]
  %v282 = vld [vmem:[%s2 + $0x98] sm:$0xff]
  %v283 = vld [vmem:[%s2 + $0xa0] sm:$0xff]
  %v284 = vld [vmem:[%s2 + $0xa8] sm:$0xff]
  %v285 = vld [vmem:[%s2 + $0xb0] sm:$0xff]
  %v286 = vld [vmem:[%s2 + $0xb8] sm:$0xff]
  %v287 = vld [vmem:[%s2 + $0xc0] sm:$0xff]
  %v288 = vld [vmem:[%s2 + $0xc8] sm:$0xff]
  %v289 = vld [vmem:[%s2 + $0xd0] sm:$0xff]
  %v290 = vld [vmem:[%s2 + $0xd8] sm:$0xff]
  %v291 = vld [vmem:[%s2 + $0xe0] sm:$0xff]
  %v292 = vld [vmem:[%s2 + $0xe8] sm:$0xff]
  %v293 = vld [vmem:[%s2 + $0xf0] sm:$0xff]
  %v294 = vld [vmem:[%s2 + $0xf8] sm:$0xff]
  %296 = vset.pattern.permute.xlu0 0
  %297 = vperm.xlu0 %296, %v263
  %v298 = vpop.permute.xlu0 %297
  %301 = vset.pattern.permute.xlu0 0
  %302 = vperm.xlu0 %301, %v264
  %v303 = vpop.permute.xlu0 %302
  %306 = vset.pattern.permute.xlu0 0
  %307 = vperm.xlu0 %306, %v265
  %v308 = vpop.permute.xlu0 %307
  %311 = vset.pattern.permute.xlu0 0
  %312 = vperm.xlu0 %311, %v266
  %v313 = vpop.permute.xlu0 %312
  %316 = vset.pattern.permute.xlu0 0
  %317 = vperm.xlu0 %316, %v267
  %v318 = vpop.permute.xlu0 %317
  %321 = vset.pattern.permute.xlu0 0
  %322 = vperm.xlu0 %321, %v268
  %v323 = vpop.permute.xlu0 %322
  %326 = vset.pattern.permute.xlu0 0
  %327 = vperm.xlu0 %326, %v269
  %v328 = vpop.permute.xlu0 %327
  %331 = vset.pattern.permute.xlu0 0
  %332 = vperm.xlu0 %331, %v270
  %v333 = vpop.permute.xlu0 %332
  %336 = vset.pattern.permute.xlu0 0
  %337 = vperm.xlu0 %336, %v271
  %v338 = vpop.permute.xlu0 %337
  %341 = vset.pattern.permute.xlu0 0
  %342 = vperm.xlu0 %341, %v272
  %v343 = vpop.permute.xlu0 %342
  %346 = vset.pattern.permute.xlu0 0
  %347 = vperm.xlu0 %346, %v273
  %v348 = vpop.permute.xlu0 %347
  %351 = vset.pattern.permute.xlu0 0
  %352 = vperm.xlu0 %351, %v274
  %v353 = vpop.permute.xlu0 %352
  %356 = vset.pattern.permute.xlu0 0
  %357 = vperm.xlu0 %356, %v275
  %v358 = vpop.permute.xlu0 %357
  %361 = vset.pattern.permute.xlu0 0
  %362 = vperm.xlu0 %361, %v276
  %v363 = vpop.permute.xlu0 %362
  %366 = vset.pattern.permute.xlu0 0
  %367 = vperm.xlu0 %366, %v277
  %v368 = vpop.permute.xlu0 %367
  %371 = vset.pattern.permute.xlu0 0
  %372 = vperm.xlu0 %371, %v278
  %v373 = vpop.permute.xlu0 %372
  %376 = vset.pattern.permute.xlu0 0
  %377 = vperm.xlu0 %376, %v279
  %v378 = vpop.permute.xlu0 %377
  %381 = vset.pattern.permute.xlu0 0
  %382 = vperm.xlu0 %381, %v280
  %v383 = vpop.permute.xlu0 %382
  %386 = vset.pattern.permute.xlu0 0
  %387 = vperm.xlu0 %386, %v281
  %v388 = vpop.permute.xlu0 %387
  %391 = vset.pattern.permute.xlu0 0
  %392 = vperm.xlu0 %391, %v282
  %v393 = vpop.permute.xlu0 %392
  %396 = vset.pattern.permute.xlu0 0
  %397 = vperm.xlu0 %396, %v283
  %v398 = vpop.permute.xlu0 %397
  %401 = vset.pattern.permute.xlu0 0
  %402 = vperm.xlu0 %401, %v284
  %v403 = vpop.permute.xlu0 %402
  %406 = vset.pattern.permute.xlu0 0
  %407 = vperm.xlu0 %406, %v285
  %v408 = vpop.permute.xlu0 %407
  %411 = vset.pattern.permute.xlu0 0
  %412 = vperm.xlu0 %411, %v286
  %v413 = vpop.permute.xlu0 %412
  %416 = vset.pattern.permute.xlu0 0
  %417 = vperm.xlu0 %416, %v287
  %v418 = vpop.permute.xlu0 %417
  %421 = vset.pattern.permute.xlu0 0
  %422 = vperm.xlu0 %421, %v288
  %v423 = vpop.permute.xlu0 %422
  %426 = vset.pattern.permute.xlu0 0
  %427 = vperm.xlu0 %426, %v289
  %v428 = vpop.permute.xlu0 %427
  %431 = vset.pattern.permute.xlu0 0
  %432 = vperm.xlu0 %431, %v290
  %v433 = vpop.permute.xlu0 %432
  %436 = vset.pattern.permute.xlu0 0
  %437 = vperm.xlu0 %436, %v291
  %v438 = vpop.permute.xlu0 %437
  %441 = vset.pattern.permute.xlu0 0
  %442 = vperm.xlu0 %441, %v292
  %v443 = vpop.permute.xlu0 %442
  %446 = vset.pattern.permute.xlu0 0
  %447 = vperm.xlu0 %446, %v293
  %v448 = vpop.permute.xlu0 %447
  %451 = vset.pattern.permute.xlu0 0
  %452 = vperm.xlu0 %451, %v294
  %v453 = vpop.permute.xlu0 %452
  %v455 = vadd.f32 %v231, %v298
  %v456 = vadd.f32 %v232, %v303
  %v457 = vadd.f32 %v233, %v308
  %v458 = vadd.f32 %v234, %v313
  %v459 = vadd.f32 %v235, %v318
  %v460 = vadd.f32 %v236, %v323
  %v461 = vadd.f32 %v237, %v328
  %v462 = vadd.f32 %v238, %v333
  %v463 = vadd.f32 %v239, %v338
  %v464 = vadd.f32 %v240, %v343
  %v465 = vadd.f32 %v241, %v348
  %v466 = vadd.f32 %v242, %v353
  %v467 = vadd.f32 %v243, %v358
  %v468 = vadd.f32 %v244, %v363
  %v469 = vadd.f32 %v245, %v368
  %v470 = vadd.f32 %v246, %v373
  %v471 = vadd.f32 %v247, %v378
  %v472 = vadd.f32 %v248, %v383
  %v473 = vadd.f32 %v249, %v388
  %v474 = vadd.f32 %v250, %v393
  %v475 = vadd.f32 %v251, %v398
  %v476 = vadd.f32 %v252, %v403
  %v477 = vadd.f32 %v253, %v408
  %v478 = vadd.f32 %v254, %v413
  %v479 = vadd.f32 %v255, %v418
  %v480 = vadd.f32 %v256, %v423
  %v481 = vadd.f32 %v257, %v428
  %v482 = vadd.f32 %v258, %v433
  %v483 = vadd.f32 %v259, %v438
  %v484 = vadd.f32 %v260, %v443
  %v485 = vadd.f32 %v261, %v448
  %v486 = vadd.f32 %v262, %v453
  %v487 = vld [vmem:[%s3] sm:$0xff]
  %v488 = vld [vmem:[%s3 + $0x8] sm:$0xff]
  %v489 = vld [vmem:[%s3 + $0x10] sm:$0xff]
  %v490 = vld [vmem:[%s3 + $0x18] sm:$0xff]
  %v491 = vld [vmem:[%s3 + $0x20] sm:$0xff]
  %v492 = vld [vmem:[%s3 + $0x28] sm:$0xff]
  %v493 = vld [vmem:[%s3 + $0x30] sm:$0xff]
  %v494 = vld [vmem:[%s3 + $0x38] sm:$0xff]
  %v495 = vld [vmem:[%s3 + $0x40] sm:$0xff]
  %v496 = vld [vmem:[%s3 + $0x48] sm:$0xff]
  %v497 = vld [vmem:[%s3 + $0x50] sm:$0xff]
  %v498 = vld [vmem:[%s3 + $0x58] sm:$0xff]
  %v499 = vld [vmem:[%s3 + $0x60] sm:$0xff]
  %v500 = vld [vmem:[%s3 + $0x68] sm:$0xff]
  %v501 = vld [vmem:[%s3 + $0x70] sm:$0xff]
  %v502 = vld [vmem:[%s3 + $0x78] sm:$0xff]
  %v503 = vld [vmem:[%s3 + $0x80] sm:$0xff]
  %v504 = vld [vmem:[%s3 + $0x88] sm:$0xff]
  %v505 = vld [vmem:[%s3 + $0x90] sm:$0xff]
  %v506 = vld [vmem:[%s3 + $0x98] sm:$0xff]
  %v507 = vld [vmem:[%s3 + $0xa0] sm:$0xff]
  %v508 = vld [vmem:[%s3 + $0xa8] sm:$0xff]
  %v509 = vld [vmem:[%s3 + $0xb0] sm:$0xff]
  %v510 = vld [vmem:[%s3 + $0xb8] sm:$0xff]
  %v511 = vld [vmem:[%s3 + $0xc0] sm:$0xff]
  %v512 = vld [vmem:[%s3 + $0xc8] sm:$0xff]
  %v513 = vld [vmem:[%s3 + $0xd0] sm:$0xff]
  %v514 = vld [vmem:[%s3 + $0xd8] sm:$0xff]
  %v515 = vld [vmem:[%s3 + $0xe0] sm:$0xff]
  %v516 = vld [vmem:[%s3 + $0xe8] sm:$0xff]
  %v517 = vld [vmem:[%s3 + $0xf0] sm:$0xff]
  %v518 = vld [vmem:[%s3 + $0xf8] sm:$0xff]
  %v519 = vld [vmem:[%s3 + $0x100] sm:$0xff]
  %v520 = vld [vmem:[%s3 + $0x108] sm:$0xff]
  %v521 = vld [vmem:[%s3 + $0x110] sm:$0xff]
  %v522 = vld [vmem:[%s3 + $0x118] sm:$0xff]
  %v523 = vld [vmem:[%s3 + $0x120] sm:$0xff]
  %v524 = vld [vmem:[%s3 + $0x128] sm:$0xff]
  %v525 = vld [vmem:[%s3 + $0x130] sm:$0xff]
  %v526 = vld [vmem:[%s3 + $0x138] sm:$0xff]
  %v527 = vld [vmem:[%s3 + $0x140] sm:$0xff]
  %v528 = vld [vmem:[%s3 + $0x148] sm:$0xff]
  %v529 = vld [vmem:[%s3 + $0x150] sm:$0xff]
  %v530 = vld [vmem:[%s3 + $0x158] sm:$0xff]
  %v531 = vld [vmem:[%s3 + $0x160] sm:$0xff]
  %v532 = vld [vmem:[%s3 + $0x168] sm:$0xff]
  %v533 = vld [vmem:[%s3 + $0x170] sm:$0xff]
  %v534 = vld [vmem:[%s3 + $0x178] sm:$0xff]
  %v535 = vld [vmem:[%s3 + $0x180] sm:$0xff]
  %v536 = vld [vmem:[%s3 + $0x188] sm:$0xff]
  %v537 = vld [vmem:[%s3 + $0x190] sm:$0xff]
  %v538 = vld [vmem:[%s3 + $0x198] sm:$0xff]
  %v539 = vld [vmem:[%s3 + $0x1a0] sm:$0xff]
  %v540 = vld [vmem:[%s3 + $0x1a8] sm:$0xff]
  %v541 = vld [vmem:[%s3 + $0x1b0] sm:$0xff]
  %v542 = vld [vmem:[%s3 + $0x1b8] sm:$0xff]
  %v543 = vld [vmem:[%s3 + $0x1c0] sm:$0xff]
  %v544 = vld [vmem:[%s3 + $0x1c8] sm:$0xff]
  %v545 = vld [vmem:[%s3 + $0x1d0] sm:$0xff]
  %v546 = vld [vmem:[%s3 + $0x1d8] sm:$0xff]
  %v547 = vld [vmem:[%s3 + $0x1e0] sm:$0xff]
  %v548 = vld [vmem:[%s3 + $0x1e8] sm:$0xff]
  %v549 = vld [vmem:[%s3 + $0x1f0] sm:$0xff]
  %v550 = vld [vmem:[%s3 + $0x1f8] sm:$0xff]
  %v551 = vtanh.pop %v455
  %v552 = vtanh.pop %v456
  %v553 = vtanh.pop %v457
  %v554 = vtanh.pop %v458
  %v555 = vtanh.pop %v459
  %v556 = vtanh.pop %v460
  %v557 = vtanh.pop %v461
  %v558 = vtanh.pop %v462
  %v559 = vtanh.pop %v463
  %v560 = vtanh.pop %v464
  %v561 = vtanh.pop %v465
  %v562 = vtanh.pop %v466
  %v563 = vtanh.pop %v467
  %v564 = vtanh.pop %v468
  %v565 = vtanh.pop %v469
  %v566 = vtanh.pop %v470
  %v567 = vtanh.pop %v471
  %v568 = vtanh.pop %v472
  %v569 = vtanh.pop %v473
  %v570 = vtanh.pop %v474
  %v571 = vtanh.pop %v475
  %v572 = vtanh.pop %v476
  %v573 = vtanh.pop %v477
  %v574 = vtanh.pop %v478
  %v575 = vtanh.pop %v479
  %v576 = vtanh.pop %v480
  %v577 = vtanh.pop %v481
  %v578 = vtanh.pop %v482
  %v579 = vtanh.pop %v483
  %v580 = vtanh.pop %v484
  %v581 = vtanh.pop %v485
  %v582 = vtanh.pop %v486
  %v583 = vld [vmem:[%s4] sm:$0xff]
  %v584 = vld [vmem:[%s4 + $0x8] sm:$0xff]
  %v585 = vld [vmem:[%s4 + $0x10] sm:$0xff]
  %v586 = vld [vmem:[%s4 + $0x18] sm:$0xff]
  %v587 = vld [vmem:[%s4 + $0x20] sm:$0xff]
  %v588 = vld [vmem:[%s4 + $0x28] sm:$0xff]
  %v589 = vld [vmem:[%s4 + $0x30] sm:$0xff]
  %v590 = vld [vmem:[%s4 + $0x38] sm:$0xff]
  %v591 = vld [vmem:[%s4 + $0x40] sm:$0xff]
  %v592 = vld [vmem:[%s4 + $0x48] sm:$0xff]
  %v593 = vld [vmem:[%s4 + $0x50] sm:$0xff]
  %v594 = vld [vmem:[%s4 + $0x58] sm:$0xff]
  %v595 = vld [vmem:[%s4 + $0x60] sm:$0xff]
  %v596 = vld [vmem:[%s4 + $0x68] sm:$0xff]
  %v597 = vld [vmem:[%s4 + $0x70] sm:$0xff]
  %v598 = vld [vmem:[%s4 + $0x78] sm:$0xff]
  %v599 = vld [vmem:[%s4 + $0x80] sm:$0xff]
  %v600 = vld [vmem:[%s4 + $0x88] sm:$0xff]
  %v601 = vld [vmem:[%s4 + $0x90] sm:$0xff]
  %v602 = vld [vmem:[%s4 + $0x98] sm:$0xff]
  %v603 = vld [vmem:[%s4 + $0xa0] sm:$0xff]
  %v604 = vld [vmem:[%s4 + $0xa8] sm:$0xff]
  %v605 = vld [vmem:[%s4 + $0xb0] sm:$0xff]
  %v606 = vld [vmem:[%s4 + $0xb8] sm:$0xff]
  %v607 = vld [vmem:[%s4 + $0xc0] sm:$0xff]
  %v608 = vld [vmem:[%s4 + $0xc8] sm:$0xff]
  %v609 = vld [vmem:[%s4 + $0xd0] sm:$0xff]
  %v610 = vld [vmem:[%s4 + $0xd8] sm:$0xff]
  %v611 = vld [vmem:[%s4 + $0xe0] sm:$0xff]
  %v612 = vld [vmem:[%s4 + $0xe8] sm:$0xff]
  %v613 = vld [vmem:[%s4 + $0xf0] sm:$0xff]
  %v614 = vld [vmem:[%s4 + $0xf8] sm:$0xff]
  %616 = vset.pattern.permute.xlu0 0
  %617 = vperm.xlu0 %616, %v583
  %v618 = vpop.permute.xlu0 %617
  %621 = vset.pattern.permute.xlu0 0
  %622 = vperm.xlu0 %621, %v584
  %v623 = vpop.permute.xlu0 %622
  %626 = vset.pattern.permute.xlu0 0
  %627 = vperm.xlu0 %626, %v585
  %v628 = vpop.permute.xlu0 %627
  %631 = vset.pattern.permute.xlu0 0
  %632 = vperm.xlu0 %631, %v586
  %v633 = vpop.permute.xlu0 %632
  %636 = vset.pattern.permute.xlu0 0
  %637 = vperm.xlu0 %636, %v587
  %v638 = vpop.permute.xlu0 %637
  %641 = vset.pattern.permute.xlu0 0
  %642 = vperm.xlu0 %641, %v588
  %v643 = vpop.permute.xlu0 %642
  %646 = vset.pattern.permute.xlu0 0
  %647 = vperm.xlu0 %646, %v589
  %v648 = vpop.permute.xlu0 %647
  %651 = vset.pattern.permute.xlu0 0
  %652 = vperm.xlu0 %651, %v590
  %v653 = vpop.permute.xlu0 %652
  %656 = vset.pattern.permute.xlu0 0
  %657 = vperm.xlu0 %656, %v591
  %v658 = vpop.permute.xlu0 %657
  %661 = vset.pattern.permute.xlu0 0
  %662 = vperm.xlu0 %661, %v592
  %v663 = vpop.permute.xlu0 %662
  %666 = vset.pattern.permute.xlu0 0
  %667 = vperm.xlu0 %666, %v593
  %v668 = vpop.permute.xlu0 %667
  %671 = vset.pattern.permute.xlu0 0
  %672 = vperm.xlu0 %671, %v594
  %v673 = vpop.permute.xlu0 %672
  %676 = vset.pattern.permute.xlu0 0
  %677 = vperm.xlu0 %676, %v595
  %v678 = vpop.permute.xlu0 %677
  %681 = vset.pattern.permute.xlu0 0
  %682 = vperm.xlu0 %681, %v596
  %v683 = vpop.permute.xlu0 %682
  %686 = vset.pattern.permute.xlu0 0
  %687 = vperm.xlu0 %686, %v597
  %v688 = vpop.permute.xlu0 %687
  %691 = vset.pattern.permute.xlu0 0
  %692 = vperm.xlu0 %691, %v598
  %v693 = vpop.permute.xlu0 %692
  %696 = vset.pattern.permute.xlu0 0
  %697 = vperm.xlu0 %696, %v599
  %v698 = vpop.permute.xlu0 %697
  %701 = vset.pattern.permute.xlu0 0
  %702 = vperm.xlu0 %701, %v600
  %v703 = vpop.permute.xlu0 %702
  %706 = vset.pattern.permute.xlu0 0
  %707 = vperm.xlu0 %706, %v601
  %v708 = vpop.permute.xlu0 %707
  %711 = vset.pattern.permute.xlu0 0
  %712 = vperm.xlu0 %711, %v602
  %v713 = vpop.permute.xlu0 %712
  %716 = vset.pattern.permute.xlu0 0
  %717 = vperm.xlu0 %716, %v603
  %v718 = vpop.permute.xlu0 %717
  %721 = vset.pattern.permute.xlu0 0
  %722 = vperm.xlu0 %721, %v604
  %v723 = vpop.permute.xlu0 %722
  %726 = vset.pattern.permute.xlu0 0
  %727 = vperm.xlu0 %726, %v605
  %v728 = vpop.permute.xlu0 %727
  %731 = vset.pattern.permute.xlu0 0
  %732 = vperm.xlu0 %731, %v606
  %v733 = vpop.permute.xlu0 %732
  %736 = vset.pattern.permute.xlu0 0
  %737 = vperm.xlu0 %736, %v607
  %v738 = vpop.permute.xlu0 %737
  %741 = vset.pattern.permute.xlu0 0
  %742 = vperm.xlu0 %741, %v608
  %v743 = vpop.permute.xlu0 %742
  %746 = vset.pattern.permute.xlu0 0
  %747 = vperm.xlu0 %746, %v609
  %v748 = vpop.permute.xlu0 %747
  %751 = vset.pattern.permute.xlu0 0
  %752 = vperm.xlu0 %751, %v610
  %v753 = vpop.permute.xlu0 %752
  %756 = vset.pattern.permute.xlu0 0
  %757 = vperm.xlu0 %756, %v611
  %v758 = vpop.permute.xlu0 %757
  %761 = vset.pattern.permute.xlu0 0
  %762 = vperm.xlu0 %761, %v612
  %v763 = vpop.permute.xlu0 %762
  %766 = vset.pattern.permute.xlu0 0
  %767 = vperm.xlu0 %766, %v613
  %v768 = vpop.permute.xlu0 %767
  %771 = vset.pattern.permute.xlu0 0
  %772 = vperm.xlu0 %771, %v614
  %v773 = vpop.permute.xlu0 %772
  %775 = vmatprep.subr.mxu0 0.0
  %776 = vmatpush1.msra.mxu0 %v566
  %777 = vmatprep.subr.mxu0 0.0
  %778 = vmatpush1.msra.mxu0 %v565
  %779 = vmatprep.subr.mxu0 0.0
  %780 = vmatpush1.msra.mxu0 %v564
  %781 = vmatprep.subr.mxu0 0.0
  %782 = vmatpush1.msra.mxu0 %v563
  %783 = vmatprep.subr.mxu0 0.0
  %784 = vmatpush1.msra.mxu0 %v562
  %785 = vmatprep.subr.mxu0 0.0
  %786 = vmatpush1.msra.mxu0 %v561
  %787 = vmatprep.subr.mxu0 0.0
  %788 = vmatpush1.msra.mxu0 %v560
  %789 = vmatprep.subr.mxu0 0.0
  %790 = vmatpush1.msra.mxu0 %v559
  %791 = vmatprep.subr.mxu0 0.0
  %792 = vmatpush1.msra.mxu0 %v558
  %793 = vmatprep.subr.mxu0 0.0
  %794 = vmatpush1.msra.mxu0 %v557
  %795 = vmatprep.subr.mxu0 0.0
  %796 = vmatpush1.msra.mxu0 %v556
  %797 = vmatprep.subr.mxu0 0.0
  %798 = vmatpush1.msra.mxu0 %v555
  %799 = vmatprep.subr.mxu0 0.0
  %800 = vmatpush1.msra.mxu0 %v554
  %801 = vmatprep.subr.mxu0 0.0
  %802 = vmatpush1.msra.mxu0 %v553
  %803 = vmatprep.subr.mxu0 0.0
  %804 = vmatpush1.msra.mxu0 %v552
  %805 = vmatprep.subr.mxu0 0.0
  %806 = vmatpush1.msra.mxu0 %v551
  %807 = vmatprep.subr.mxu0 0.0
  %808 = vmatpush2.msra.mxu0 %v582
  %809 = vmatprep.subr.mxu0 0.0
  %810 = vmatpush2.msra.mxu0 %v581
  %811 = vmatprep.subr.mxu0 0.0
  %812 = vmatpush2.msra.mxu0 %v580
  %813 = vmatprep.subr.mxu0 0.0
  %814 = vmatpush2.msra.mxu0 %v579
  %815 = vmatprep.subr.mxu0 0.0
  %816 = vmatpush2.msra.mxu0 %v578
  %817 = vmatprep.subr.mxu0 0.0
  %818 = vmatpush2.msra.mxu0 %v577
  %819 = vmatprep.subr.mxu0 0.0
  %820 = vmatpush2.msra.mxu0 %v576
  %821 = vmatprep.subr.mxu0 0.0
  %822 = vmatpush2.msra.mxu0 %v575
  %823 = vmatprep.subr.mxu0 0.0
  %824 = vmatpush2.msra.mxu0 %v574
  %825 = vmatprep.subr.mxu0 0.0
  %826 = vmatpush2.msra.mxu0 %v573
  %827 = vmatprep.subr.mxu0 0.0
  %828 = vmatpush2.msra.mxu0 %v572
  %829 = vmatprep.subr.mxu0 0.0
  %830 = vmatpush2.msra.mxu0 %v571
  %831 = vmatprep.subr.mxu0 0.0
  %832 = vmatpush2.msra.mxu0 %v570
  %833 = vmatprep.subr.mxu0 0.0
  %834 = vmatpush2.msra.mxu0 %v569
  %835 = vmatprep.subr.mxu0 0.0
  %836 = vmatpush2.msra.mxu0 %v568
  %837 = vmatprep.subr.mxu0 0.0
  %838 = vmatpush2.msra.mxu0 %v567
  %839 = vmatprep.mubr.f32.mxu0 %v488
  %840 = vmatmul.mubr.f32.gmra.mxu0 %v487
  %v841 = vpop.f32.mrf.mxu0
  %v842 = vadd.f32 %v618, %v841
  %v843 = vpop.f32.mrf.mxu0
  %844 = vmatprep.mubr.f32.mxu0 %v490
  %845 = vmatmul.mubr.f32.gmra.mxu0 %v489
  %v846 = vpop.f32.mrf.mxu0
  %v847 = vadd.f32 %v623, %v846
  %v848 = vpop.f32.mrf.mxu0
  %849 = vmatprep.mubr.f32.mxu0 %v492
  %850 = vmatmul.mubr.f32.gmra.mxu0 %v491
  %v851 = vpop.f32.mrf.mxu0
  %v852 = vadd.f32 %v628, %v851
  %v853 = vpop.f32.mrf.mxu0
  %854 = vmatprep.mubr.f32.mxu0 %v494
  %855 = vmatmul.mubr.f32.gmra.mxu0 %v493
  %v856 = vpop.f32.mrf.mxu0
  %v857 = vadd.f32 %v633, %v856
  %v858 = vpop.f32.mrf.mxu0
  %859 = vmatprep.mubr.f32.mxu0 %v496
  %860 = vmatmul.mubr.f32.gmra.mxu0 %v495
  %v861 = vpop.f32.mrf.mxu0
  %v862 = vadd.f32 %v638, %v861
  %v863 = vpop.f32.mrf.mxu0
  %864 = vmatprep.mubr.f32.mxu0 %v498
  %865 = vmatmul.mubr.f32.gmra.mxu0 %v497
  %v866 = vpop.f32.mrf.mxu0
  %v867 = vadd.f32 %v643, %v866
  %v868 = vpop.f32.mrf.mxu0
  %869 = vmatprep.mubr.f32.mxu0 %v500
  %870 = vmatmul.mubr.f32.gmra.mxu0 %v499
  %v871 = vpop.f32.mrf.mxu0
  %v872 = vadd.f32 %v648, %v871
  %v873 = vpop.f32.mrf.mxu0
  %874 = vmatprep.mubr.f32.mxu0 %v502
  %875 = vmatmul.mubr.f32.gmra.mxu0 %v501
  %v876 = vpop.f32.mrf.mxu0
  %v877 = vadd.f32 %v653, %v876
  %v878 = vpop.f32.mrf.mxu0
  %879 = vmatprep.mubr.f32.mxu0 %v504
  %880 = vmatmul.mubr.f32.gmra.mxu0 %v503
  %v881 = vpop.f32.mrf.mxu0
  %v882 = vadd.f32 %v658, %v881
  %v883 = vpop.f32.mrf.mxu0
  %884 = vmatprep.mubr.f32.mxu0 %v506
  %885 = vmatmul.mubr.f32.gmra.mxu0 %v505
  %v886 = vpop.f32.mrf.mxu0
  %v887 = vadd.f32 %v663, %v886
  %v888 = vpop.f32.mrf.mxu0
  %889 = vmatprep.mubr.f32.mxu0 %v508
  %890 = vmatmul.mubr.f32.gmra.mxu0 %v507
  %v891 = vpop.f32.mrf.mxu0
  %v892 = vadd.f32 %v668, %v891
  %v893 = vpop.f32.mrf.mxu0
  %894 = vmatprep.mubr.f32.mxu0 %v510
  %895 = vmatmul.mubr.f32.gmra.mxu0 %v509
  %v896 = vpop.f32.mrf.mxu0
  %v897 = vadd.f32 %v673, %v896
  %v898 = vpop.f32.mrf.mxu0
  %899 = vmatprep.mubr.f32.mxu0 %v512
  %900 = vmatmul.mubr.f32.gmra.mxu0 %v511
  %v901 = vpop.f32.mrf.mxu0
  %v902 = vadd.f32 %v678, %v901
  %v903 = vpop.f32.mrf.mxu0
  %904 = vmatprep.mubr.f32.mxu0 %v514
  %905 = vmatmul.mubr.f32.gmra.mxu0 %v513
  %v906 = vpop.f32.mrf.mxu0
  %v907 = vadd.f32 %v683, %v906
  %v908 = vpop.f32.mrf.mxu0
  %909 = vmatprep.mubr.f32.mxu0 %v516
  %910 = vmatmul.mubr.f32.gmra.mxu0 %v515
  %v911 = vpop.f32.mrf.mxu0
  %v912 = vadd.f32 %v688, %v911
  %v913 = vpop.f32.mrf.mxu0
  %914 = vmatprep.mubr.f32.mxu0 %v518
  %915 = vmatmul.mubr.f32.gmra.mxu0 %v517
  %v916 = vpop.f32.mrf.mxu0
  %v917 = vadd.f32 %v693, %v916
  %v918 = vpop.f32.mrf.mxu0
  %919 = vmatprep.mubr.f32.mxu0 %v520
  %920 = vmatmul.mubr.f32.gmra.mxu0 %v519
  %v921 = vpop.f32.mrf.mxu0
  %v922 = vadd.f32 %v698, %v921
  %v923 = vpop.f32.mrf.mxu0
  %924 = vmatprep.mubr.f32.mxu0 %v522
  %925 = vmatmul.mubr.f32.gmra.mxu0 %v521
  %v926 = vpop.f32.mrf.mxu0
  %v927 = vadd.f32 %v703, %v926
  %v928 = vpop.f32.mrf.mxu0
  %929 = vmatprep.mubr.f32.mxu0 %v524
  %930 = vmatmul.mubr.f32.gmra.mxu0 %v523
  %v931 = vpop.f32.mrf.mxu0
  %v932 = vadd.f32 %v708, %v931
  %v933 = vpop.f32.mrf.mxu0
  %934 = vmatprep.mubr.f32.mxu0 %v526
  %935 = vmatmul.mubr.f32.gmra.mxu0 %v525
  %v936 = vpop.f32.mrf.mxu0
  %v937 = vadd.f32 %v713, %v936
  %v938 = vpop.f32.mrf.mxu0
  %939 = vmatprep.mubr.f32.mxu0 %v528
  %940 = vmatmul.mubr.f32.gmra.mxu0 %v527
  %v941 = vpop.f32.mrf.mxu0
  %v942 = vadd.f32 %v718, %v941
  %v943 = vpop.f32.mrf.mxu0
  %944 = vmatprep.mubr.f32.mxu0 %v530
  %945 = vmatmul.mubr.f32.gmra.mxu0 %v529
  %v946 = vpop.f32.mrf.mxu0
  %v947 = vadd.f32 %v723, %v946
  %v948 = vpop.f32.mrf.mxu0
  %949 = vmatprep.mubr.f32.mxu0 %v532
  %950 = vmatmul.mubr.f32.gmra.mxu0 %v531
  %v951 = vpop.f32.mrf.mxu0
  %v952 = vadd.f32 %v728, %v951
  %v953 = vpop.f32.mrf.mxu0
  %954 = vmatprep.mubr.f32.mxu0 %v534
  %955 = vmatmul.mubr.f32.gmra.mxu0 %v533
  %v956 = vpop.f32.mrf.mxu0
  %v957 = vadd.f32 %v733, %v956
  %v958 = vpop.f32.mrf.mxu0
  %959 = vmatprep.mubr.f32.mxu0 %v536
  %960 = vmatmul.mubr.f32.gmra.mxu0 %v535
  %v961 = vpop.f32.mrf.mxu0
  %v962 = vadd.f32 %v738, %v961
  %v963 = vpop.f32.mrf.mxu0
  %964 = vmatprep.mubr.f32.mxu0 %v538
  %965 = vmatmul.mubr.f32.gmra.mxu0 %v537
  %v966 = vpop.f32.mrf.mxu0
  %v967 = vadd.f32 %v743, %v966
  %v968 = vpop.f32.mrf.mxu0
  %969 = vmatprep.mubr.f32.mxu0 %v540
  %970 = vmatmul.mubr.f32.gmra.mxu0 %v539
  %v971 = vpop.f32.mrf.mxu0
  %v972 = vadd.f32 %v748, %v971
  %v973 = vpop.f32.mrf.mxu0
  %974 = vmatprep.mubr.f32.mxu0 %v542
  %975 = vmatmul.mubr.f32.gmra.mxu0 %v541
  %v976 = vpop.f32.mrf.mxu0
  %v977 = vadd.f32 %v753, %v976
  %v978 = vpop.f32.mrf.mxu0
  %979 = vmatprep.mubr.f32.mxu0 %v544
  %980 = vmatmul.mubr.f32.gmra.mxu0 %v543
  %v981 = vpop.f32.mrf.mxu0
  %v982 = vadd.f32 %v758, %v981
  %v983 = vpop.f32.mrf.mxu0
  %984 = vmatprep.mubr.f32.mxu0 %v546
  %985 = vmatmul.mubr.f32.gmra.mxu0 %v545
  %v986 = vpop.f32.mrf.mxu0
  %v987 = vadd.f32 %v763, %v986
  %v988 = vpop.f32.mrf.mxu0
  %989 = vmatprep.mubr.f32.mxu0 %v548
  %990 = vmatmul.mubr.f32.gmra.mxu0 %v547
  %v991 = vpop.f32.mrf.mxu0
  %v992 = vadd.f32 %v768, %v991
  %v993 = vpop.f32.mrf.mxu0
  %994 = vmatprep.mubr.f32.mxu0 %v550
  %995 = vmatmul.mubr.f32.gmra.mxu0 %v549
  %v996 = vpop.f32.mrf.mxu0
  %v997 = vadd.f32 %v773, %v996
  %v998 = vpop.f32.mrf.mxu0
  %999 = vdwg.mxu0
  %v1000 = vld [vmem:[%s5] sm:$0xff]
  %v1001 = vld [vmem:[%s5 + $0x8] sm:$0xff]
  %v1002 = vld [vmem:[%s5 + $0x10] sm:$0xff]
  %v1003 = vld [vmem:[%s5 + $0x18] sm:$0xff]
  %v1004 = vld [vmem:[%s5 + $0x20] sm:$0xff]
  %v1005 = vld [vmem:[%s5 + $0x28] sm:$0xff]
  %v1006 = vld [vmem:[%s5 + $0x30] sm:$0xff]
  %v1007 = vld [vmem:[%s5 + $0x38] sm:$0xff]
  %v1008 = vld [vmem:[%s5 + $0x40] sm:$0xff]
  %v1009 = vld [vmem:[%s5 + $0x48] sm:$0xff]
  %v1010 = vld [vmem:[%s5 + $0x50] sm:$0xff]
  %v1011 = vld [vmem:[%s5 + $0x58] sm:$0xff]
  %v1012 = vld [vmem:[%s5 + $0x60] sm:$0xff]
  %v1013 = vld [vmem:[%s5 + $0x68] sm:$0xff]
  %v1014 = vld [vmem:[%s5 + $0x70] sm:$0xff]
  %v1015 = vld [vmem:[%s5 + $0x78] sm:$0xff]
  %v1016 = vld [vmem:[%s5 + $0x80] sm:$0xff]
  %v1017 = vld [vmem:[%s5 + $0x88] sm:$0xff]
  %v1018 = vld [vmem:[%s5 + $0x90] sm:$0xff]
  %v1019 = vld [vmem:[%s5 + $0x98] sm:$0xff]
  %v1020 = vld [vmem:[%s5 + $0xa0] sm:$0xff]
  %v1021 = vld [vmem:[%s5 + $0xa8] sm:$0xff]
  %v1022 = vld [vmem:[%s5 + $0xb0] sm:$0xff]
  %v1023 = vld [vmem:[%s5 + $0xb8] sm:$0xff]
  %v1024 = vld [vmem:[%s5 + $0xc0] sm:$0xff]
  %v1025 = vld [vmem:[%s5 + $0xc8] sm:$0xff]
  %v1026 = vld [vmem:[%s5 + $0xd0] sm:$0xff]
  %v1027 = vld [vmem:[%s5 + $0xd8] sm:$0xff]
  %v1028 = vld [vmem:[%s5 + $0xe0] sm:$0xff]
  %v1029 = vld [vmem:[%s5 + $0xe8] sm:$0xff]
  %v1030 = vld [vmem:[%s5 + $0xf0] sm:$0xff]
  %v1031 = vld [vmem:[%s5 + $0xf8] sm:$0xff]
  %v1032 = vld [vmem:[%s5 + $0x100] sm:$0xff]
  %v1033 = vld [vmem:[%s5 + $0x108] sm:$0xff]
  %v1034 = vld [vmem:[%s5 + $0x110] sm:$0xff]
  %v1035 = vld [vmem:[%s5 + $0x118] sm:$0xff]
  %v1036 = vld [vmem:[%s5 + $0x120] sm:$0xff]
  %v1037 = vld [vmem:[%s5 + $0x128] sm:$0xff]
  %v1038 = vld [vmem:[%s5 + $0x130] sm:$0xff]
  %v1039 = vld [vmem:[%s5 + $0x138] sm:$0xff]
  %v1040 = vld [vmem:[%s5 + $0x140] sm:$0xff]
  %v1041 = vld [vmem:[%s5 + $0x148] sm:$0xff]
  %v1042 = vld [vmem:[%s5 + $0x150] sm:$0xff]
  %v1043 = vld [vmem:[%s5 + $0x158] sm:$0xff]
  %v1044 = vld [vmem:[%s5 + $0x160] sm:$0xff]
  %v1045 = vld [vmem:[%s5 + $0x168] sm:$0xff]
  %v1046 = vld [vmem:[%s5 + $0x170] sm:$0xff]
  %v1047 = vld [vmem:[%s5 + $0x178] sm:$0xff]
  %v1048 = vld [vmem:[%s5 + $0x180] sm:$0xff]
  %v1049 = vld [vmem:[%s5 + $0x188] sm:$0xff]
  %v1050 = vld [vmem:[%s5 + $0x190] sm:$0xff]
  %v1051 = vld [vmem:[%s5 + $0x198] sm:$0xff]
  %v1052 = vld [vmem:[%s5 + $0x1a0] sm:$0xff]
  %v1053 = vld [vmem:[%s5 + $0x1a8] sm:$0xff]
  %v1054 = vld [vmem:[%s5 + $0x1b0] sm:$0xff]
  %v1055 = vld [vmem:[%s5 + $0x1b8] sm:$0xff]
  %v1056 = vld [vmem:[%s5 + $0x1c0] sm:$0xff]
  %v1057 = vld [vmem:[%s5 + $0x1c8] sm:$0xff]
  %v1058 = vld [vmem:[%s5 + $0x1d0] sm:$0xff]
  %v1059 = vld [vmem:[%s5 + $0x1d8] sm:$0xff]
  %v1060 = vld [vmem:[%s5 + $0x1e0] sm:$0xff]
  %v1061 = vld [vmem:[%s5 + $0x1e8] sm:$0xff]
  %v1062 = vld [vmem:[%s5 + $0x1f0] sm:$0xff]
  %v1063 = vld [vmem:[%s5 + $0x1f8] sm:$0xff]
  %v1064 = vtanh.pop %v842
  %v1065 = vtanh.pop %v847
  %v1066 = vtanh.pop %v852
  %v1067 = vtanh.pop %v857
  %v1068 = vtanh.pop %v862
  %v1069 = vtanh.pop %v867
  %v1070 = vtanh.pop %v872
  %v1071 = vtanh.pop %v877
  %v1072 = vtanh.pop %v882
  %v1073 = vtanh.pop %v887
  %v1074 = vtanh.pop %v892
  %v1075 = vtanh.pop %v897
  %v1076 = vtanh.pop %v902
  %v1077 = vtanh.pop %v907
  %v1078 = vtanh.pop %v912
  %v1079 = vtanh.pop %v917
  %v1080 = vtanh.pop %v922
  %v1081 = vtanh.pop %v927
  %v1082 = vtanh.pop %v932
  %v1083 = vtanh.pop %v937
  %v1084 = vtanh.pop %v942
  %v1085 = vtanh.pop %v947
  %v1086 = vtanh.pop %v952
  %v1087 = vtanh.pop %v957
  %v1088 = vtanh.pop %v962
  %v1089 = vtanh.pop %v967
  %v1090 = vtanh.pop %v972
  %v1091 = vtanh.pop %v977
  %v1092 = vtanh.pop %v982
  %v1093 = vtanh.pop %v987
  %v1094 = vtanh.pop %v992
  %v1095 = vtanh.pop %v997
  %v1096 = vld [vmem:[%s6] sm:$0xff]
  %v1097 = vld [vmem:[%s6 + $0x8] sm:$0xff]
  %v1098 = vld [vmem:[%s6 + $0x10] sm:$0xff]
  %v1099 = vld [vmem:[%s6 + $0x18] sm:$0xff]
  %v1100 = vld [vmem:[%s6 + $0x20] sm:$0xff]
  %v1101 = vld [vmem:[%s6 + $0x28] sm:$0xff]
  %v1102 = vld [vmem:[%s6 + $0x30] sm:$0xff]
  %v1103 = vld [vmem:[%s6 + $0x38] sm:$0xff]
  %v1104 = vld [vmem:[%s6 + $0x40] sm:$0xff]
  %v1105 = vld [vmem:[%s6 + $0x48] sm:$0xff]
  %v1106 = vld [vmem:[%s6 + $0x50] sm:$0xff]
  %v1107 = vld [vmem:[%s6 + $0x58] sm:$0xff]
  %v1108 = vld [vmem:[%s6 + $0x60] sm:$0xff]
  %v1109 = vld [vmem:[%s6 + $0x68] sm:$0xff]
  %v1110 = vld [vmem:[%s6 + $0x70] sm:$0xff]
  %v1111 = vld [vmem:[%s6 + $0x78] sm:$0xff]
  %v1112 = vld [vmem:[%s6 + $0x80] sm:$0xff]
  %v1113 = vld [vmem:[%s6 + $0x88] sm:$0xff]
  %v1114 = vld [vmem:[%s6 + $0x90] sm:$0xff]
  %v1115 = vld [vmem:[%s6 + $0x98] sm:$0xff]
  %v1116 = vld [vmem:[%s6 + $0xa0] sm:$0xff]
  %v1117 = vld [vmem:[%s6 + $0xa8] sm:$0xff]
  %v1118 = vld [vmem:[%s6 + $0xb0] sm:$0xff]
  %v1119 = vld [vmem:[%s6 + $0xb8] sm:$0xff]
  %v1120 = vld [vmem:[%s6 + $0xc0] sm:$0xff]
  %v1121 = vld [vmem:[%s6 + $0xc8] sm:$0xff]
  %v1122 = vld [vmem:[%s6 + $0xd0] sm:$0xff]
  %v1123 = vld [vmem:[%s6 + $0xd8] sm:$0xff]
  %v1124 = vld [vmem:[%s6 + $0xe0] sm:$0xff]
  %v1125 = vld [vmem:[%s6 + $0xe8] sm:$0xff]
  %v1126 = vld [vmem:[%s6 + $0xf0] sm:$0xff]
  %v1127 = vld [vmem:[%s6 + $0xf8] sm:$0xff]
  %1129 = vset.pattern.permute.xlu0 0
  %1130 = vperm.xlu0 %1129, %v1096
  %v1131 = vpop.permute.xlu0 %1130
  %1134 = vset.pattern.permute.xlu0 0
  %1135 = vperm.xlu0 %1134, %v1097
  %v1136 = vpop.permute.xlu0 %1135
  %1139 = vset.pattern.permute.xlu0 0
  %1140 = vperm.xlu0 %1139, %v1098
  %v1141 = vpop.permute.xlu0 %1140
  %1144 = vset.pattern.permute.xlu0 0
  %1145 = vperm.xlu0 %1144, %v1099
  %v1146 = vpop.permute.xlu0 %1145
  %1149 = vset.pattern.permute.xlu0 0
  %1150 = vperm.xlu0 %1149, %v1100
  %v1151 = vpop.permute.xlu0 %1150
  %1154 = vset.pattern.permute.xlu0 0
  %1155 = vperm.xlu0 %1154, %v1101
  %v1156 = vpop.permute.xlu0 %1155
  %1159 = vset.pattern.permute.xlu0 0
  %1160 = vperm.xlu0 %1159, %v1102
  %v1161 = vpop.permute.xlu0 %1160
  %1164 = vset.pattern.permute.xlu0 0
  %1165 = vperm.xlu0 %1164, %v1103
  %v1166 = vpop.permute.xlu0 %1165
  %1169 = vset.pattern.permute.xlu0 0
  %1170 = vperm.xlu0 %1169, %v1104
  %v1171 = vpop.permute.xlu0 %1170
  %1174 = vset.pattern.permute.xlu0 0
  %1175 = vperm.xlu0 %1174, %v1105
  %v1176 = vpop.permute.xlu0 %1175
  %1179 = vset.pattern.permute.xlu0 0
  %1180 = vperm.xlu0 %1179, %v1106
  %v1181 = vpop.permute.xlu0 %1180
  %1184 = vset.pattern.permute.xlu0 0
  %1185 = vperm.xlu0 %1184, %v1107
  %v1186 = vpop.permute.xlu0 %1185
  %1189 = vset.pattern.permute.xlu0 0
  %1190 = vperm.xlu0 %1189, %v1108
  %v1191 = vpop.permute.xlu0 %1190
  %1194 = vset.pattern.permute.xlu0 0
  %1195 = vperm.xlu0 %1194, %v1109
  %v1196 = vpop.permute.xlu0 %1195
  %1199 = vset.pattern.permute.xlu0 0
  %1200 = vperm.xlu0 %1199, %v1110
  %v1201 = vpop.permute.xlu0 %1200
  %1204 = vset.pattern.permute.xlu0 0
  %1205 = vperm.xlu0 %1204, %v1111
  %v1206 = vpop.permute.xlu0 %1205
  %1209 = vset.pattern.permute.xlu0 0
  %1210 = vperm.xlu0 %1209, %v1112
  %v1211 = vpop.permute.xlu0 %1210
  %1214 = vset.pattern.permute.xlu0 0
  %1215 = vperm.xlu0 %1214, %v1113
  %v1216 = vpop.permute.xlu0 %1215
  %1219 = vset.pattern.permute.xlu0 0
  %1220 = vperm.xlu0 %1219, %v1114
  %v1221 = vpop.permute.xlu0 %1220
  %1224 = vset.pattern.permute.xlu0 0
  %1225 = vperm.xlu0 %1224, %v1115
  %v1226 = vpop.permute.xlu0 %1225
  %1229 = vset.pattern.permute.xlu0 0
  %1230 = vperm.xlu0 %1229, %v1116
  %v1231 = vpop.permute.xlu0 %1230
  %1234 = vset.pattern.permute.xlu0 0
  %1235 = vperm.xlu0 %1234, %v1117
  %v1236 = vpop.permute.xlu0 %1235
  %1239 = vset.pattern.permute.xlu0 0
  %1240 = vperm.xlu0 %1239, %v1118
  %v1241 = vpop.permute.xlu0 %1240
  %1244 = vset.pattern.permute.xlu0 0
  %1245 = vperm.xlu0 %1244, %v1119
  %v1246 = vpop.permute.xlu0 %1245
  %1249 = vset.pattern.permute.xlu0 0
  %1250 = vperm.xlu0 %1249, %v1120
  %v1251 = vpop.permute.xlu0 %1250
  %1254 = vset.pattern.permute.xlu0 0
  %1255 = vperm.xlu0 %1254, %v1121
  %v1256 = vpop.permute.xlu0 %1255
  %1259 = vset.pattern.permute.xlu0 0
  %1260 = vperm.xlu0 %1259, %v1122
  %v1261 = vpop.permute.xlu0 %1260
  %1264 = vset.pattern.permute.xlu0 0
  %1265 = vperm.xlu0 %1264, %v1123
  %v1266 = vpop.permute.xlu0 %1265
  %1269 = vset.pattern.permute.xlu0 0
  %1270 = vperm.xlu0 %1269, %v1124
  %v1271 = vpop.permute.xlu0 %1270
  %1274 = vset.pattern.permute.xlu0 0
  %1275 = vperm.xlu0 %1274, %v1125
  %v1276 = vpop.permute.xlu0 %1275
  %1279 = vset.pattern.permute.xlu0 0
  %1280 = vperm.xlu0 %1279, %v1126
  %v1281 = vpop.permute.xlu0 %1280
  %1284 = vset.pattern.permute.xlu0 0
  %1285 = vperm.xlu0 %1284, %v1127
  %v1286 = vpop.permute.xlu0 %1285
  %1288 = vmatprep.subr.mxu0 0.0
  %1289 = vmatpush1.msra.mxu0 %v1079
  %1290 = vmatprep.subr.mxu0 0.0
  %1291 = vmatpush1.msra.mxu0 %v1078
  %1292 = vmatprep.subr.mxu0 0.0
  %1293 = vmatpush1.msra.mxu0 %v1077
  %1294 = vmatprep.subr.mxu0 0.0
  %1295 = vmatpush1.msra.mxu0 %v1076
  %1296 = vmatprep.subr.mxu0 0.0
  %1297 = vmatpush1.msra.mxu0 %v1075
  %1298 = vmatprep.subr.mxu0 0.0
  %1299 = vmatpush1.msra.mxu0 %v1074
  %1300 = vmatprep.subr.mxu0 0.0
  %1301 = vmatpush1.msra.mxu0 %v1073
  %1302 = vmatprep.subr.mxu0 0.0
  %1303 = vmatpush1.msra.mxu0 %v1072
  %1304 = vmatprep.subr.mxu0 0.0
  %1305 = vmatpush1.msra.mxu0 %v1071
  %1306 = vmatprep.subr.mxu0 0.0
  %1307 = vmatpush1.msra.mxu0 %v1070
  %1308 = vmatprep.subr.mxu0 0.0
  %1309 = vmatpush1.msra.mxu0 %v1069
  %1310 = vmatprep.subr.mxu0 0.0
  %1311 = vmatpush1.msra.mxu0 %v1068
  %1312 = vmatprep.subr.mxu0 0.0
  %1313 = vmatpush1.msra.mxu0 %v1067
  %1314 = vmatprep.subr.mxu0 0.0
  %1315 = vmatpush1.msra.mxu0 %v1066
  %1316 = vmatprep.subr.mxu0 0.0
  %1317 = vmatpush1.msra.mxu0 %v1065
  %1318 = vmatprep.subr.mxu0 0.0
  %1319 = vmatpush1.msra.mxu0 %v1064
  %1320 = vmatprep.subr.mxu0 0.0
  %1321 = vmatpush2.msra.mxu0 %v1095
  %1322 = vmatprep.subr.mxu0 0.0
  %1323 = vmatpush2.msra.mxu0 %v1094
  %1324 = vmatprep.subr.mxu0 0.0
  %1325 = vmatpush2.msra.mxu0 %v1093
  %1326 = vmatprep.subr.mxu0 0.0
  %1327 = vmatpush2.msra.mxu0 %v1092
  %1328 = vmatprep.subr.mxu0 0.0
  %1329 = vmatpush2.msra.mxu0 %v1091
  %1330 = vmatprep.subr.mxu0 0.0
  %1331 = vmatpush2.msra.mxu0 %v1090
  %1332 = vmatprep.subr.mxu0 0.0
  %1333 = vmatpush2.msra.mxu0 %v1089
  %1334 = vmatprep.subr.mxu0 0.0
  %1335 = vmatpush2.msra.mxu0 %v1088
  %1336 = vmatprep.subr.mxu0 0.0
  %1337 = vmatpush2.msra.mxu0 %v1087
  %1338 = vmatprep.subr.mxu0 0.0
  %1339 = vmatpush2.msra.mxu0 %v1086
  %1340 = vmatprep.subr.mxu0 0.0
  %1341 = vmatpush2.msra.mxu0 %v1085
  %1342 = vmatprep.subr.mxu0 0.0
  %1343 = vmatpush2.msra.mxu0 %v1084
  %1344 = vmatprep.subr.mxu0 0.0
  %1345 = vmatpush2.msra.mxu0 %v1083
  %1346 = vmatprep.subr.mxu0 0.0
  %1347 = vmatpush2.msra.mxu0 %v1082
  %1348 = vmatprep.subr.mxu0 0.0
  %1349 = vmatpush2.msra.mxu0 %v1081
  %1350 = vmatprep.subr.mxu0 0.0
  %1351 = vmatpush2.msra.mxu0 %v1080
  %1352 = vmatprep.mubr.f32.mxu0 %v1001
  %1353 = vmatmul.mubr.f32.gmra.mxu0 %v1000
  %v1354 = vpop.f32.mrf.mxu0
  %v1355 = vadd.f32 %v1131, %v1354
  %v1356 = vpop.f32.mrf.mxu0
  %1357 = vmatprep.mubr.f32.mxu0 %v1003
  %1358 = vmatmul.mubr.f32.gmra.mxu0 %v1002
  %v1359 = vpop.f32.mrf.mxu0
  %v1360 = vadd.f32 %v1136, %v1359
  %v1361 = vpop.f32.mrf.mxu0
  %1362 = vmatprep.mubr.f32.mxu0 %v1005
  %1363 = vmatmul.mubr.f32.gmra.mxu0 %v1004
  %v1364 = vpop.f32.mrf.mxu0
  %v1365 = vadd.f32 %v1141, %v1364
  %v1366 = vpop.f32.mrf.mxu0
  %1367 = vmatprep.mubr.f32.mxu0 %v1007
  %1368 = vmatmul.mubr.f32.gmra.mxu0 %v1006
  %v1369 = vpop.f32.mrf.mxu0
  %v1370 = vadd.f32 %v1146, %v1369
  %v1371 = vpop.f32.mrf.mxu0
  %1372 = vmatprep.mubr.f32.mxu0 %v1009
  %1373 = vmatmul.mubr.f32.gmra.mxu0 %v1008
  %v1374 = vpop.f32.mrf.mxu0
  %v1375 = vadd.f32 %v1151, %v1374
  %v1376 = vpop.f32.mrf.mxu0
  %1377 = vmatprep.mubr.f32.mxu0 %v1011
  %1378 = vmatmul.mubr.f32.gmra.mxu0 %v1010
  %v1379 = vpop.f32.mrf.mxu0
  %v1380 = vadd.f32 %v1156, %v1379
  %v1381 = vpop.f32.mrf.mxu0
  %1382 = vmatprep.mubr.f32.mxu0 %v1013
  %1383 = vmatmul.mubr.f32.gmra.mxu0 %v1012
  %v1384 = vpop.f32.mrf.mxu0
  %v1385 = vadd.f32 %v1161, %v1384
  %v1386 = vpop.f32.mrf.mxu0
  %1387 = vmatprep.mubr.f32.mxu0 %v1015
  %1388 = vmatmul.mubr.f32.gmra.mxu0 %v1014
  %v1389 = vpop.f32.mrf.mxu0
  %v1390 = vadd.f32 %v1166, %v1389
  %v1391 = vpop.f32.mrf.mxu0
  %1392 = vmatprep.mubr.f32.mxu0 %v1017
  %1393 = vmatmul.mubr.f32.gmra.mxu0 %v1016
  %v1394 = vpop.f32.mrf.mxu0
  %v1395 = vadd.f32 %v1171, %v1394
  %v1396 = vpop.f32.mrf.mxu0
  %1397 = vmatprep.mubr.f32.mxu0 %v1019
  %1398 = vmatmul.mubr.f32.gmra.mxu0 %v1018
  %v1399 = vpop.f32.mrf.mxu0
  %v1400 = vadd.f32 %v1176, %v1399
  %v1401 = vpop.f32.mrf.mxu0
  %1402 = vmatprep.mubr.f32.mxu0 %v1021
  %1403 = vmatmul.mubr.f32.gmra.mxu0 %v1020
  %v1404 = vpop.f32.mrf.mxu0
  %v1405 = vadd.f32 %v1181, %v1404
  %v1406 = vpop.f32.mrf.mxu0
  %1407 = vmatprep.mubr.f32.mxu0 %v1023
  %1408 = vmatmul.mubr.f32.gmra.mxu0 %v1022
  %v1409 = vpop.f32.mrf.mxu0
  %v1410 = vadd.f32 %v1186, %v1409
  %v1411 = vpop.f32.mrf.mxu0
  %1412 = vmatprep.mubr.f32.mxu0 %v1025
  %1413 = vmatmul.mubr.f32.gmra.mxu0 %v1024
  %v1414 = vpop.f32.mrf.mxu0
  %v1415 = vadd.f32 %v1191, %v1414
  %v1416 = vpop.f32.mrf.mxu0
  %1417 = vmatprep.mubr.f32.mxu0 %v1027
  %1418 = vmatmul.mubr.f32.gmra.mxu0 %v1026
  %v1419 = vpop.f32.mrf.mxu0
  %v1420 = vadd.f32 %v1196, %v1419
  %v1421 = vpop.f32.mrf.mxu0
  %1422 = vmatprep.mubr.f32.mxu0 %v1029
  %1423 = vmatmul.mubr.f32.gmra.mxu0 %v1028
  %v1424 = vpop.f32.mrf.mxu0
  %v1425 = vadd.f32 %v1201, %v1424
  %v1426 = vpop.f32.mrf.mxu0
  %1427 = vmatprep.mubr.f32.mxu0 %v1031
  %1428 = vmatmul.mubr.f32.gmra.mxu0 %v1030
  %v1429 = vpop.f32.mrf.mxu0
  %v1430 = vadd.f32 %v1206, %v1429
  %v1431 = vpop.f32.mrf.mxu0
  %1432 = vmatprep.mubr.f32.mxu0 %v1033
  %1433 = vmatmul.mubr.f32.gmra.mxu0 %v1032
  %v1434 = vpop.f32.mrf.mxu0
  %v1435 = vadd.f32 %v1211, %v1434
  %v1436 = vpop.f32.mrf.mxu0
  %1437 = vmatprep.mubr.f32.mxu0 %v1035
  %1438 = vmatmul.mubr.f32.gmra.mxu0 %v1034
  %v1439 = vpop.f32.mrf.mxu0
  %v1440 = vadd.f32 %v1216, %v1439
  %v1441 = vpop.f32.mrf.mxu0
  %1442 = vmatprep.mubr.f32.mxu0 %v1037
  %1443 = vmatmul.mubr.f32.gmra.mxu0 %v1036
  %v1444 = vpop.f32.mrf.mxu0
  %v1445 = vadd.f32 %v1221, %v1444
  %v1446 = vpop.f32.mrf.mxu0
  %1447 = vmatprep.mubr.f32.mxu0 %v1039
  %1448 = vmatmul.mubr.f32.gmra.mxu0 %v1038
  %v1449 = vpop.f32.mrf.mxu0
  %v1450 = vadd.f32 %v1226, %v1449
  %v1451 = vpop.f32.mrf.mxu0
  %1452 = vmatprep.mubr.f32.mxu0 %v1041
  %1453 = vmatmul.mubr.f32.gmra.mxu0 %v1040
  %v1454 = vpop.f32.mrf.mxu0
  %v1455 = vadd.f32 %v1231, %v1454
  %v1456 = vpop.f32.mrf.mxu0
  %1457 = vmatprep.mubr.f32.mxu0 %v1043
  %1458 = vmatmul.mubr.f32.gmra.mxu0 %v1042
  %v1459 = vpop.f32.mrf.mxu0
  %v1460 = vadd.f32 %v1236, %v1459
  %v1461 = vpop.f32.mrf.mxu0
  %1462 = vmatprep.mubr.f32.mxu0 %v1045
  %1463 = vmatmul.mubr.f32.gmra.mxu0 %v1044
  %v1464 = vpop.f32.mrf.mxu0
  %v1465 = vadd.f32 %v1241, %v1464
  %v1466 = vpop.f32.mrf.mxu0
  %1467 = vmatprep.mubr.f32.mxu0 %v1047
  %1468 = vmatmul.mubr.f32.gmra.mxu0 %v1046
  %v1469 = vpop.f32.mrf.mxu0
  %v1470 = vadd.f32 %v1246, %v1469
  %v1471 = vpop.f32.mrf.mxu0
  %1472 = vmatprep.mubr.f32.mxu0 %v1049
  %1473 = vmatmul.mubr.f32.gmra.mxu0 %v1048
  %v1474 = vpop.f32.mrf.mxu0
  %v1475 = vadd.f32 %v1251, %v1474
  %v1476 = vpop.f32.mrf.mxu0
  %1477 = vmatprep.mubr.f32.mxu0 %v1051
  %1478 = vmatmul.mubr.f32.gmra.mxu0 %v1050
  %v1479 = vpop.f32.mrf.mxu0
  %v1480 = vadd.f32 %v1256, %v1479
  %v1481 = vpop.f32.mrf.mxu0
  %1482 = vmatprep.mubr.f32.mxu0 %v1053
  %1483 = vmatmul.mubr.f32.gmra.mxu0 %v1052
  %v1484 = vpop.f32.mrf.mxu0
  %v1485 = vadd.f32 %v1261, %v1484
  %v1486 = vpop.f32.mrf.mxu0
  %1487 = vmatprep.mubr.f32.mxu0 %v1055
  %1488 = vmatmul.mubr.f32.gmra.mxu0 %v1054
  %v1489 = vpop.f32.mrf.mxu0
  %v1490 = vadd.f32 %v1266, %v1489
  %v1491 = vpop.f32.mrf.mxu0
  %1492 = vmatprep.mubr.f32.mxu0 %v1057
  %1493 = vmatmul.mubr.f32.gmra.mxu0 %v1056
  %v1494 = vpop.f32.mrf.mxu0
  %v1495 = vadd.f32 %v1271, %v1494
  %v1496 = vpop.f32.mrf.mxu0
  %1497 = vmatprep.mubr.f32.mxu0 %v1059
  %1498 = vmatmul.mubr.f32.gmra.mxu0 %v1058
  %v1499 = vpop.f32.mrf.mxu0
  %v1500 = vadd.f32 %v1276, %v1499
  %v1501 = vpop.f32.mrf.mxu0
  %1502 = vmatprep.mubr.f32.mxu0 %v1061
  %1503 = vmatmul.mubr.f32.gmra.mxu0 %v1060
  %v1504 = vpop.f32.mrf.mxu0
  %v1505 = vadd.f32 %v1281, %v1504
  %v1506 = vpop.f32.mrf.mxu0
  %1507 = vmatprep.mubr.f32.mxu0 %v1063
  %1508 = vmatmul.mubr.f32.gmra.mxu0 %v1062
  %v1509 = vpop.f32.mrf.mxu0
  %v1510 = vadd.f32 %v1286, %v1509
  %v1511 = vpop.f32.mrf.mxu0
  %1512 = vdwg.mxu0
  %v1513 = vld [vmem:[%s7] sm:$0xff]
  %v1514 = vld [vmem:[%s7 + $0x8] sm:$0xff]
  %v1515 = vld [vmem:[%s7 + $0x10] sm:$0xff]
  %v1516 = vld [vmem:[%s7 + $0x18] sm:$0xff]
  %v1517 = vld [vmem:[%s7 + $0x20] sm:$0xff]
  %v1518 = vld [vmem:[%s7 + $0x28] sm:$0xff]
  %v1519 = vld [vmem:[%s7 + $0x30] sm:$0xff]
  %v1520 = vld [vmem:[%s7 + $0x38] sm:$0xff]
  %v1521 = vld [vmem:[%s7 + $0x40] sm:$0xff]
  %v1522 = vld [vmem:[%s7 + $0x48] sm:$0xff]
  %v1523 = vld [vmem:[%s7 + $0x50] sm:$0xff]
  %v1524 = vld [vmem:[%s7 + $0x58] sm:$0xff]
  %v1525 = vld [vmem:[%s7 + $0x60] sm:$0xff]
  %v1526 = vld [vmem:[%s7 + $0x68] sm:$0xff]
  %v1527 = vld [vmem:[%s7 + $0x70] sm:$0xff]
  %v1528 = vld [vmem:[%s7 + $0x78] sm:$0xff]
  %v1529 = vld [vmem:[%s7 + $0x80] sm:$0xff]
  %v1530 = vld [vmem:[%s7 + $0x88] sm:$0xff]
  %v1531 = vld [vmem:[%s7 + $0x90] sm:$0xff]
  %v1532 = vld [vmem:[%s7 + $0x98] sm:$0xff]
  %v1533 = vld [vmem:[%s7 + $0xa0] sm:$0xff]
  %v1534 = vld [vmem:[%s7 + $0xa8] sm:$0xff]
  %v1535 = vld [vmem:[%s7 + $0xb0] sm:$0xff]
  %v1536 = vld [vmem:[%s7 + $0xb8] sm:$0xff]
  %v1537 = vld [vmem:[%s7 + $0xc0] sm:$0xff]
  %v1538 = vld [vmem:[%s7 + $0xc8] sm:$0xff]
  %v1539 = vld [vmem:[%s7 + $0xd0] sm:$0xff]
  %v1540 = vld [vmem:[%s7 + $0xd8] sm:$0xff]
  %v1541 = vld [vmem:[%s7 + $0xe0] sm:$0xff]
  %v1542 = vld [vmem:[%s7 + $0xe8] sm:$0xff]
  %v1543 = vld [vmem:[%s7 + $0xf0] sm:$0xff]
  %v1544 = vld [vmem:[%s7 + $0xf8] sm:$0xff]
  %v1545 = vtanh.pop %v1355
  %v1546 = vtanh.pop %v1360
  %v1547 = vtanh.pop %v1365
  %v1548 = vtanh.pop %v1370
  %v1549 = vtanh.pop %v1375
  %v1550 = vtanh.pop %v1380
  %v1551 = vtanh.pop %v1385
  %v1552 = vtanh.pop %v1390
  %v1553 = vtanh.pop %v1395
  %v1554 = vtanh.pop %v1400
  %v1555 = vtanh.pop %v1405
  %v1556 = vtanh.pop %v1410
  %v1557 = vtanh.pop %v1415
  %v1558 = vtanh.pop %v1420
  %v1559 = vtanh.pop %v1425
  %v1560 = vtanh.pop %v1430
  %v1561 = vtanh.pop %v1435
  %v1562 = vtanh.pop %v1440
  %v1563 = vtanh.pop %v1445
  %v1564 = vtanh.pop %v1450
  %v1565 = vtanh.pop %v1455
  %v1566 = vtanh.pop %v1460
  %v1567 = vtanh.pop %v1465
  %v1568 = vtanh.pop %v1470
  %v1569 = vtanh.pop %v1475
  %v1570 = vtanh.pop %v1480
  %v1571 = vtanh.pop %v1485
  %v1572 = vtanh.pop %v1490
  %v1573 = vtanh.pop %v1495
  %v1574 = vtanh.pop %v1500
  %v1575 = vtanh.pop %v1505
  %v1576 = vtanh.pop %v1510
  %v1577 = vld [vmem:[%s8] sm:$0xff]
  %v1578 = vld [vmem:[%s8 + $0x8] sm:$0xff]
  %v1579 = vld [vmem:[%s8 + $0x10] sm:$0xff]
  %v1580 = vld [vmem:[%s8 + $0x18] sm:$0xff]
  %v1581 = vld [vmem:[%s8 + $0x20] sm:$0xff]
  %v1582 = vld [vmem:[%s8 + $0x28] sm:$0xff]
  %v1583 = vld [vmem:[%s8 + $0x30] sm:$0xff]
  %v1584 = vld [vmem:[%s8 + $0x38] sm:$0xff]
  %v1585 = vld [vmem:[%s8 + $0x40] sm:$0xff]
  %v1586 = vld [vmem:[%s8 + $0x48] sm:$0xff]
  %v1587 = vld [vmem:[%s8 + $0x50] sm:$0xff]
  %v1588 = vld [vmem:[%s8 + $0x58] sm:$0xff]
  %v1589 = vld [vmem:[%s8 + $0x60] sm:$0xff]
  %v1590 = vld [vmem:[%s8 + $0x68] sm:$0xff]
  %v1591 = vld [vmem:[%s8 + $0x70] sm:$0xff]
  %v1592 = vld [vmem:[%s8 + $0x78] sm:$0xff]
  %1594 = vset.pattern.permute.xlu0 0
  %1595 = vperm.xlu0 %1594, %v1577
  %v1596 = vpop.permute.xlu0 %1595
  %1599 = vset.pattern.permute.xlu0 0
  %1600 = vperm.xlu0 %1599, %v1578
  %v1601 = vpop.permute.xlu0 %1600
  %1604 = vset.pattern.permute.xlu0 0
  %1605 = vperm.xlu0 %1604, %v1579
  %v1606 = vpop.permute.xlu0 %1605
  %1609 = vset.pattern.permute.xlu0 0
  %1610 = vperm.xlu0 %1609, %v1580
  %v1611 = vpop.permute.xlu0 %1610
  %1614 = vset.pattern.permute.xlu0 0
  %1615 = vperm.xlu0 %1614, %v1581
  %v1616 = vpop.permute.xlu0 %1615
  %1619 = vset.pattern.permute.xlu0 0
  %1620 = vperm.xlu0 %1619, %v1582
  %v1621 = vpop.permute.xlu0 %1620
  %1624 = vset.pattern.permute.xlu0 0
  %1625 = vperm.xlu0 %1624, %v1583
  %v1626 = vpop.permute.xlu0 %1625
  %1629 = vset.pattern.permute.xlu0 0
  %1630 = vperm.xlu0 %1629, %v1584
  %v1631 = vpop.permute.xlu0 %1630
  %1634 = vset.pattern.permute.xlu0 0
  %1635 = vperm.xlu0 %1634, %v1585
  %v1636 = vpop.permute.xlu0 %1635
  %1639 = vset.pattern.permute.xlu0 0
  %1640 = vperm.xlu0 %1639, %v1586
  %v1641 = vpop.permute.xlu0 %1640
  %1644 = vset.pattern.permute.xlu0 0
  %1645 = vperm.xlu0 %1644, %v1587
  %v1646 = vpop.permute.xlu0 %1645
  %1649 = vset.pattern.permute.xlu0 0
  %1650 = vperm.xlu0 %1649, %v1588
  %v1651 = vpop.permute.xlu0 %1650
  %1654 = vset.pattern.permute.xlu0 0
  %1655 = vperm.xlu0 %1654, %v1589
  %v1656 = vpop.permute.xlu0 %1655
  %1659 = vset.pattern.permute.xlu0 0
  %1660 = vperm.xlu0 %1659, %v1590
  %v1661 = vpop.permute.xlu0 %1660
  %1664 = vset.pattern.permute.xlu0 0
  %1665 = vperm.xlu0 %1664, %v1591
  %v1666 = vpop.permute.xlu0 %1665
  %1669 = vset.pattern.permute.xlu0 0
  %1670 = vperm.xlu0 %1669, %v1592
  %v1671 = vpop.permute.xlu0 %1670
  %1673 = vmatprep.subr.mxu0 0.0
  %1674 = vmatpush1.msra.mxu0 %v1560
  %1675 = vmatprep.subr.mxu0 0.0
  %1676 = vmatpush1.msra.mxu0 %v1559
  %1677 = vmatprep.subr.mxu0 0.0
  %1678 = vmatpush1.msra.mxu0 %v1558
  %1679 = vmatprep.subr.mxu0 0.0
  %1680 = vmatpush1.msra.mxu0 %v1557
  %1681 = vmatprep.subr.mxu0 0.0
  %1682 = vmatpush1.msra.mxu0 %v1556
  %1683 = vmatprep.subr.mxu0 0.0
  %1684 = vmatpush1.msra.mxu0 %v1555
  %1685 = vmatprep.subr.mxu0 0.0
  %1686 = vmatpush1.msra.mxu0 %v1554
  %1687 = vmatprep.subr.mxu0 0.0
  %1688 = vmatpush1.msra.mxu0 %v1553
  %1689 = vmatprep.subr.mxu0 0.0
  %1690 = vmatpush1.msra.mxu0 %v1552
  %1691 = vmatprep.subr.mxu0 0.0
  %1692 = vmatpush1.msra.mxu0 %v1551
  %1693 = vmatprep.subr.mxu0 0.0
  %1694 = vmatpush1.msra.mxu0 %v1550
  %1695 = vmatprep.subr.mxu0 0.0
  %1696 = vmatpush1.msra.mxu0 %v1549
  %1697 = vmatprep.subr.mxu0 0.0
  %1698 = vmatpush1.msra.mxu0 %v1548
  %1699 = vmatprep.subr.mxu0 0.0
  %1700 = vmatpush1.msra.mxu0 %v1547
  %1701 = vmatprep.subr.mxu0 0.0
  %1702 = vmatpush1.msra.mxu0 %v1546
  %1703 = vmatprep.subr.mxu0 0.0
  %1704 = vmatpush1.msra.mxu0 %v1545
  %1705 = vmatprep.subr.mxu0 0.0
  %1706 = vmatpush2.msra.mxu0 %v1576
  %1707 = vmatprep.subr.mxu0 0.0
  %1708 = vmatpush2.msra.mxu0 %v1575
  %1709 = vmatprep.subr.mxu0 0.0
  %1710 = vmatpush2.msra.mxu0 %v1574
  %1711 = vmatprep.subr.mxu0 0.0
  %1712 = vmatpush2.msra.mxu0 %v1573
  %1713 = vmatprep.subr.mxu0 0.0
  %1714 = vmatpush2.msra.mxu0 %v1572
  %1715 = vmatprep.subr.mxu0 0.0
  %1716 = vmatpush2.msra.mxu0 %v1571
  %1717 = vmatprep.subr.mxu0 0.0
  %1718 = vmatpush2.msra.mxu0 %v1570
  %1719 = vmatprep.subr.mxu0 0.0
  %1720 = vmatpush2.msra.mxu0 %v1569
  %1721 = vmatprep.subr.mxu0 0.0
  %1722 = vmatpush2.msra.mxu0 %v1568
  %1723 = vmatprep.subr.mxu0 0.0
  %1724 = vmatpush2.msra.mxu0 %v1567
  %1725 = vmatprep.subr.mxu0 0.0
  %1726 = vmatpush2.msra.mxu0 %v1566
  %1727 = vmatprep.subr.mxu0 0.0
  %1728 = vmatpush2.msra.mxu0 %v1565
  %1729 = vmatprep.subr.mxu0 0.0
  %1730 = vmatpush2.msra.mxu0 %v1564
  %1731 = vmatprep.subr.mxu0 0.0
  %1732 = vmatpush2.msra.mxu0 %v1563
  %1733 = vmatprep.subr.mxu0 0.0
  %1734 = vmatpush2.msra.mxu0 %v1562
  %1735 = vmatprep.subr.mxu0 0.0
  %1736 = vmatpush2.msra.mxu0 %v1561
  %1737 = vmatprep.mubr.f32.mxu0 %v1514
  %1738 = vmatmul.mubr.f32.gmra.mxu0 %v1513
  %v1739 = vpop.f32.mrf.mxu0
  %v1740 = vadd.f32 %v1596, %v1739
  %v1741 = vpop.f32.mrf.mxu0
  %1742 = vmatprep.mubr.f32.mxu0 %v1516
  %1743 = vmatmul.mubr.f32.gmra.mxu0 %v1515
  %v1744 = vpop.f32.mrf.mxu0
  %v1745 = vadd.f32 %v1601, %v1744
  %v1746 = vpop.f32.mrf.mxu0
  %1747 = vmatprep.mubr.f32.mxu0 %v1518
  %1748 = vmatmul.mubr.f32.gmra.mxu0 %v1517
  %v1749 = vpop.f32.mrf.mxu0
  %v1750 = vadd.f32 %v1606, %v1749
  %v1751 = vpop.f32.mrf.mxu0
  %1752 = vmatprep.mubr.f32.mxu0 %v1520
  %1753 = vmatmul.mubr.f32.gmra.mxu0 %v1519
  %v1754 = vpop.f32.mrf.mxu0
  %v1755 = vadd.f32 %v1611, %v1754
  %v1756 = vpop.f32.mrf.mxu0
  %1757 = vmatprep.mubr.f32.mxu0 %v1522
  %1758 = vmatmul.mubr.f32.gmra.mxu0 %v1521
  %v1759 = vpop.f32.mrf.mxu0
  %v1760 = vadd.f32 %v1616, %v1759
  %v1761 = vpop.f32.mrf.mxu0
  %1762 = vmatprep.mubr.f32.mxu0 %v1524
  %1763 = vmatmul.mubr.f32.gmra.mxu0 %v1523
  %v1764 = vpop.f32.mrf.mxu0
  %v1765 = vadd.f32 %v1621, %v1764
  %v1766 = vpop.f32.mrf.mxu0
  %1767 = vmatprep.mubr.f32.mxu0 %v1526
  %1768 = vmatmul.mubr.f32.gmra.mxu0 %v1525
  %v1769 = vpop.f32.mrf.mxu0
  %v1770 = vadd.f32 %v1626, %v1769
  %v1771 = vpop.f32.mrf.mxu0
  %1772 = vmatprep.mubr.f32.mxu0 %v1528
  %1773 = vmatmul.mubr.f32.gmra.mxu0 %v1527
  %v1774 = vpop.f32.mrf.mxu0
  %v1775 = vadd.f32 %v1631, %v1774
  %v1776 = vpop.f32.mrf.mxu0
  %1777 = vmatprep.mubr.f32.mxu0 %v1530
  %1778 = vmatmul.mubr.f32.gmra.mxu0 %v1529
  %v1779 = vpop.f32.mrf.mxu0
  %v1780 = vadd.f32 %v1636, %v1779
  %v1781 = vpop.f32.mrf.mxu0
  %1782 = vmatprep.mubr.f32.mxu0 %v1532
  %1783 = vmatmul.mubr.f32.gmra.mxu0 %v1531
  %v1784 = vpop.f32.mrf.mxu0
  %v1785 = vadd.f32 %v1641, %v1784
  %v1786 = vpop.f32.mrf.mxu0
  %1787 = vmatprep.mubr.f32.mxu0 %v1534
  %1788 = vmatmul.mubr.f32.gmra.mxu0 %v1533
  %v1789 = vpop.f32.mrf.mxu0
  %v1790 = vadd.f32 %v1646, %v1789
  %v1791 = vpop.f32.mrf.mxu0
  %1792 = vmatprep.mubr.f32.mxu0 %v1536
  %1793 = vmatmul.mubr.f32.gmra.mxu0 %v1535
  %v1794 = vpop.f32.mrf.mxu0
  %v1795 = vadd.f32 %v1651, %v1794
  %v1796 = vpop.f32.mrf.mxu0
  %1797 = vmatprep.mubr.f32.mxu0 %v1538
  %1798 = vmatmul.mubr.f32.gmra.mxu0 %v1537
  %v1799 = vpop.f32.mrf.mxu0
  %v1800 = vadd.f32 %v1656, %v1799
  %v1801 = vpop.f32.mrf.mxu0
  %1802 = vmatprep.mubr.f32.mxu0 %v1540
  %1803 = vmatmul.mubr.f32.gmra.mxu0 %v1539
  %v1804 = vpop.f32.mrf.mxu0
  %v1805 = vadd.f32 %v1661, %v1804
  %v1806 = vpop.f32.mrf.mxu0
  %1807 = vmatprep.mubr.f32.mxu0 %v1542
  %1808 = vmatmul.mubr.f32.gmra.mxu0 %v1541
  %v1809 = vpop.f32.mrf.mxu0
  %v1810 = vadd.f32 %v1666, %v1809
  %v1811 = vpop.f32.mrf.mxu0
  %1812 = vmatprep.mubr.f32.mxu0 %v1544
  %1813 = vmatmul.mubr.f32.gmra.mxu0 %v1543
  %v1814 = vpop.f32.mrf.mxu0
  %v1815 = vadd.f32 %v1671, %v1814
  %v1816 = vpop.f32.mrf.mxu0
  %1817 = vdwg.mxu0
  %1818 = vst [vmem:[%s9] sm:$0xff] %v1740
  %1819 = vst [vmem:[%s9 + $0x8] sm:$0xff] %v1745
  %1820 = vst [vmem:[%s9 + $0x10] sm:$0xff] %v1750
  %1821 = vst [vmem:[%s9 + $0x18] sm:$0xff] %v1755
  %1822 = vst [vmem:[%s9 + $0x20] sm:$0xff] %v1760
  %1823 = vst [vmem:[%s9 + $0x28] sm:$0xff] %v1765
  %1824 = vst [vmem:[%s9 + $0x30] sm:$0xff] %v1770
  %1825 = vst [vmem:[%s9 + $0x38] sm:$0xff] %v1775
  %1826 = vst [vmem:[%s9 + $0x40] sm:$0xff] %v1780
  %1827 = vst [vmem:[%s9 + $0x48] sm:$0xff] %v1785
  %1828 = vst [vmem:[%s9 + $0x50] sm:$0xff] %v1790
  %1829 = vst [vmem:[%s9 + $0x58] sm:$0xff] %v1795
  %1830 = vst [vmem:[%s9 + $0x60] sm:$0xff] %v1800
  %1831 = vst [vmem:[%s9 + $0x68] sm:$0xff] %v1805
  %1832 = vst [vmem:[%s9 + $0x70] sm:$0xff] %v1810
  %1833 = vst [vmem:[%s9 + $0x78] sm:$0xff] %v1815
  // Predicated region
  $region38: #{deeponet_forward.2} parent=0 // pred_check
    _
  $region39: #{deeponet_forward.2} parent=0 // pred_check_branch
    %1835 = sbr.rel (0) target = $region41
  $region40: #{deeponet_forward.2} parent=0 // pred_region
    _
  $region41: #{deeponet_forward.2} parent=0 // pred_fallthru
    _
  // Predicated region
  $region42: #{deeponet_forward.2} parent=0 // pred_check
    _
  $region43: #{deeponet_forward.2} parent=0 // pred_check_branch
    %1837 = sbr.rel (0) target = $region45
  $region44: #{deeponet_forward.2} parent=0 // pred_region
    _
  $region45: #{deeponet_forward.2} parent=0 // pred_fallthru
    _

</llo_original>
